<compile_context>
chip_gen: v6e
topology: v6e:2x2x1
jax: 0.10.0
libtpu: 0.0.40
codegen_flags: <defaults>
</compile_context>

<pallas_src>
import math

import jax
import jax.numpy as jnp
from jax import lax
from jax.experimental import pallas as pl
from jax.experimental.pallas import tpu as pltpu

# ----------------------------- configuration -------------------------------
B = 2                      # batch
CIN = 3                    # RGB channels
IMG = 32                   # image H = W
PATCH = 16                 # patch size (as ViT-B/16)
HP = IMG // PATCH          # patches per side = 2
NPATCH = HP * HP           # 4
SEQ = NPATCH + 1           # +1 class token = 5
SEQ_PAD = 8                # f32 sublane pad (use a 16-multiple if slab is bf16)
DIM = 32                   # hidden dim (768 in real model)
HEADS = 4                  # num heads (12 in real model)
HEAD_DIM = DIM // HEADS    # 8
MLP = 64                   # mlp dim (3072 in real model)
LAYERS = 2                 # encoder layers (12 in real model)
NUM_LABELS = 4             # custom classifier head size
LN_EPS = 1e-6              # torchvision ViT LayerNorm eps

_ATTN_SCALE = 1.0 / math.sqrt(HEAD_DIM)
_GELU_C = 0.7978845608028654        # sqrt(2/pi)

# Set to jnp.bfloat16 when scaling toward real ViT-B (MXU-native on every
# target; accumulation stays f32 via preferred_element_type).
MATMUL_DTYPE = jnp.float32


# ------------------------------ in-kernel math -------------------------------
def _gelu(x):
    # tanh-approx GELU: transcendental runs on the EUP slot.  For bit-closer
    # parity with torch.nn.GELU() (exact erf), substitute an erf-based GELU.
    return 0.5 * x * (1.0 + jnp.tanh(_GELU_C * (x + 0.044715 * x * x * x)))


def _layernorm(x, g, b):
    mean = jnp.mean(x, axis=-1, keepdims=True)
    xc = x - mean
    var = jnp.mean(xc * xc, axis=-1, keepdims=True)
    return xc * lax.rsqrt(var + LN_EPS) * g + b


def _mm(a, w):
    return jnp.dot(a.astype(MATMUL_DTYPE), w.astype(MATMUL_DTYPE),
                   preferred_element_type=jnp.float32)


# ------------------------------ fused kernel ---------------------------------
def _vit_fused_kernel(
        patches_ref, conv_w_ref, conv_b_ref, cls_ref, pos_ref,
        ln1_g_ref, ln1_b_ref, w_qkv_ref, b_qkv_ref, w_o_ref, b_o_ref,
        ln2_g_ref, ln2_b_ref, w_fc1_ref, b_fc1_ref, w_fc2_ref, b_fc2_ref,
        lnf_g_ref, lnf_b_ref, head_w_ref, head_b_ref,
        out_ref):
    # --- patch embedding.  patches is already laid out in token-row order
    # (row b*SEQ_PAD + s; s=0 cls slot and s>=SEQ pad slots are zero rows), so
    # Conv2d(C, D, k=stride=PATCH) is one matmul and slab assembly is pure
    # vreg work fused into the bias add — no VMEM scratch, no partial stores.
    tok = _mm(patches_ref[...], conv_w_ref[...])            # (B*SEQ_PAD, D)

    row = lax.broadcasted_iota(jnp.int32, (B * SEQ_PAD, 1), 0)
    s_pos = jnp.bitwise_and(row, SEQ_PAD - 1)                # row % SEQ_PAD
    is_patch = jnp.where((s_pos >= 1) & (s_pos < SEQ),
                         jnp.float32(1.0), jnp.float32(0.0))
    is_cls = jnp.where(s_pos == 0, jnp.float32(1.0), jnp.float32(0.0))

    pos_b = jnp.broadcast_to(pos_ref[...], (B, SEQ_PAD, DIM)
                             ).reshape(B * SEQ_PAD, DIM)
    x2d = (tok
           + is_patch * conv_b_ref[...]                     # conv bias (patch rows)
           + is_cls * cls_ref[...]                           # class token (row 0)
           + pos_b)                                          # position embedding

    # --- hoisted loop invariant: additive mask on padded key columns
    kpos = lax.broadcasted_iota(jnp.int32, (1, 1, SEQ_PAD), 2)
    neg_mask = jnp.where(kpos >= SEQ, jnp.float32(-1e30), jnp.float32(0.0))

    def _to_heads(t2d):
        # (B*S, D) -> (HEADS*B, S, HEAD_DIM): static lane slices + layout-free
        # sublane reshapes + one leading-axis concat.
        return jnp.concatenate(
            [t2d[:, h * HEAD_DIM:(h + 1) * HEAD_DIM]
             .reshape(B, SEQ_PAD, HEAD_DIM) for h in range(HEADS)],
            axis=0)

    def layer_body(l, x2d):
        # ----- multi-head self-attention (pre-LN), head-batched -----
        y = _layernorm(x2d, ln1_g_ref[l], ln1_b_ref[l])
        qkv = _mm(y, w_qkv_ref[l]) + b_qkv_ref[l]            # (B*S, 3D)
        q2d = qkv[:, 0:DIM] * _ATTN_SCALE                    # scale q, not s
        k2d = qkv[:, DIM:2 * DIM]
        v2d = qkv[:, 2 * DIM:3 * DIM]
        qh, kh, vh = _to_heads(q2d), _to_heads(k2d), _to_heads(v2d)

        s = jnp.einsum('bqd,bkd->bqk', qh, kh,
                       preferred_element_type=jnp.float32)   # (H*B, S, S)
        s = s + neg_mask
        m = jnp.max(s, axis=-1, keepdims=True)
        p = jnp.exp(s - m)
        denom = jnp.sum(p, axis=-1, keepdims=True)
        p = p * pl.reciprocal(denom, approx=True)            # EUP vrcp
        o = jnp.einsum('bqk,bkd->bqd', p, vh,
                       preferred_element_type=jnp.float32)   # (H*B, S, Dh)

        a = jnp.concatenate(
            [o[h * B:(h + 1) * B].reshape(B * SEQ_PAD, HEAD_DIM)
             for h in range(HEADS)], axis=-1)                # (B*S, D)
        x2d = x2d + _mm(a, w_o_ref[l]) + b_o_ref[l]

        # ----- MLP (pre-LN), tanh-approx GELU -----
        z = _layernorm(x2d, ln2_g_ref[l], ln2_b_ref[l])
        h1 = _gelu(_mm(z, w_fc1_ref[l]) + b_fc1_ref[l])
        return x2d + _mm(h1, w_fc2_ref[l]) + b_fc2_ref[l]

    # LAYERS=2: keep fully unrolled.  At 12 layers switch to unroll=False
    # (dynamic w_*_ref[l] indexing already supports it) so code size stays
    # bounded and a weight-streaming double buffer can reach steady state.
    x2d = lax.fori_loop(0, LAYERS, layer_body, x2d, unroll=True)

    # --- final LayerNorm + class-token readout + custom Linear head
    xf = _layernorm(x2d, lnf_g_ref[...], lnf_b_ref[...])
    cls_tok = xf.reshape(B, SEQ_PAD, DIM)[:, 0, :]           # (B, D)
    out_ref[...] = _mm(cls_tok, head_w_ref[...]) + head_b_ref[...]


# ------------------------------ model forward --------------------------------
def vit_forward(x, params):
    # Patch extraction: pure layout glue (the patch-embed matmul itself runs
    # inside the fused Pallas kernel).  Ordering matches conv-weight flatten
    # order (c, kh, kw), as in Conv2d(C, D, kernel=PATCH, stride=PATCH).
    patches = x.reshape(B, CIN, HP, PATCH, HP, PATCH)
    patches = patches.transpose(0, 2, 4, 1, 3, 5)
    patches = patches.reshape(B, NPATCH, CIN * PATCH * PATCH)
    # Pre-pad to token-row layout: row 0 per batch = cls slot (zeros), rows
    # SEQ..SEQ_PAD-1 = sublane pad (zeros).  Kernel then never needs a token
    # scratch buffer or masked partial stores.
    patches = jnp.pad(patches, ((0, 0), (1, SEQ_PAD - SEQ), (0, 0)))
    patches = patches.reshape(B * SEQ_PAD, CIN * PATCH * PATCH)

    args = (
        patches,
        params["conv_w"], params["conv_b"],
        params["cls"], params["pos"],
        params["ln1_g"], params["ln1_b"],
        params["w_qkv"], params["b_qkv"],
        params["w_o"], params["b_o"],
        params["ln2_g"], params["ln2_b"],
        params["w_fc1"], params["b_fc1"],
        params["w_fc2"], params["b_fc2"],
        params["ln_g"], params["ln_b"],
        params["head_w"], params["head_b"],
    )

    # Whole-array VMEM residency, stated explicitly.  At real ViT-B scale the
    # stacked per-layer weights must instead go memory_space=pl.ANY and be
    # streamed per layer with pltpu.make_async_copy (see header notes).
    vmem_spec = lambda: pl.BlockSpec(memory_space=pltpu.MemorySpace.VMEM)
    return pl.pallas_call(
        _vit_fused_kernel,
        out_shape=jax.ShapeDtypeStruct((B, NUM_LABELS), jnp.float32),
        in_specs=[vmem_spec() for _ in args],
        out_specs=vmem_spec(),
    )(*args)


# ------------------------------ params init ----------------------------------
def init_params(key):
    keys = jax.random.split(key, 4 + LAYERS)

    def nrm(k, shape, scale=0.02):
        return (scale * jax.random.normal(k, shape)).astype(jnp.float32)

    # Position embedding is padded to SEQ_PAD once here (no per-call pad op).
    pos = nrm(keys[2], (1, SEQ, DIM))
    pos_pad = jnp.pad(pos, ((0, 0), (0, SEQ_PAD - SEQ), (0, 0)))

    params = {
        "conv_w": nrm(keys[0], (CIN * PATCH * PATCH, DIM)),
        "conv_b": jnp.zeros((1, DIM), jnp.float32),
        "cls": nrm(keys[1], (1, DIM)),
        "pos": pos_pad,
        "ln_g": jnp.ones((1, DIM), jnp.float32),
        "ln_b": jnp.zeros((1, DIM), jnp.float32),
        "head_w": nrm(keys[3], (DIM, NUM_LABELS)),
        "head_b": jnp.zeros((1, NUM_LABELS), jnp.float32),
    }

    w_qkv, w_o, w_fc1, w_fc2 = [], [], [], []
    for l in range(LAYERS):
        lk = jax.random.split(keys[4 + l], 4)   # unique key per layer
        w_qkv.append(nrm(lk[0], (DIM, 3 * DIM)))
        w_o.append(nrm(lk[1], (DIM, DIM)))
        w_fc1.append(nrm(lk[2], (DIM, MLP)))
        w_fc2.append(nrm(lk[3], (MLP, DIM)))

    params.update({
        "w_qkv": jnp.stack(w_qkv),
        "b_qkv": jnp.zeros((LAYERS, 1, 3 * DIM), jnp.float32),
        "w_o": jnp.stack(w_o),
        "b_o": jnp.zeros((LAYERS, 1, DIM), jnp.float32),
        "w_fc1": jnp.stack(w_fc1),
        "b_fc1": jnp.zeros((LAYERS, 1, MLP), jnp.float32),
        "w_fc2": jnp.stack(w_fc2),
        "b_fc2": jnp.zeros((LAYERS, 1, DIM), jnp.float32),
        "ln1_g": jnp.ones((LAYERS, 1, DIM), jnp.float32),
        "ln1_b": jnp.zeros((LAYERS, 1, DIM), jnp.float32),
        "ln2_g": jnp.ones((LAYERS, 1, DIM), jnp.float32),
        "ln2_b": jnp.zeros((LAYERS, 1, DIM), jnp.float32),
    })
    return params


# --------------------------------- main ---------------------------------------
if __name__ == "__main__":
    key = jax.random.PRNGKey(0)
    kx, kp = jax.random.split(key)
    x = jax.random.normal(kx, (B, CIN, IMG, IMG), dtype=jnp.float32)
    params = init_params(kp)

    fwd = jax.jit(lambda xx: vit_forward(xx, params))
    logits = fwd(x)
    jax.block_until_ready(logits)
    assert logits.shape == (B, NUM_LABELS) and logits.dtype == jnp.float32
    assert bool(jnp.all(jnp.isfinite(logits)))
    print("KERNEL_OK")
</pallas_src>

<mosaic_0001>
module attributes {stable_mosaic.version = 11 : i64} {
  func.func @_vit_fused_kernel(%arg0: memref<16x768xf32, #tpu.memory_space<vmem>>, %arg1: memref<768x32xf32, #tpu.memory_space<vmem>>, %arg2: memref<1x32xf32, #tpu.memory_space<vmem>>, %arg3: memref<1x32xf32, #tpu.memory_space<vmem>>, %arg4: memref<1x8x32xf32, #tpu.memory_space<vmem>>, %arg5: memref<2x1x32xf32, #tpu.memory_space<vmem>>, %arg6: memref<2x1x32xf32, #tpu.memory_space<vmem>>, %arg7: memref<2x32x96xf32, #tpu.memory_space<vmem>>, %arg8: memref<2x1x96xf32, #tpu.memory_space<vmem>>, %arg9: memref<2x32x32xf32, #tpu.memory_space<vmem>>, %arg10: memref<2x1x32xf32, #tpu.memory_space<vmem>>, %arg11: memref<2x1x32xf32, #tpu.memory_space<vmem>>, %arg12: memref<2x1x32xf32, #tpu.memory_space<vmem>>, %arg13: memref<2x32x64xf32, #tpu.memory_space<vmem>>, %arg14: memref<2x1x64xf32, #tpu.memory_space<vmem>>, %arg15: memref<2x64x32xf32, #tpu.memory_space<vmem>>, %arg16: memref<2x1x32xf32, #tpu.memory_space<vmem>>, %arg17: memref<1x32xf32, #tpu.memory_space<vmem>>, %arg18: memref<1x32xf32, #tpu.memory_space<vmem>>, %arg19: memref<32x4xf32, #tpu.memory_space<vmem>>, %arg20: memref<1x4xf32, #tpu.memory_space<vmem>>, %arg21: memref<2x4xf32, #tpu.memory_space<vmem>>) attributes {dimension_semantics = [], scalar_prefetch = 0 : i64, scratch_operands = 0 : i64, tpu.core_type = #tpu.core_type<tc>} {
    %c0 = arith.constant 0 : index
    %c0_0 = arith.constant 0 : index
    %0 = vector.load %arg0[%c0, %c0_0] : memref<16x768xf32, #tpu.memory_space<vmem>>, vector<16x768xf32>
    %c0_1 = arith.constant 0 : index
    %c0_2 = arith.constant 0 : index
    %1 = vector.load %arg1[%c0_1, %c0_2] : memref<768x32xf32, #tpu.memory_space<vmem>>, vector<768x32xf32>
    %cst = arith.constant dense<0.000000e+00> : vector<16x32xf32>
    %2 = tpu.matmul %0, %1, %cst {dimension_numbers = #tpu.dot_dimension_numbers<[1], [0], [0], [1], [0, 0, 1, 1], [], []>} : vector<16x768xf32>, vector<768x32xf32>, vector<16x32xf32> -> vector<16x32xf32>
    %3 = tpu.iota {dimensions = array<i32: 0>} : vector<16x1xi32>
    %c7_i32 = arith.constant 7 : i32
    %4 = vector.broadcast %c7_i32 : i32 to vector<16x1xi32>
    %5 = arith.andi %3, %4 : vector<16x1xi32>
    %c1_i32 = arith.constant 1 : i32
    %6 = vector.broadcast %c1_i32 : i32 to vector<16x1xi32>
    %7 = arith.cmpi sge, %5, %6 : vector<16x1xi32>
    %c5_i32 = arith.constant 5 : i32
    %8 = vector.broadcast %c5_i32 : i32 to vector<16x1xi32>
    %9 = arith.cmpi slt, %5, %8 : vector<16x1xi32>
    %10 = arith.andi %7, %9 : vector<16x1xi1>
    %cst_3 = arith.constant 1.000000e+00 : f32
    %cst_4 = arith.constant 0.000000e+00 : f32
    %11 = vector.broadcast %cst_3 : f32 to vector<16x1xf32>
    %12 = vector.broadcast %cst_4 : f32 to vector<16x1xf32>
    %13 = arith.select %10, %11, %12 : vector<16x1xi1>, vector<16x1xf32>
    %c0_i32 = arith.constant 0 : i32
    %14 = vector.broadcast %c0_i32 : i32 to vector<16x1xi32>
    %15 = arith.cmpi eq, %5, %14 : vector<16x1xi32>
    %cst_5 = arith.constant 1.000000e+00 : f32
    %cst_6 = arith.constant 0.000000e+00 : f32
    %16 = vector.broadcast %cst_5 : f32 to vector<16x1xf32>
    %17 = vector.broadcast %cst_6 : f32 to vector<16x1xf32>
    %18 = arith.select %15, %16, %17 : vector<16x1xi1>, vector<16x1xf32>
    %c0_7 = arith.constant 0 : index
    %c0_8 = arith.constant 0 : index
    %c0_9 = arith.constant 0 : index
    %19 = vector.load %arg4[%c0_7, %c0_8, %c0_9] : memref<1x8x32xf32, #tpu.memory_space<vmem>>, vector<1x8x32xf32>
    %20 = vector.shape_cast %19 : vector<1x8x32xf32> to vector<1x8x32xf32>
    %21 = vector.broadcast %20 : vector<1x8x32xf32> to vector<2x8x32xf32>
    %22 = vector.shape_cast %21 : vector<2x8x32xf32> to vector<16x32xf32>
    %c0_10 = arith.constant 0 : index
    %c0_11 = arith.constant 0 : index
    %23 = vector.load %arg2[%c0_10, %c0_11] : memref<1x32xf32, #tpu.memory_space<vmem>>, vector<1x32xf32>
    %24 = vector.broadcast %13 : vector<16x1xf32> to vector<16x32xf32>
    %25 = vector.broadcast %23 : vector<1x32xf32> to vector<16x32xf32>
    %26 = arith.mulf %24, %25 : vector<16x32xf32>
    %27 = arith.addf %2, %26 : vector<16x32xf32>
    %c0_12 = arith.constant 0 : index
    %c0_13 = arith.constant 0 : index
    %28 = vector.load %arg3[%c0_12, %c0_13] : memref<1x32xf32, #tpu.memory_space<vmem>>, vector<1x32xf32>
    %29 = vector.broadcast %18 : vector<16x1xf32> to vector<16x32xf32>
    %30 = vector.broadcast %28 : vector<1x32xf32> to vector<16x32xf32>
    %31 = arith.mulf %29, %30 : vector<16x32xf32>
    %32 = arith.addf %27, %31 : vector<16x32xf32>
    %33 = arith.addf %32, %22 : vector<16x32xf32>
    %34 = tpu.iota {dimensions = array<i32: 2>} : vector<1x1x8xi32>
    %c5_i32_14 = arith.constant 5 : i32
    %35 = vector.broadcast %c5_i32_14 : i32 to vector<1x1x8xi32>
    %36 = arith.cmpi sge, %34, %35 : vector<1x1x8xi32>
    %cst_15 = arith.constant -1.000000e+30 : f32
    %cst_16 = arith.constant 0.000000e+00 : f32
    %37 = vector.broadcast %cst_15 : f32 to vector<1x1x8xf32>
    %38 = vector.broadcast %cst_16 : f32 to vector<1x1x8xf32>
    %39 = arith.select %36, %37, %38 : vector<1x1x8xi1>, vector<1x1x8xf32>
    %c0_i32_17 = arith.constant 0 : i32
    %40 = arith.index_cast %c0_i32_17 : i32 to index
    %c0_18 = arith.constant 0 : index
    %c0_19 = arith.constant 0 : index
    %41 = vector.load %arg5[%40, %c0_18, %c0_19] : memref<2x1x32xf32, #tpu.memory_space<vmem>>, vector<1x1x32xf32>
    %42 = vector.shape_cast %41 : vector<1x1x32xf32> to vector<1x32xf32>
    %43 = arith.index_cast %c0_i32_17 : i32 to index
    %c0_20 = arith.constant 0 : index
    %c0_21 = arith.constant 0 : index
    %44 = vector.load %arg6[%43, %c0_20, %c0_21] : memref<2x1x32xf32, #tpu.memory_space<vmem>>, vector<1x1x32xf32>
    %45 = vector.shape_cast %44 : vector<1x1x32xf32> to vector<1x32xf32>
    %cst_22 = arith.constant dense<0.000000e+00> : vector<16xf32>
    %46 = vector.multi_reduction <add>, %33, %cst_22 [1] : vector<16x32xf32> to vector<16xf32>
    %47 = vector.shape_cast %46 : vector<16xf32> to vector<16x1xf32>
    %cst_23 = arith.constant 3.200000e+01 : f32
    %48 = vector.broadcast %cst_23 : f32 to vector<16x1xf32>
    %49 = arith.divf %47, %48 : vector<16x1xf32>
    %50 = vector.broadcast %49 : vector<16x1xf32> to vector<16x32xf32>
    %51 = arith.subf %33, %50 : vector<16x32xf32>
    %52 = arith.mulf %51, %51 : vector<16x32xf32>
    %cst_24 = arith.constant dense<0.000000e+00> : vector<16xf32>
    %53 = vector.multi_reduction <add>, %52, %cst_24 [1] : vector<16x32xf32> to vector<16xf32>
    %54 = vector.shape_cast %53 : vector<16xf32> to vector<16x1xf32>
    %cst_25 = arith.constant 3.200000e+01 : f32
    %55 = vector.broadcast %cst_25 : f32 to vector<16x1xf32>
    %56 = arith.divf %54, %55 : vector<16x1xf32>
    %cst_26 = arith.constant 9.99999997E-7 : f32
    %57 = vector.broadcast %cst_26 : f32 to vector<16x1xf32>
    %58 = arith.addf %56, %57 : vector<16x1xf32>
    %59 = math.rsqrt %58 : vector<16x1xf32>
    %60 = vector.broadcast %59 : vector<16x1xf32> to vector<16x32xf32>
    %61 = arith.mulf %51, %60 : vector<16x32xf32>
    %62 = vector.broadcast %42 : vector<1x32xf32> to vector<16x32xf32>
    %63 = arith.mulf %61, %62 : vector<16x32xf32>
    %64 = vector.broadcast %45 : vector<1x32xf32> to vector<16x32xf32>
    %65 = arith.addf %63, %64 : vector<16x32xf32>
    %66 = arith.index_cast %c0_i32_17 : i32 to index
    %c0_27 = arith.constant 0 : index
    %c0_28 = arith.constant 0 : index
    %67 = vector.load %arg7[%66, %c0_27, %c0_28] : memref<2x32x96xf32, #tpu.memory_space<vmem>>, vector<1x32x96xf32>
    %68 = vector.shape_cast %67 : vector<1x32x96xf32> to vector<32x96xf32>
    %cst_29 = arith.constant dense<0.000000e+00> : vector<16x96xf32>
    %69 = tpu.matmul %65, %68, %cst_29 {dimension_numbers = #tpu.dot_dimension_numbers<[1], [0], [0], [1], [0, 0, 1, 1], [], []>} : vector<16x32xf32>, vector<32x96xf32>, vector<16x96xf32> -> vector<16x96xf32>
    %70 = arith.index_cast %c0_i32_17 : i32 to index
    %c0_30 = arith.constant 0 : index
    %c0_31 = arith.constant 0 : index
    %71 = vector.load %arg8[%70, %c0_30, %c0_31] : memref<2x1x96xf32, #tpu.memory_space<vmem>>, vector<1x1x96xf32>
    %72 = vector.shape_cast %71 : vector<1x1x96xf32> to vector<1x96xf32>
    %73 = vector.broadcast %72 : vector<1x96xf32> to vector<16x96xf32>
    %74 = arith.addf %69, %73 : vector<16x96xf32>
    %75 = vector.extract_strided_slice %74 {offsets = [0, 0], sizes = [16, 32], strides = [1, 1]} : vector<16x96xf32> to vector<16x32xf32>
    %cst_32 = arith.constant 0.353553385 : f32
    %76 = vector.broadcast %cst_32 : f32 to vector<16x32xf32>
    %77 = arith.mulf %75, %76 : vector<16x32xf32>
    %78 = vector.extract_strided_slice %74 {offsets = [0, 32], sizes = [16, 32], strides = [1, 1]} : vector<16x96xf32> to vector<16x32xf32>
    %79 = vector.extract_strided_slice %74 {offsets = [0, 64], sizes = [16, 32], strides = [1, 1]} : vector<16x96xf32> to vector<16x32xf32>
    %80 = vector.extract_strided_slice %77 {offsets = [0, 0], sizes = [16, 8], strides = [1, 1]} : vector<16x32xf32> to vector<16x8xf32>
    %81 = vector.shape_cast %80 : vector<16x8xf32> to vector<2x8x8xf32>
    %82 = vector.extract_strided_slice %77 {offsets = [0, 8], sizes = [16, 8], strides = [1, 1]} : vector<16x32xf32> to vector<16x8xf32>
    %83 = vector.shape_cast %82 : vector<16x8xf32> to vector<2x8x8xf32>
    %84 = vector.extract_strided_slice %77 {offsets = [0, 16], sizes = [16, 8], strides = [1, 1]} : vector<16x32xf32> to vector<16x8xf32>
    %85 = vector.shape_cast %84 : vector<16x8xf32> to vector<2x8x8xf32>
    %86 = vector.extract_strided_slice %77 {offsets = [0, 24], sizes = [16, 8], strides = [1, 1]} : vector<16x32xf32> to vector<16x8xf32>
    %87 = vector.shape_cast %86 : vector<16x8xf32> to vector<2x8x8xf32>
    %88 = tpu.concatenate %81, %83, %85, %87 in 0 : vector<2x8x8xf32>, vector<2x8x8xf32>, vector<2x8x8xf32>, vector<2x8x8xf32> -> vector<8x8x8xf32>
    %89 = vector.extract_strided_slice %78 {offsets = [0, 0], sizes = [16, 8], strides = [1, 1]} : vector<16x32xf32> to vector<16x8xf32>
    %90 = vector.shape_cast %89 : vector<16x8xf32> to vector<2x8x8xf32>
    %91 = vector.extract_strided_slice %78 {offsets = [0, 8], sizes = [16, 8], strides = [1, 1]} : vector<16x32xf32> to vector<16x8xf32>
    %92 = vector.shape_cast %91 : vector<16x8xf32> to vector<2x8x8xf32>
    %93 = vector.extract_strided_slice %78 {offsets = [0, 16], sizes = [16, 8], strides = [1, 1]} : vector<16x32xf32> to vector<16x8xf32>
    %94 = vector.shape_cast %93 : vector<16x8xf32> to vector<2x8x8xf32>
    %95 = vector.extract_strided_slice %78 {offsets = [0, 24], sizes = [16, 8], strides = [1, 1]} : vector<16x32xf32> to vector<16x8xf32>
    %96 = vector.shape_cast %95 : vector<16x8xf32> to vector<2x8x8xf32>
    %97 = tpu.concatenate %90, %92, %94, %96 in 0 : vector<2x8x8xf32>, vector<2x8x8xf32>, vector<2x8x8xf32>, vector<2x8x8xf32> -> vector<8x8x8xf32>
    %98 = vector.extract_strided_slice %79 {offsets = [0, 0], sizes = [16, 8], strides = [1, 1]} : vector<16x32xf32> to vector<16x8xf32>
    %99 = vector.shape_cast %98 : vector<16x8xf32> to vector<2x8x8xf32>
    %100 = vector.extract_strided_slice %79 {offsets = [0, 8], sizes = [16, 8], strides = [1, 1]} : vector<16x32xf32> to vector<16x8xf32>
    %101 = vector.shape_cast %100 : vector<16x8xf32> to vector<2x8x8xf32>
    %102 = vector.extract_strided_slice %79 {offsets = [0, 16], sizes = [16, 8], strides = [1, 1]} : vector<16x32xf32> to vector<16x8xf32>
    %103 = vector.shape_cast %102 : vector<16x8xf32> to vector<2x8x8xf32>
    %104 = vector.extract_strided_slice %79 {offsets = [0, 24], sizes = [16, 8], strides = [1, 1]} : vector<16x32xf32> to vector<16x8xf32>
    %105 = vector.shape_cast %104 : vector<16x8xf32> to vector<2x8x8xf32>
    %106 = tpu.concatenate %99, %101, %103, %105 in 0 : vector<2x8x8xf32>, vector<2x8x8xf32>, vector<2x8x8xf32>, vector<2x8x8xf32> -> vector<8x8x8xf32>
    "tpu.trace_start"() <{level = 10 : i32, message = "bqd,bkd->bqk"}> : () -> ()
    %cst_33 = arith.constant dense<0.000000e+00> : vector<8x8x8xf32>
    %107 = tpu.matmul %88, %97, %cst_33 {dimension_numbers = #tpu.dot_dimension_numbers<[2], [2], [1], [1], [0, 0, 0, 1, 1, 1], [0], [0]>} : vector<8x8x8xf32>, vector<8x8x8xf32>, vector<8x8x8xf32> -> vector<8x8x8xf32>
    "tpu.trace_stop"() : () -> ()
    %108 = vector.broadcast %39 : vector<1x1x8xf32> to vector<8x8x8xf32>
    %109 = arith.addf %107, %108 : vector<8x8x8xf32>
    %cst_34 = arith.constant dense<0xFF800000> : vector<8x8xf32>
    %110 = vector.multi_reduction <maximumf>, %109, %cst_34 [2] : vector<8x8x8xf32> to vector<8x8xf32>
    %111 = vector.shape_cast %110 : vector<8x8xf32> to vector<8x8x1xf32>
    %112 = vector.broadcast %111 : vector<8x8x1xf32> to vector<8x8x8xf32>
    %113 = arith.subf %109, %112 : vector<8x8x8xf32>
    %114 = math.exp %113 : vector<8x8x8xf32>
    %cst_35 = arith.constant dense<0.000000e+00> : vector<8x8xf32>
    %115 = vector.multi_reduction <add>, %114, %cst_35 [2] : vector<8x8x8xf32> to vector<8x8xf32>
    %116 = vector.shape_cast %115 : vector<8x8xf32> to vector<8x8x1xf32>
    %117 = tpu.reciprocal %116 {approx = true} : vector<8x8x1xf32> -> vector<8x8x1xf32>
    %118 = vector.broadcast %117 : vector<8x8x1xf32> to vector<8x8x8xf32>
    %119 = arith.mulf %114, %118 : vector<8x8x8xf32>
    "tpu.trace_start"() <{level = 10 : i32, message = "bqk,bkd->bqd"}> : () -> ()
    %cst_36 = arith.constant dense<0.000000e+00> : vector<8x8x8xf32>
    %120 = tpu.matmul %119, %106, %cst_36 {dimension_numbers = #tpu.dot_dimension_numbers<[2], [1], [1], [2], [0, 0, 0, 1, 1, 2], [0], [0]>} : vector<8x8x8xf32>, vector<8x8x8xf32>, vector<8x8x8xf32> -> vector<8x8x8xf32>
    "tpu.trace_stop"() : () -> ()
    %121 = vector.extract_strided_slice %120 {offsets = [0, 0, 0], sizes = [2, 8, 8], strides = [1, 1, 1]} : vector<8x8x8xf32> to vector<2x8x8xf32>
    %122 = vector.shape_cast %121 : vector<2x8x8xf32> to vector<16x8xf32>
    %123 = vector.extract_strided_slice %120 {offsets = [2, 0, 0], sizes = [2, 8, 8], strides = [1, 1, 1]} : vector<8x8x8xf32> to vector<2x8x8xf32>
    %124 = vector.shape_cast %123 : vector<2x8x8xf32> to vector<16x8xf32>
    %125 = vector.extract_strided_slice %120 {offsets = [4, 0, 0], sizes = [2, 8, 8], strides = [1, 1, 1]} : vector<8x8x8xf32> to vector<2x8x8xf32>
    %126 = vector.shape_cast %125 : vector<2x8x8xf32> to vector<16x8xf32>
    %127 = vector.extract_strided_slice %120 {offsets = [6, 0, 0], sizes = [2, 8, 8], strides = [1, 1, 1]} : vector<8x8x8xf32> to vector<2x8x8xf32>
    %128 = vector.shape_cast %127 : vector<2x8x8xf32> to vector<16x8xf32>
    %129 = tpu.concatenate %122, %124, %126, %128 in 1 : vector<16x8xf32>, vector<16x8xf32>, vector<16x8xf32>, vector<16x8xf32> -> vector<16x32xf32>
    %130 = arith.index_cast %c0_i32_17 : i32 to index
    %c0_37 = arith.constant 0 : index
    %c0_38 = arith.constant 0 : index
    %131 = vector.load %arg9[%130, %c0_37, %c0_38] : memref<2x32x32xf32, #tpu.memory_space<vmem>>, vector<1x32x32xf32>
    %132 = vector.shape_cast %131 : vector<1x32x32xf32> to vector<32x32xf32>
    %cst_39 = arith.constant dense<0.000000e+00> : vector<16x32xf32>
    %133 = tpu.matmul %129, %132, %cst_39 {dimension_numbers = #tpu.dot_dimension_numbers<[1], [0], [0], [1], [0, 0, 1, 1], [], []>} : vector<16x32xf32>, vector<32x32xf32>, vector<16x32xf32> -> vector<16x32xf32>
    %134 = arith.addf %33, %133 : vector<16x32xf32>
    %135 = arith.index_cast %c0_i32_17 : i32 to index
    %c0_40 = arith.constant 0 : index
    %c0_41 = arith.constant 0 : index
    %136 = vector.load %arg10[%135, %c0_40, %c0_41] : memref<2x1x32xf32, #tpu.memory_space<vmem>>, vector<1x1x32xf32>
    %137 = vector.shape_cast %136 : vector<1x1x32xf32> to vector<1x32xf32>
    %138 = vector.broadcast %137 : vector<1x32xf32> to vector<16x32xf32>
    %139 = arith.addf %134, %138 : vector<16x32xf32>
    %140 = arith.index_cast %c0_i32_17 : i32 to index
    %c0_42 = arith.constant 0 : index
    %c0_43 = arith.constant 0 : index
    %141 = vector.load %arg11[%140, %c0_42, %c0_43] : memref<2x1x32xf32, #tpu.memory_space<vmem>>, vector<1x1x32xf32>
    %142 = vector.shape_cast %141 : vector<1x1x32xf32> to vector<1x32xf32>
    %143 = arith.index_cast %c0_i32_17 : i32 to index
    %c0_44 = arith.constant 0 : index
    %c0_45 = arith.constant 0 : index
    %144 = vector.load %arg12[%143, %c0_44, %c0_45] : memref<2x1x32xf32, #tpu.memory_space<vmem>>, vector<1x1x32xf32>
    %145 = vector.shape_cast %144 : vector<1x1x32xf32> to vector<1x32xf32>
    %cst_46 = arith.constant dense<0.000000e+00> : vector<16xf32>
    %146 = vector.multi_reduction <add>, %139, %cst_46 [1] : vector<16x32xf32> to vector<16xf32>
    %147 = vector.shape_cast %146 : vector<16xf32> to vector<16x1xf32>
    %cst_47 = arith.constant 3.200000e+01 : f32
    %148 = vector.broadcast %cst_47 : f32 to vector<16x1xf32>
    %149 = arith.divf %147, %148 : vector<16x1xf32>
    %150 = vector.broadcast %149 : vector<16x1xf32> to vector<16x32xf32>
    %151 = arith.subf %139, %150 : vector<16x32xf32>
    %152 = arith.mulf %151, %151 : vector<16x32xf32>
    %cst_48 = arith.constant dense<0.000000e+00> : vector<16xf32>
    %153 = vector.multi_reduction <add>, %152, %cst_48 [1] : vector<16x32xf32> to vector<16xf32>
    %154 = vector.shape_cast %153 : vector<16xf32> to vector<16x1xf32>
    %cst_49 = arith.constant 3.200000e+01 : f32
    %155 = vector.broadcast %cst_49 : f32 to vector<16x1xf32>
    %156 = arith.divf %154, %155 : vector<16x1xf32>
    %cst_50 = arith.constant 9.99999997E-7 : f32
    %157 = vector.broadcast %cst_50 : f32 to vector<16x1xf32>
    %158 = arith.addf %156, %157 : vector<16x1xf32>
    %159 = math.rsqrt %158 : vector<16x1xf32>
    %160 = vector.broadcast %159 : vector<16x1xf32> to vector<16x32xf32>
    %161 = arith.mulf %151, %160 : vector<16x32xf32>
    %162 = vector.broadcast %142 : vector<1x32xf32> to vector<16x32xf32>
    %163 = arith.mulf %161, %162 : vector<16x32xf32>
    %164 = vector.broadcast %145 : vector<1x32xf32> to vector<16x32xf32>
    %165 = arith.addf %163, %164 : vector<16x32xf32>
    %166 = arith.index_cast %c0_i32_17 : i32 to index
    %c0_51 = arith.constant 0 : index
    %c0_52 = arith.constant 0 : index
    %167 = vector.load %arg13[%166, %c0_51, %c0_52] : memref<2x32x64xf32, #tpu.memory_space<vmem>>, vector<1x32x64xf32>
    %168 = vector.shape_cast %167 : vector<1x32x64xf32> to vector<32x64xf32>
    %cst_53 = arith.constant dense<0.000000e+00> : vector<16x64xf32>
    %169 = tpu.matmul %165, %168, %cst_53 {dimension_numbers = #tpu.dot_dimension_numbers<[1], [0], [0], [1], [0, 0, 1, 1], [], []>} : vector<16x32xf32>, vector<32x64xf32>, vector<16x64xf32> -> vector<16x64xf32>
    %170 = arith.index_cast %c0_i32_17 : i32 to index
    %c0_54 = arith.constant 0 : index
    %c0_55 = arith.constant 0 : index
    %171 = vector.load %arg14[%170, %c0_54, %c0_55] : memref<2x1x64xf32, #tpu.memory_space<vmem>>, vector<1x1x64xf32>
    %172 = vector.shape_cast %171 : vector<1x1x64xf32> to vector<1x64xf32>
    %173 = vector.broadcast %172 : vector<1x64xf32> to vector<16x64xf32>
    %174 = arith.addf %169, %173 : vector<16x64xf32>
    %cst_56 = arith.constant 5.000000e-01 : f32
    %175 = vector.broadcast %cst_56 : f32 to vector<16x64xf32>
    %176 = arith.mulf %175, %174 : vector<16x64xf32>
    %cst_57 = arith.constant 4.471500e-02 : f32
    %177 = vector.broadcast %cst_57 : f32 to vector<16x64xf32>
    %178 = arith.mulf %177, %174 : vector<16x64xf32>
    %179 = arith.mulf %178, %174 : vector<16x64xf32>
    %180 = arith.mulf %179, %174 : vector<16x64xf32>
    %181 = arith.addf %174, %180 : vector<16x64xf32>
    %cst_58 = arith.constant 0.797884583 : f32
    %182 = vector.broadcast %cst_58 : f32 to vector<16x64xf32>
    %183 = arith.mulf %182, %181 : vector<16x64xf32>
    %184 = math.tanh %183 : vector<16x64xf32>
    %cst_59 = arith.constant 1.000000e+00 : f32
    %185 = vector.broadcast %cst_59 : f32 to vector<16x64xf32>
    %186 = arith.addf %185, %184 : vector<16x64xf32>
    %187 = arith.mulf %176, %186 : vector<16x64xf32>
    %188 = arith.index_cast %c0_i32_17 : i32 to index
    %c0_60 = arith.constant 0 : index
    %c0_61 = arith.constant 0 : index
    %189 = vector.load %arg15[%188, %c0_60, %c0_61] : memref<2x64x32xf32, #tpu.memory_space<vmem>>, vector<1x64x32xf32>
    %190 = vector.shape_cast %189 : vector<1x64x32xf32> to vector<64x32xf32>
    %cst_62 = arith.constant dense<0.000000e+00> : vector<16x32xf32>
    %191 = tpu.matmul %187, %190, %cst_62 {dimension_numbers = #tpu.dot_dimension_numbers<[1], [0], [0], [1], [0, 0, 1, 1], [], []>} : vector<16x64xf32>, vector<64x32xf32>, vector<16x32xf32> -> vector<16x32xf32>
    %192 = arith.addf %139, %191 : vector<16x32xf32>
    %193 = arith.index_cast %c0_i32_17 : i32 to index
    %c0_63 = arith.constant 0 : index
    %c0_64 = arith.constant 0 : index
    %194 = vector.load %arg16[%193, %c0_63, %c0_64] : memref<2x1x32xf32, #tpu.memory_space<vmem>>, vector<1x1x32xf32>
    %195 = vector.shape_cast %194 : vector<1x1x32xf32> to vector<1x32xf32>
    %196 = vector.broadcast %195 : vector<1x32xf32> to vector<16x32xf32>
    %197 = arith.addf %192, %196 : vector<16x32xf32>
    %c1_i32_65 = arith.constant 1 : i32
    %198 = arith.index_cast %c1_i32_65 : i32 to index
    %c0_66 = arith.constant 0 : index
    %c0_67 = arith.constant 0 : index
    %199 = vector.load %arg5[%198, %c0_66, %c0_67] : memref<2x1x32xf32, #tpu.memory_space<vmem>>, vector<1x1x32xf32>
    %200 = vector.shape_cast %199 : vector<1x1x32xf32> to vector<1x32xf32>
    %201 = arith.index_cast %c1_i32_65 : i32 to index
    %c0_68 = arith.constant 0 : index
    %c0_69 = arith.constant 0 : index
    %202 = vector.load %arg6[%201, %c0_68, %c0_69] : memref<2x1x32xf32, #tpu.memory_space<vmem>>, vector<1x1x32xf32>
    %203 = vector.shape_cast %202 : vector<1x1x32xf32> to vector<1x32xf32>
    %cst_70 = arith.constant dense<0.000000e+00> : vector<16xf32>
    %204 = vector.multi_reduction <add>, %197, %cst_70 [1] : vector<16x32xf32> to vector<16xf32>
    %205 = vector.shape_cast %204 : vector<16xf32> to vector<16x1xf32>
    %cst_71 = arith.constant 3.200000e+01 : f32
    %206 = vector.broadcast %cst_71 : f32 to vector<16x1xf32>
    %207 = arith.divf %205, %206 : vector<16x1xf32>
    %208 = vector.broadcast %207 : vector<16x1xf32> to vector<16x32xf32>
    %209 = arith.subf %197, %208 : vector<16x32xf32>
    %210 = arith.mulf %209, %209 : vector<16x32xf32>
    %cst_72 = arith.constant dense<0.000000e+00> : vector<16xf32>
    %211 = vector.multi_reduction <add>, %210, %cst_72 [1] : vector<16x32xf32> to vector<16xf32>
    %212 = vector.shape_cast %211 : vector<16xf32> to vector<16x1xf32>
    %cst_73 = arith.constant 3.200000e+01 : f32
    %213 = vector.broadcast %cst_73 : f32 to vector<16x1xf32>
    %214 = arith.divf %212, %213 : vector<16x1xf32>
    %cst_74 = arith.constant 9.99999997E-7 : f32
    %215 = vector.broadcast %cst_74 : f32 to vector<16x1xf32>
    %216 = arith.addf %214, %215 : vector<16x1xf32>
    %217 = math.rsqrt %216 : vector<16x1xf32>
    %218 = vector.broadcast %217 : vector<16x1xf32> to vector<16x32xf32>
    %219 = arith.mulf %209, %218 : vector<16x32xf32>
    %220 = vector.broadcast %200 : vector<1x32xf32> to vector<16x32xf32>
    %221 = arith.mulf %219, %220 : vector<16x32xf32>
    %222 = vector.broadcast %203 : vector<1x32xf32> to vector<16x32xf32>
    %223 = arith.addf %221, %222 : vector<16x32xf32>
    %224 = arith.index_cast %c1_i32_65 : i32 to index
    %c0_75 = arith.constant 0 : index
    %c0_76 = arith.constant 0 : index
    %225 = vector.load %arg7[%224, %c0_75, %c0_76] : memref<2x32x96xf32, #tpu.memory_space<vmem>>, vector<1x32x96xf32>
    %226 = vector.shape_cast %225 : vector<1x32x96xf32> to vector<32x96xf32>
    %cst_77 = arith.constant dense<0.000000e+00> : vector<16x96xf32>
    %227 = tpu.matmul %223, %226, %cst_77 {dimension_numbers = #tpu.dot_dimension_numbers<[1], [0], [0], [1], [0, 0, 1, 1], [], []>} : vector<16x32xf32>, vector<32x96xf32>, vector<16x96xf32> -> vector<16x96xf32>
    %228 = arith.index_cast %c1_i32_65 : i32 to index
    %c0_78 = arith.constant 0 : index
    %c0_79 = arith.constant 0 : index
    %229 = vector.load %arg8[%228, %c0_78, %c0_79] : memref<2x1x96xf32, #tpu.memory_space<vmem>>, vector<1x1x96xf32>
    %230 = vector.shape_cast %229 : vector<1x1x96xf32> to vector<1x96xf32>
    %231 = vector.broadcast %230 : vector<1x96xf32> to vector<16x96xf32>
    %232 = arith.addf %227, %231 : vector<16x96xf32>
    %233 = vector.extract_strided_slice %232 {offsets = [0, 0], sizes = [16, 32], strides = [1, 1]} : vector<16x96xf32> to vector<16x32xf32>
    %cst_80 = arith.constant 0.353553385 : f32
    %234 = vector.broadcast %cst_80 : f32 to vector<16x32xf32>
    %235 = arith.mulf %233, %234 : vector<16x32xf32>
    %236 = vector.extract_strided_slice %232 {offsets = [0, 32], sizes = [16, 32], strides = [1, 1]} : vector<16x96xf32> to vector<16x32xf32>
    %237 = vector.extract_strided_slice %232 {offsets = [0, 64], sizes = [16, 32], strides = [1, 1]} : vector<16x96xf32> to vector<16x32xf32>
    %238 = vector.extract_strided_slice %235 {offsets = [0, 0], sizes = [16, 8], strides = [1, 1]} : vector<16x32xf32> to vector<16x8xf32>
    %239 = vector.shape_cast %238 : vector<16x8xf32> to vector<2x8x8xf32>
    %240 = vector.extract_strided_slice %235 {offsets = [0, 8], sizes = [16, 8], strides = [1, 1]} : vector<16x32xf32> to vector<16x8xf32>
    %241 = vector.shape_cast %240 : vector<16x8xf32> to vector<2x8x8xf32>
    %242 = vector.extract_strided_slice %235 {offsets = [0, 16], sizes = [16, 8], strides = [1, 1]} : vector<16x32xf32> to vector<16x8xf32>
    %243 = vector.shape_cast %242 : vector<16x8xf32> to vector<2x8x8xf32>
    %244 = vector.extract_strided_slice %235 {offsets = [0, 24], sizes = [16, 8], strides = [1, 1]} : vector<16x32xf32> to vector<16x8xf32>
    %245 = vector.shape_cast %244 : vector<16x8xf32> to vector<2x8x8xf32>
    %246 = tpu.concatenate %239, %241, %243, %245 in 0 : vector<2x8x8xf32>, vector<2x8x8xf32>, vector<2x8x8xf32>, vector<2x8x8xf32> -> vector<8x8x8xf32>
    %247 = vector.extract_strided_slice %236 {offsets = [0, 0], sizes = [16, 8], strides = [1, 1]} : vector<16x32xf32> to vector<16x8xf32>
    %248 = vector.shape_cast %247 : vector<16x8xf32> to vector<2x8x8xf32>
    %249 = vector.extract_strided_slice %236 {offsets = [0, 8], sizes = [16, 8], strides = [1, 1]} : vector<16x32xf32> to vector<16x8xf32>
    %250 = vector.shape_cast %249 : vector<16x8xf32> to vector<2x8x8xf32>
    %251 = vector.extract_strided_slice %236 {offsets = [0, 16], sizes = [16, 8], strides = [1, 1]} : vector<16x32xf32> to vector<16x8xf32>
    %252 = vector.shape_cast %251 : vector<16x8xf32> to vector<2x8x8xf32>
    %253 = vector.extract_strided_slice %236 {offsets = [0, 24], sizes = [16, 8], strides = [1, 1]} : vector<16x32xf32> to vector<16x8xf32>
    %254 = vector.shape_cast %253 : vector<16x8xf32> to vector<2x8x8xf32>
    %255 = tpu.concatenate %248, %250, %252, %254 in 0 : vector<2x8x8xf32>, vector<2x8x8xf32>, vector<2x8x8xf32>, vector<2x8x8xf32> -> vector<8x8x8xf32>
    %256 = vector.extract_strided_slice %237 {offsets = [0, 0], sizes = [16, 8], strides = [1, 1]} : vector<16x32xf32> to vector<16x8xf32>
    %257 = vector.shape_cast %256 : vector<16x8xf32> to vector<2x8x8xf32>
    %258 = vector.extract_strided_slice %237 {offsets = [0, 8], sizes = [16, 8], strides = [1, 1]} : vector<16x32xf32> to vector<16x8xf32>
    %259 = vector.shape_cast %258 : vector<16x8xf32> to vector<2x8x8xf32>
    %260 = vector.extract_strided_slice %237 {offsets = [0, 16], sizes = [16, 8], strides = [1, 1]} : vector<16x32xf32> to vector<16x8xf32>
    %261 = vector.shape_cast %260 : vector<16x8xf32> to vector<2x8x8xf32>
    %262 = vector.extract_strided_slice %237 {offsets = [0, 24], sizes = [16, 8], strides = [1, 1]} : vector<16x32xf32> to vector<16x8xf32>
    %263 = vector.shape_cast %262 : vector<16x8xf32> to vector<2x8x8xf32>
    %264 = tpu.concatenate %257, %259, %261, %263 in 0 : vector<2x8x8xf32>, vector<2x8x8xf32>, vector<2x8x8xf32>, vector<2x8x8xf32> -> vector<8x8x8xf32>
    "tpu.trace_start"() <{level = 10 : i32, message = "bqd,bkd->bqk"}> : () -> ()
    %cst_81 = arith.constant dense<0.000000e+00> : vector<8x8x8xf32>
    %265 = tpu.matmul %246, %255, %cst_81 {dimension_numbers = #tpu.dot_dimension_numbers<[2], [2], [1], [1], [0, 0, 0, 1, 1, 1], [0], [0]>} : vector<8x8x8xf32>, vector<8x8x8xf32>, vector<8x8x8xf32> -> vector<8x8x8xf32>
    "tpu.trace_stop"() : () -> ()
    %266 = vector.broadcast %39 : vector<1x1x8xf32> to vector<8x8x8xf32>
    %267 = arith.addf %265, %266 : vector<8x8x8xf32>
    %cst_82 = arith.constant dense<0xFF800000> : vector<8x8xf32>
    %268 = vector.multi_reduction <maximumf>, %267, %cst_82 [2] : vector<8x8x8xf32> to vector<8x8xf32>
    %269 = vector.shape_cast %268 : vector<8x8xf32> to vector<8x8x1xf32>
    %270 = vector.broadcast %269 : vector<8x8x1xf32> to vector<8x8x8xf32>
    %271 = arith.subf %267, %270 : vector<8x8x8xf32>
    %272 = math.exp %271 : vector<8x8x8xf32>
    %cst_83 = arith.constant dense<0.000000e+00> : vector<8x8xf32>
    %273 = vector.multi_reduction <add>, %272, %cst_83 [2] : vector<8x8x8xf32> to vector<8x8xf32>
    %274 = vector.shape_cast %273 : vector<8x8xf32> to vector<8x8x1xf32>
    %275 = tpu.reciprocal %274 {approx = true} : vector<8x8x1xf32> -> vector<8x8x1xf32>
    %276 = vector.broadcast %275 : vector<8x8x1xf32> to vector<8x8x8xf32>
    %277 = arith.mulf %272, %276 : vector<8x8x8xf32>
    "tpu.trace_start"() <{level = 10 : i32, message = "bqk,bkd->bqd"}> : () -> ()
    %cst_84 = arith.constant dense<0.000000e+00> : vector<8x8x8xf32>
    %278 = tpu.matmul %277, %264, %cst_84 {dimension_numbers = #tpu.dot_dimension_numbers<[2], [1], [1], [2], [0, 0, 0, 1, 1, 2], [0], [0]>} : vector<8x8x8xf32>, vector<8x8x8xf32>, vector<8x8x8xf32> -> vector<8x8x8xf32>
    "tpu.trace_stop"() : () -> ()
    %279 = vector.extract_strided_slice %278 {offsets = [0, 0, 0], sizes = [2, 8, 8], strides = [1, 1, 1]} : vector<8x8x8xf32> to vector<2x8x8xf32>
    %280 = vector.shape_cast %279 : vector<2x8x8xf32> to vector<16x8xf32>
    %281 = vector.extract_strided_slice %278 {offsets = [2, 0, 0], sizes = [2, 8, 8], strides = [1, 1, 1]} : vector<8x8x8xf32> to vector<2x8x8xf32>
    %282 = vector.shape_cast %281 : vector<2x8x8xf32> to vector<16x8xf32>
    %283 = vector.extract_strided_slice %278 {offsets = [4, 0, 0], sizes = [2, 8, 8], strides = [1, 1, 1]} : vector<8x8x8xf32> to vector<2x8x8xf32>
    %284 = vector.shape_cast %283 : vector<2x8x8xf32> to vector<16x8xf32>
    %285 = vector.extract_strided_slice %278 {offsets = [6, 0, 0], sizes = [2, 8, 8], strides = [1, 1, 1]} : vector<8x8x8xf32> to vector<2x8x8xf32>
    %286 = vector.shape_cast %285 : vector<2x8x8xf32> to vector<16x8xf32>
    %287 = tpu.concatenate %280, %282, %284, %286 in 1 : vector<16x8xf32>, vector<16x8xf32>, vector<16x8xf32>, vector<16x8xf32> -> vector<16x32xf32>
    %288 = arith.index_cast %c1_i32_65 : i32 to index
    %c0_85 = arith.constant 0 : index
    %c0_86 = arith.constant 0 : index
    %289 = vector.load %arg9[%288, %c0_85, %c0_86] : memref<2x32x32xf32, #tpu.memory_space<vmem>>, vector<1x32x32xf32>
    %290 = vector.shape_cast %289 : vector<1x32x32xf32> to vector<32x32xf32>
    %cst_87 = arith.constant dense<0.000000e+00> : vector<16x32xf32>
    %291 = tpu.matmul %287, %290, %cst_87 {dimension_numbers = #tpu.dot_dimension_numbers<[1], [0], [0], [1], [0, 0, 1, 1], [], []>} : vector<16x32xf32>, vector<32x32xf32>, vector<16x32xf32> -> vector<16x32xf32>
    %292 = arith.addf %197, %291 : vector<16x32xf32>
    %293 = arith.index_cast %c1_i32_65 : i32 to index
    %c0_88 = arith.constant 0 : index
    %c0_89 = arith.constant 0 : index
    %294 = vector.load %arg10[%293, %c0_88, %c0_89] : memref<2x1x32xf32, #tpu.memory_space<vmem>>, vector<1x1x32xf32>
    %295 = vector.shape_cast %294 : vector<1x1x32xf32> to vector<1x32xf32>
    %296 = vector.broadcast %295 : vector<1x32xf32> to vector<16x32xf32>
    %297 = arith.addf %292, %296 : vector<16x32xf32>
    %298 = arith.index_cast %c1_i32_65 : i32 to index
    %c0_90 = arith.constant 0 : index
    %c0_91 = arith.constant 0 : index
    %299 = vector.load %arg11[%298, %c0_90, %c0_91] : memref<2x1x32xf32, #tpu.memory_space<vmem>>, vector<1x1x32xf32>
    %300 = vector.shape_cast %299 : vector<1x1x32xf32> to vector<1x32xf32>
    %301 = arith.index_cast %c1_i32_65 : i32 to index
    %c0_92 = arith.constant 0 : index
    %c0_93 = arith.constant 0 : index
    %302 = vector.load %arg12[%301, %c0_92, %c0_93] : memref<2x1x32xf32, #tpu.memory_space<vmem>>, vector<1x1x32xf32>
    %303 = vector.shape_cast %302 : vector<1x1x32xf32> to vector<1x32xf32>
    %cst_94 = arith.constant dense<0.000000e+00> : vector<16xf32>
    %304 = vector.multi_reduction <add>, %297, %cst_94 [1] : vector<16x32xf32> to vector<16xf32>
    %305 = vector.shape_cast %304 : vector<16xf32> to vector<16x1xf32>
    %cst_95 = arith.constant 3.200000e+01 : f32
    %306 = vector.broadcast %cst_95 : f32 to vector<16x1xf32>
    %307 = arith.divf %305, %306 : vector<16x1xf32>
    %308 = vector.broadcast %307 : vector<16x1xf32> to vector<16x32xf32>
    %309 = arith.subf %297, %308 : vector<16x32xf32>
    %310 = arith.mulf %309, %309 : vector<16x32xf32>
    %cst_96 = arith.constant dense<0.000000e+00> : vector<16xf32>
    %311 = vector.multi_reduction <add>, %310, %cst_96 [1] : vector<16x32xf32> to vector<16xf32>
    %312 = vector.shape_cast %311 : vector<16xf32> to vector<16x1xf32>
    %cst_97 = arith.constant 3.200000e+01 : f32
    %313 = vector.broadcast %cst_97 : f32 to vector<16x1xf32>
    %314 = arith.divf %312, %313 : vector<16x1xf32>
    %cst_98 = arith.constant 9.99999997E-7 : f32
    %315 = vector.broadcast %cst_98 : f32 to vector<16x1xf32>
    %316 = arith.addf %314, %315 : vector<16x1xf32>
    %317 = math.rsqrt %316 : vector<16x1xf32>
    %318 = vector.broadcast %317 : vector<16x1xf32> to vector<16x32xf32>
    %319 = arith.mulf %309, %318 : vector<16x32xf32>
    %320 = vector.broadcast %300 : vector<1x32xf32> to vector<16x32xf32>
    %321 = arith.mulf %319, %320 : vector<16x32xf32>
    %322 = vector.broadcast %303 : vector<1x32xf32> to vector<16x32xf32>
    %323 = arith.addf %321, %322 : vector<16x32xf32>
    %324 = arith.index_cast %c1_i32_65 : i32 to index
    %c0_99 = arith.constant 0 : index
    %c0_100 = arith.constant 0 : index
    %325 = vector.load %arg13[%324, %c0_99, %c0_100] : memref<2x32x64xf32, #tpu.memory_space<vmem>>, vector<1x32x64xf32>
    %326 = vector.shape_cast %325 : vector<1x32x64xf32> to vector<32x64xf32>
    %cst_101 = arith.constant dense<0.000000e+00> : vector<16x64xf32>
    %327 = tpu.matmul %323, %326, %cst_101 {dimension_numbers = #tpu.dot_dimension_numbers<[1], [0], [0], [1], [0, 0, 1, 1], [], []>} : vector<16x32xf32>, vector<32x64xf32>, vector<16x64xf32> -> vector<16x64xf32>
    %328 = arith.index_cast %c1_i32_65 : i32 to index
    %c0_102 = arith.constant 0 : index
    %c0_103 = arith.constant 0 : index
    %329 = vector.load %arg14[%328, %c0_102, %c0_103] : memref<2x1x64xf32, #tpu.memory_space<vmem>>, vector<1x1x64xf32>
    %330 = vector.shape_cast %329 : vector<1x1x64xf32> to vector<1x64xf32>
    %331 = vector.broadcast %330 : vector<1x64xf32> to vector<16x64xf32>
    %332 = arith.addf %327, %331 : vector<16x64xf32>
    %cst_104 = arith.constant 5.000000e-01 : f32
    %333 = vector.broadcast %cst_104 : f32 to vector<16x64xf32>
    %334 = arith.mulf %333, %332 : vector<16x64xf32>
    %cst_105 = arith.constant 4.471500e-02 : f32
    %335 = vector.broadcast %cst_105 : f32 to vector<16x64xf32>
    %336 = arith.mulf %335, %332 : vector<16x64xf32>
    %337 = arith.mulf %336, %332 : vector<16x64xf32>
    %338 = arith.mulf %337, %332 : vector<16x64xf32>
    %339 = arith.addf %332, %338 : vector<16x64xf32>
    %cst_106 = arith.constant 0.797884583 : f32
    %340 = vector.broadcast %cst_106 : f32 to vector<16x64xf32>
    %341 = arith.mulf %340, %339 : vector<16x64xf32>
    %342 = math.tanh %341 : vector<16x64xf32>
    %cst_107 = arith.constant 1.000000e+00 : f32
    %343 = vector.broadcast %cst_107 : f32 to vector<16x64xf32>
    %344 = arith.addf %343, %342 : vector<16x64xf32>
    %345 = arith.mulf %334, %344 : vector<16x64xf32>
    %346 = arith.index_cast %c1_i32_65 : i32 to index
    %c0_108 = arith.constant 0 : index
    %c0_109 = arith.constant 0 : index
    %347 = vector.load %arg15[%346, %c0_108, %c0_109] : memref<2x64x32xf32, #tpu.memory_space<vmem>>, vector<1x64x32xf32>
    %348 = vector.shape_cast %347 : vector<1x64x32xf32> to vector<64x32xf32>
    %cst_110 = arith.constant dense<0.000000e+00> : vector<16x32xf32>
    %349 = tpu.matmul %345, %348, %cst_110 {dimension_numbers = #tpu.dot_dimension_numbers<[1], [0], [0], [1], [0, 0, 1, 1], [], []>} : vector<16x64xf32>, vector<64x32xf32>, vector<16x32xf32> -> vector<16x32xf32>
    %350 = arith.addf %297, %349 : vector<16x32xf32>
    %351 = arith.index_cast %c1_i32_65 : i32 to index
    %c0_111 = arith.constant 0 : index
    %c0_112 = arith.constant 0 : index
    %352 = vector.load %arg16[%351, %c0_111, %c0_112] : memref<2x1x32xf32, #tpu.memory_space<vmem>>, vector<1x1x32xf32>
    %353 = vector.shape_cast %352 : vector<1x1x32xf32> to vector<1x32xf32>
    %354 = vector.broadcast %353 : vector<1x32xf32> to vector<16x32xf32>
    %355 = arith.addf %350, %354 : vector<16x32xf32>
    %c2_i32 = arith.constant 2 : i32
    %c0_113 = arith.constant 0 : index
    %c0_114 = arith.constant 0 : index
    %356 = vector.load %arg17[%c0_113, %c0_114] : memref<1x32xf32, #tpu.memory_space<vmem>>, vector<1x32xf32>
    %c0_115 = arith.constant 0 : index
    %c0_116 = arith.constant 0 : index
    %357 = vector.load %arg18[%c0_115, %c0_116] : memref<1x32xf32, #tpu.memory_space<vmem>>, vector<1x32xf32>
    %cst_117 = arith.constant dense<0.000000e+00> : vector<16xf32>
    %358 = vector.multi_reduction <add>, %355, %cst_117 [1] : vector<16x32xf32> to vector<16xf32>
    %359 = vector.shape_cast %358 : vector<16xf32> to vector<16x1xf32>
    %cst_118 = arith.constant 3.200000e+01 : f32
    %360 = vector.broadcast %cst_118 : f32 to vector<16x1xf32>
    %361 = arith.divf %359, %360 : vector<16x1xf32>
    %362 = vector.broadcast %361 : vector<16x1xf32> to vector<16x32xf32>
    %363 = arith.subf %355, %362 : vector<16x32xf32>
    %364 = arith.mulf %363, %363 : vector<16x32xf32>
    %cst_119 = arith.constant dense<0.000000e+00> : vector<16xf32>
    %365 = vector.multi_reduction <add>, %364, %cst_119 [1] : vector<16x32xf32> to vector<16xf32>
    %366 = vector.shape_cast %365 : vector<16xf32> to vector<16x1xf32>
    %cst_120 = arith.constant 3.200000e+01 : f32
    %367 = vector.broadcast %cst_120 : f32 to vector<16x1xf32>
    %368 = arith.divf %366, %367 : vector<16x1xf32>
    %cst_121 = arith.constant 9.99999997E-7 : f32
    %369 = vector.broadcast %cst_121 : f32 to vector<16x1xf32>
    %370 = arith.addf %368, %369 : vector<16x1xf32>
    %371 = math.rsqrt %370 : vector<16x1xf32>
    %372 = vector.broadcast %371 : vector<16x1xf32> to vector<16x32xf32>
    %373 = arith.mulf %363, %372 : vector<16x32xf32>
    %374 = vector.broadcast %356 : vector<1x32xf32> to vector<16x32xf32>
    %375 = arith.mulf %373, %374 : vector<16x32xf32>
    %376 = vector.broadcast %357 : vector<1x32xf32> to vector<16x32xf32>
    %377 = arith.addf %375, %376 : vector<16x32xf32>
    %378 = vector.shape_cast %377 : vector<16x32xf32> to vector<2x8x32xf32>
    %379 = vector.extract_strided_slice %378 {offsets = [0, 0, 0], sizes = [2, 1, 32], strides = [1, 1, 1]} : vector<2x8x32xf32> to vector<2x1x32xf32>
    %380 = vector.shape_cast %379 : vector<2x1x32xf32> to vector<2x32xf32>
    %c0_122 = arith.constant 0 : index
    %c0_123 = arith.constant 0 : index
    %381 = vector.load %arg19[%c0_122, %c0_123] : memref<32x4xf32, #tpu.memory_space<vmem>>, vector<32x4xf32>
    %cst_124 = arith.constant dense<0.000000e+00> : vector<2x4xf32>
    %382 = tpu.matmul %380, %381, %cst_124 {dimension_numbers = #tpu.dot_dimension_numbers<[1], [0], [0], [1], [0, 0, 1, 1], [], []>} : vector<2x32xf32>, vector<32x4xf32>, vector<2x4xf32> -> vector<2x4xf32>
    %c0_125 = arith.constant 0 : index
    %c0_126 = arith.constant 0 : index
    %383 = vector.load %arg20[%c0_125, %c0_126] : memref<1x4xf32, #tpu.memory_space<vmem>>, vector<1x4xf32>
    %384 = vector.broadcast %383 : vector<1x4xf32> to vector<2x4xf32>
    %385 = arith.addf %382, %384 : vector<2x4xf32>
    %c0_127 = arith.constant 0 : index
    %c0_128 = arith.constant 0 : index
    %386 = vector.load %arg21[%c0_127, %c0_128] : memref<2x4xf32, #tpu.memory_space<vmem>>, vector<2x4xf32>
    tpu.vector_store %arg21[%c0_127, %c0_128], %385 {strides = array<i32>} : memref<2x4xf32, #tpu.memory_space<vmem>>, vector<2x4xf32>,
    return
  }
}

</mosaic_0001>

<llo_original>
// kernel: _lambda_.1
$region0: #{_lambda_.1}
  #allocation0 [shape = 'u32[]', space=smem, size = 0x4, offset = 0x4, fixed_abs, tag = 'smem constant byte address 0x4 - core index']
  #allocation1 [shape = 'u32[144,128]{1,0:T(1,128)}', space=vmem, size = 0x12000, scoped, tag = 'internal scratch']
  %s0 = inlined_call_operand.vmem [shape: f32[16,768], index: 0, kind: input, shape index: {}]
  %s1 = inlined_call_operand.vmem [shape: f32[768,32], index: 1, kind: input, shape index: {}]
  %s2 = inlined_call_operand.vmem [shape: f32[1,32], index: 2, kind: input, shape index: {}, may-alias: {2,18}]
  %s3 = inlined_call_operand.vmem [shape: f32[1,32], index: 3, kind: input, shape index: {}]
  %s4 = inlined_call_operand.vmem [shape: f32[1,8,32], index: 4, kind: input, shape index: {}]
  %s5 = inlined_call_operand.vmem [shape: f32[2,1,32], index: 5, kind: input, shape index: {}, may-alias: {5,11}]
  %s6 = inlined_call_operand.vmem [shape: f32[2,1,32], index: 6, kind: input, shape index: {}, may-alias: {6,10,12,16}]
  %s7 = inlined_call_operand.vmem [shape: f32[2,32,96], index: 7, kind: input, shape index: {}]
  %s8 = inlined_call_operand.vmem [shape: f32[2,1,96], index: 8, kind: input, shape index: {}]
  %s9 = inlined_call_operand.vmem [shape: f32[2,32,32], index: 9, kind: input, shape index: {}]
  %s10 = inlined_call_operand.vmem [shape: f32[2,1,32], index: 10, kind: input, shape index: {}, may-alias: {6,10,12,16}]
  %s11 = inlined_call_operand.vmem [shape: f32[2,1,32], index: 11, kind: input, shape index: {}, may-alias: {5,11}]
  %s12 = inlined_call_operand.vmem [shape: f32[2,1,32], index: 12, kind: input, shape index: {}, may-alias: {6,10,12,16}]
  %s13 = inlined_call_operand.vmem [shape: f32[2,32,64], index: 13, kind: input, shape index: {}]
  %s14 = inlined_call_operand.vmem [shape: f32[2,1,64], index: 14, kind: input, shape index: {}]
  %s15 = inlined_call_operand.vmem [shape: f32[2,64,32], index: 15, kind: input, shape index: {}]
  %s16 = inlined_call_operand.vmem [shape: f32[2,1,32], index: 16, kind: input, shape index: {}, may-alias: {6,10,12,16}]
  %s17 = inlined_call_operand.vmem [shape: f32[1,32], index: 17, kind: input, shape index: {}]
  %s18 = inlined_call_operand.vmem [shape: f32[1,32], index: 18, kind: input, shape index: {}, may-alias: {2,18}]
  %s19 = inlined_call_operand.vmem [shape: f32[32,4], index: 19, kind: input, shape index: {}]
  %s20 = inlined_call_operand.vmem [shape: f32[1,4], index: 20, kind: input, shape index: {}]
  %s21 = inlined_call_operand.hbm [shape: f32[2,4], index: 21, kind: output, shape index: {}]
  %s22 = sld [smem:[#allocation0]]
  $region94: #{_lambda_.1} parent=0
    _
  %s24 = ssub.s32 1, %s22
  %s25 = scalar_select 0, %s24, %s22
  $region1: #{_lambda_.1} parent=0
    #allocation2 [shape = 'u8[1024]{0}', space=vmem, size = 0x400, scoped, tag = 'output window, operand 0, single buffered']
    #allocation3 [shape = 's32[1]{0}', space=sflag, size = 0x4, scoped, tag = 'scoped memory for _lambda_.1']
    %26 = vsyncpa [#allocation3], 0
    // Predicated region
    $region2: #{_lambda_.1} parent=1 // pred_check
      _
    $region3: #{_lambda_.1} parent=1 // pred_check_branch
      %28 = sbr.rel (0) target = $region5
    $region4: #{_lambda_.1} parent=1 // pred_region
      _
    $region5: #{_lambda_.1} parent=1 // pred_fallthru
      _
    // Predicated region
    $region6: #{_lambda_.1} parent=1 // pred_check
      _
    $region7: #{_lambda_.1} parent=1 // pred_check_branch
      %30 = sbr.rel (0) target = $region9
    $region8: #{_lambda_.1} parent=1 // pred_region
      _
    $region9: #{_lambda_.1} parent=1 // pred_fallthru
      _
    // Predicated region
    $region10: #{_lambda_.1} parent=1 // pred_check
      _
    $region11: #{_lambda_.1} parent=1 // pred_check_branch
      %32 = sbr.rel (0) target = $region13
    $region12: #{_lambda_.1} parent=1 // pred_region
      _
    $region13: #{_lambda_.1} parent=1 // pred_fallthru
      _
    // Predicated region
    $region14: #{_lambda_.1} parent=1 // pred_check
      _
    $region15: #{_lambda_.1} parent=1 // pred_check_branch
      %34 = sbr.rel (0) target = $region17
    $region16: #{_lambda_.1} parent=1 // pred_region
      _
    $region17: #{_lambda_.1} parent=1 // pred_fallthru
      _
    // Predicated region
    $region18: #{_lambda_.1} parent=1 // pred_check
      _
    $region19: #{_lambda_.1} parent=1 // pred_check_branch
      %36 = sbr.rel (0) target = $region21
    $region20: #{_lambda_.1} parent=1 // pred_region
      _
    $region21: #{_lambda_.1} parent=1 // pred_fallthru
      _
    // Predicated region
    $region22: #{_lambda_.1} parent=1 // pred_check
      _
    $region23: #{_lambda_.1} parent=1 // pred_check_branch
      %38 = sbr.rel (0) target = $region25
    $region24: #{_lambda_.1} parent=1 // pred_region
      _
    $region25: #{_lambda_.1} parent=1 // pred_fallthru
      _
    // Predicated region
    $region26: #{_lambda_.1} parent=1 // pred_check
      _
    $region27: #{_lambda_.1} parent=1 // pred_check_branch
      %40 = sbr.rel (0) target = $region29
    $region28: #{_lambda_.1} parent=1 // pred_region
      _
    $region29: #{_lambda_.1} parent=1 // pred_fallthru
      _
    // Predicated region
    $region30: #{_lambda_.1} parent=1 // pred_check
      _
    $region31: #{_lambda_.1} parent=1 // pred_check_branch
      %42 = sbr.rel (0) target = $region33
    $region32: #{_lambda_.1} parent=1 // pred_region
      _
    $region33: #{_lambda_.1} parent=1 // pred_fallthru
      _
    // Predicated region
    $region34: #{_lambda_.1} parent=1 // pred_check
      _
    $region35: #{_lambda_.1} parent=1 // pred_check_branch
      %44 = sbr.rel (0) target = $region37
    $region36: #{_lambda_.1} parent=1 // pred_region
      _
    $region37: #{_lambda_.1} parent=1 // pred_fallthru
      _
    // Predicated region
    $region38: #{_lambda_.1} parent=1 // pred_check
      _
    $region39: #{_lambda_.1} parent=1 // pred_check_branch
      %46 = sbr.rel (0) target = $region41
    $region40: #{_lambda_.1} parent=1 // pred_region
      _
    $region41: #{_lambda_.1} parent=1 // pred_fallthru
      _
    // Predicated region
    $region42: #{_lambda_.1} parent=1 // pred_check
      _
    $region43: #{_lambda_.1} parent=1 // pred_check_branch
      %48 = sbr.rel (0) target = $region45
    $region44: #{_lambda_.1} parent=1 // pred_region
      _
    $region45: #{_lambda_.1} parent=1 // pred_fallthru
      _
    // Predicated region
    $region46: #{_lambda_.1} parent=1 // pred_check
      _
    $region47: #{_lambda_.1} parent=1 // pred_check_branch
      %50 = sbr.rel (0) target = $region49
    $region48: #{_lambda_.1} parent=1 // pred_region
      _
    $region49: #{_lambda_.1} parent=1 // pred_fallthru
      _
    // Predicated region
    $region50: #{_lambda_.1} parent=1 // pred_check
      _
    $region51: #{_lambda_.1} parent=1 // pred_check_branch
      %52 = sbr.rel (0) target = $region53
    $region52: #{_lambda_.1} parent=1 // pred_region
      _
    $region53: #{_lambda_.1} parent=1 // pred_fallthru
      _
    // Predicated region
    $region54: #{_lambda_.1} parent=1 // pred_check
      _
    $region55: #{_lambda_.1} parent=1 // pred_check_branch
      %54 = sbr.rel (0) target = $region57
    $region56: #{_lambda_.1} parent=1 // pred_region
      _
    $region57: #{_lambda_.1} parent=1 // pred_fallthru
      _
    // Predicated region
    $region58: #{_lambda_.1} parent=1 // pred_check
      _
    $region59: #{_lambda_.1} parent=1 // pred_check_branch
      %56 = sbr.rel (0) target = $region61
    $region60: #{_lambda_.1} parent=1 // pred_region
      _
    $region61: #{_lambda_.1} parent=1 // pred_fallthru
      _
    // Predicated region
    $region62: #{_lambda_.1} parent=1 // pred_check
      _
    $region63: #{_lambda_.1} parent=1 // pred_check_branch
      %58 = sbr.rel (0) target = $region65
    $region64: #{_lambda_.1} parent=1 // pred_region
      _
    $region65: #{_lambda_.1} parent=1 // pred_fallthru
      _
    // Predicated region
    $region66: #{_lambda_.1} parent=1 // pred_check
      _
    $region67: #{_lambda_.1} parent=1 // pred_check_branch
      %60 = sbr.rel (0) target = $region69
    $region68: #{_lambda_.1} parent=1 // pred_region
      _
    $region69: #{_lambda_.1} parent=1 // pred_fallthru
      _
    // Predicated region
    $region70: #{_lambda_.1} parent=1 // pred_check
      _
    $region71: #{_lambda_.1} parent=1 // pred_check_branch
      %62 = sbr.rel (0) target = $region73
    $region72: #{_lambda_.1} parent=1 // pred_region
      _
    $region73: #{_lambda_.1} parent=1 // pred_fallthru
      _
    // Predicated region
    $region74: #{_lambda_.1} parent=1 // pred_check
      _
    $region75: #{_lambda_.1} parent=1 // pred_check_branch
      %64 = sbr.rel (0) target = $region77
    $region76: #{_lambda_.1} parent=1 // pred_region
      _
    $region77: #{_lambda_.1} parent=1 // pred_fallthru
      _
    // Predicated region
    $region78: #{_lambda_.1} parent=1 // pred_check
      _
    $region79: #{_lambda_.1} parent=1 // pred_check_branch
      %66 = sbr.rel (0) target = $region81
    $region80: #{_lambda_.1} parent=1 // pred_region
      _
    $region81: #{_lambda_.1} parent=1 // pred_fallthru
      _
    // Predicated region
    $region82: #{_lambda_.1} parent=1 // pred_check
      _
    $region83: #{_lambda_.1} parent=1 // pred_check_branch
      %68 = sbr.rel (0) target = $region85
    $region84: #{_lambda_.1} parent=1 // pred_region
      _
    $region85: #{_lambda_.1} parent=1 // pred_fallthru
      _
    %v69 = vld [vmem:[%s0] sm:$0xff]
    %v70 = vld [vmem:[%s0 + $0x8] sm:$0xff]
    %v71 = vld [vmem:[%s0 + $0x10] sm:$0xff]
    %v72 = vld [vmem:[%s0 + $0x18] sm:$0xff]
    %v73 = vld [vmem:[%s0 + $0x20] sm:$0xff]
    %v74 = vld [vmem:[%s0 + $0x28] sm:$0xff]
    %v75 = vld [vmem:[%s0 + $0x30] sm:$0xff]
    %v76 = vld [vmem:[%s0 + $0x38] sm:$0xff]
    %v77 = vld [vmem:[%s0 + $0x40] sm:$0xff]
    %v78 = vld [vmem:[%s0 + $0x48] sm:$0xff]
    %v79 = vld [vmem:[%s0 + $0x50] sm:$0xff]
    %v80 = vld [vmem:[%s0 + $0x58] sm:$0xff]
    %v81 = vld [vmem:[%s1] sm:$0xff]
    %v82 = vld [vmem:[%s1 + $0x8] sm:$0xff]
    %v83 = vld [vmem:[%s1 + $0x10] sm:$0xff]
    %v84 = vld [vmem:[%s1 + $0x18] sm:$0xff]
    %v85 = vld [vmem:[%s1 + $0x20] sm:$0xff]
    %v86 = vld [vmem:[%s1 + $0x28] sm:$0xff]
    %v87 = vld [vmem:[%s1 + $0x30] sm:$0xff]
    %v88 = vld [vmem:[%s1 + $0x38] sm:$0xff]
    %v89 = vld [vmem:[%s1 + $0x40] sm:$0xff]
    %v90 = vld [vmem:[%s1 + $0x48] sm:$0xff]
    %v91 = vld [vmem:[%s1 + $0x50] sm:$0xff]
    %v92 = vld [vmem:[%s1 + $0x58] sm:$0xff]
    %v93 = vld [vmem:[%s1 + $0x60] sm:$0xff]
    %v94 = vld [vmem:[%s1 + $0x68] sm:$0xff]
    %v95 = vld [vmem:[%s1 + $0x70] sm:$0xff]
    %v96 = vld [vmem:[%s1 + $0x78] sm:$0xff]
    %v97 = vld [vmem:[%s1 + $0x80] sm:$0xff]
    %v98 = vld [vmem:[%s1 + $0x88] sm:$0xff]
    %v99 = vld [vmem:[%s1 + $0x90] sm:$0xff]
    %v100 = vld [vmem:[%s1 + $0x98] sm:$0xff]
    %v101 = vld [vmem:[%s1 + $0xa0] sm:$0xff]
    %v102 = vld [vmem:[%s1 + $0xa8] sm:$0xff]
    %v103 = vld [vmem:[%s1 + $0xb0] sm:$0xff]
    %v104 = vld [vmem:[%s1 + $0xb8] sm:$0xff]
    %v105 = vld [vmem:[%s1 + $0xc0] sm:$0xff]
    %v106 = vld [vmem:[%s1 + $0xc8] sm:$0xff]
    %v107 = vld [vmem:[%s1 + $0xd0] sm:$0xff]
    %v108 = vld [vmem:[%s1 + $0xd8] sm:$0xff]
    %v109 = vld [vmem:[%s1 + $0xe0] sm:$0xff]
    %v110 = vld [vmem:[%s1 + $0xe8] sm:$0xff]
    %v111 = vld [vmem:[%s1 + $0xf0] sm:$0xff]
    %v112 = vld [vmem:[%s1 + $0xf8] sm:$0xff]
    %v113 = vld [vmem:[%s1 + $0x100] sm:$0xff]
    %v114 = vld [vmem:[%s1 + $0x108] sm:$0xff]
    %v115 = vld [vmem:[%s1 + $0x110] sm:$0xff]
    %v116 = vld [vmem:[%s1 + $0x118] sm:$0xff]
    %v117 = vld [vmem:[%s1 + $0x120] sm:$0xff]
    %v118 = vld [vmem:[%s1 + $0x128] sm:$0xff]
    %v119 = vld [vmem:[%s1 + $0x130] sm:$0xff]
    %v120 = vld [vmem:[%s1 + $0x138] sm:$0xff]
    %v121 = vld [vmem:[%s1 + $0x140] sm:$0xff]
    %v122 = vld [vmem:[%s1 + $0x148] sm:$0xff]
    %v123 = vld [vmem:[%s1 + $0x150] sm:$0xff]
    %v124 = vld [vmem:[%s1 + $0x158] sm:$0xff]
    %v125 = vld [vmem:[%s1 + $0x160] sm:$0xff]
    %v126 = vld [vmem:[%s1 + $0x168] sm:$0xff]
    %v127 = vld [vmem:[%s1 + $0x170] sm:$0xff]
    %v128 = vld [vmem:[%s1 + $0x178] sm:$0xff]
    %v129 = vld [vmem:[%s1 + $0x180] sm:$0xff]
    %v130 = vld [vmem:[%s1 + $0x188] sm:$0xff]
    %v131 = vld [vmem:[%s1 + $0x190] sm:$0xff]
    %v132 = vld [vmem:[%s1 + $0x198] sm:$0xff]
    %v133 = vld [vmem:[%s1 + $0x1a0] sm:$0xff]
    %v134 = vld [vmem:[%s1 + $0x1a8] sm:$0xff]
    %v135 = vld [vmem:[%s1 + $0x1b0] sm:$0xff]
    %v136 = vld [vmem:[%s1 + $0x1b8] sm:$0xff]
    %v137 = vld [vmem:[%s1 + $0x1c0] sm:$0xff]
    %v138 = vld [vmem:[%s1 + $0x1c8] sm:$0xff]
    %v139 = vld [vmem:[%s1 + $0x1d0] sm:$0xff]
    %v140 = vld [vmem:[%s1 + $0x1d8] sm:$0xff]
    %v141 = vld [vmem:[%s1 + $0x1e0] sm:$0xff]
    %v142 = vld [vmem:[%s1 + $0x1e8] sm:$0xff]
    %v143 = vld [vmem:[%s1 + $0x1f0] sm:$0xff]
    %v144 = vld [vmem:[%s1 + $0x1f8] sm:$0xff]
    %v145 = vld [vmem:[%s1 + $0x200] sm:$0xff]
    %v146 = vld [vmem:[%s1 + $0x208] sm:$0xff]
    %v147 = vld [vmem:[%s1 + $0x210] sm:$0xff]
    %v148 = vld [vmem:[%s1 + $0x218] sm:$0xff]
    %v149 = vld [vmem:[%s1 + $0x220] sm:$0xff]
    %v150 = vld [vmem:[%s1 + $0x228] sm:$0xff]
    %v151 = vld [vmem:[%s1 + $0x230] sm:$0xff]
    %v152 = vld [vmem:[%s1 + $0x238] sm:$0xff]
    %v153 = vld [vmem:[%s1 + $0x240] sm:$0xff]
    %v154 = vld [vmem:[%s1 + $0x248] sm:$0xff]
    %v155 = vld [vmem:[%s1 + $0x250] sm:$0xff]
    %v156 = vld [vmem:[%s1 + $0x258] sm:$0xff]
    %v157 = vld [vmem:[%s1 + $0x260] sm:$0xff]
    %v158 = vld [vmem:[%s1 + $0x268] sm:$0xff]
    %v159 = vld [vmem:[%s1 + $0x270] sm:$0xff]
    %v160 = vld [vmem:[%s1 + $0x278] sm:$0xff]
    %v161 = vld [vmem:[%s1 + $0x280] sm:$0xff]
    %v162 = vld [vmem:[%s1 + $0x288] sm:$0xff]
    %v163 = vld [vmem:[%s1 + $0x290] sm:$0xff]
    %v164 = vld [vmem:[%s1 + $0x298] sm:$0xff]
    %v165 = vld [vmem:[%s1 + $0x2a0] sm:$0xff]
    %v166 = vld [vmem:[%s1 + $0x2a8] sm:$0xff]
    %v167 = vld [vmem:[%s1 + $0x2b0] sm:$0xff]
    %v168 = vld [vmem:[%s1 + $0x2b8] sm:$0xff]
    %v169 = vld [vmem:[%s1 + $0x2c0] sm:$0xff]
    %v170 = vld [vmem:[%s1 + $0x2c8] sm:$0xff]
    %v171 = vld [vmem:[%s1 + $0x2d0] sm:$0xff]
    %v172 = vld [vmem:[%s1 + $0x2d8] sm:$0xff]
    %v173 = vld [vmem:[%s1 + $0x2e0] sm:$0xff]
    %v174 = vld [vmem:[%s1 + $0x2e8] sm:$0xff]
    %v175 = vld [vmem:[%s1 + $0x2f0] sm:$0xff]
    %v176 = vld [vmem:[%s1 + $0x2f8] sm:$0xff]
    %v177 = vlaneseq
    %v178 = vshrl.u32 %v177, 7
    %v179 = vadd.s32 %v178, 8
    %v180 = vand.u32 %v178, 7
    %v181 = vand.u32 %v179, 7
    %vm182 = vcmp.ge.s32.totalorder %v180, 1
    %vm183 = vcmp.ge.s32.totalorder %v181, 1
    %vm184 = vcmp.lt.s32.totalorder %v180, 5
    %vm185 = vcmp.lt.s32.totalorder %v181, 5
    %vm186 = vmand %vm182, %vm184
    %vm187 = vmand %vm183, %vm185
    %v188 = vsel %vm186, 1.0, 0.0
    %v189 = vsel %vm187, 1.0, 0.0
    %vm190 = vcmp.eq.s32.totalorder %v180, 0
    %vm191 = vcmp.eq.s32.totalorder %v181, 0
    %v192 = vsel %vm190, 1.0, 0.0
    %v193 = vsel %vm191, 1.0, 0.0
    %v194 = vld [vmem:[%s4] sm:$0xff]
    %v195 = vld [vmem:[%s2] sm:$0x1]
    %v197 = vlaneseq
    %v198 = vshrl.u32 %v197, 7
    %v199 = vsub.s32 0, %v198
    %v200 = vrot.slane %v195, %v199
    %v202 = vmul.f32 %v188, %v200
    %v203 = vmul.f32 %v189, %v200
    %204 = vmatprep.subr.mxu0 0.0
    %205 = vmatpush1.msra.mxu0 %v96
    %206 = vmatprep.subr.mxu0 0.0
    %207 = vmatpush1.msra.mxu0 %v95
    %208 = vmatprep.subr.mxu0 0.0
    %209 = vmatpush1.msra.mxu0 %v94
    %210 = vmatprep.subr.mxu0 0.0
    %211 = vmatpush1.msra.mxu0 %v93
    %212 = vmatprep.subr.mxu0 0.0
    %213 = vmatpush1.msra.mxu0 %v92
    %214 = vmatprep.subr.mxu0 0.0
    %215 = vmatpush1.msra.mxu0 %v91
    %216 = vmatprep.subr.mxu0 0.0
    %217 = vmatpush1.msra.mxu0 %v90
    %218 = vmatprep.subr.mxu0 0.0
    %219 = vmatpush1.msra.mxu0 %v89
    %220 = vmatprep.subr.mxu0 0.0
    %221 = vmatpush1.msra.mxu0 %v88
    %222 = vmatprep.subr.mxu0 0.0
    %223 = vmatpush1.msra.mxu0 %v87
    %224 = vmatprep.subr.mxu0 0.0
    %225 = vmatpush1.msra.mxu0 %v86
    %226 = vmatprep.subr.mxu0 0.0
    %227 = vmatpush1.msra.mxu0 %v85
    %228 = vmatprep.subr.mxu0 0.0
    %229 = vmatpush1.msra.mxu0 %v84
    %230 = vmatprep.subr.mxu0 0.0
    %231 = vmatpush1.msra.mxu0 %v83
    %232 = vmatprep.subr.mxu0 0.0
    %233 = vmatpush1.msra.mxu0 %v82
    %234 = vmatprep.subr.mxu0 0.0
    %235 = vmatpush1.msra.mxu0 %v81
    %236 = vmatprep.subr.mxu0 0.0
    %237 = vmatpush2.msra.mxu0 %v112
    %238 = vmatprep.subr.mxu0 0.0
    %239 = vmatpush2.msra.mxu0 %v111
    %240 = vmatprep.subr.mxu0 0.0
    %241 = vmatpush2.msra.mxu0 %v110
    %242 = vmatprep.subr.mxu0 0.0
    %243 = vmatpush2.msra.mxu0 %v109
    %244 = vmatprep.subr.mxu0 0.0
    %245 = vmatpush2.msra.mxu0 %v108
    %246 = vmatprep.subr.mxu0 0.0
    %247 = vmatpush2.msra.mxu0 %v107
    %248 = vmatprep.subr.mxu0 0.0
    %249 = vmatpush2.msra.mxu0 %v106
    %250 = vmatprep.subr.mxu0 0.0
    %251 = vmatpush2.msra.mxu0 %v105
    %252 = vmatprep.subr.mxu0 0.0
    %253 = vmatpush2.msra.mxu0 %v104
    %254 = vmatprep.subr.mxu0 0.0
    %255 = vmatpush2.msra.mxu0 %v103
    %256 = vmatprep.subr.mxu0 0.0
    %257 = vmatpush2.msra.mxu0 %v102
    %258 = vmatprep.subr.mxu0 0.0
    %259 = vmatpush2.msra.mxu0 %v101
    %260 = vmatprep.subr.mxu0 0.0
    %261 = vmatpush2.msra.mxu0 %v100
    %262 = vmatprep.subr.mxu0 0.0
    %263 = vmatpush2.msra.mxu0 %v99
    %264 = vmatprep.subr.mxu0 0.0
    %265 = vmatpush2.msra.mxu0 %v98
    %266 = vmatprep.subr.mxu0 0.0
    %267 = vmatpush2.msra.mxu0 %v97
    %268 = vmatprep.mubr.f32.mxu0 %v70
    %269 = vmatmul.mubr.f32.gmra.mxu0 %v69
    %v270 = vpop.f32.mrf.mxu0
    %v271 = vadd.f32 %v202, %v270
    %v272 = vpop.f32.mrf.mxu0
    %273 = vmatprep.mubr.f32.mxu0 %v76
    %274 = vmatmul.mubr.f32.gmra.mxu0 %v75
    %v275 = vpop.f32.mrf.mxu0
    %v276 = vadd.f32 %v203, %v275
    %v277 = vpop.f32.mrf.mxu0
    %278 = vdwg.mxu0
    %279 = vmatprep.subr.mxu0 0.0
    %280 = vmatpush1.msra.mxu0 %v128
    %281 = vmatprep.subr.mxu0 0.0
    %282 = vmatpush1.msra.mxu0 %v127
    %283 = vmatprep.subr.mxu0 0.0
    %284 = vmatpush1.msra.mxu0 %v126
    %285 = vmatprep.subr.mxu0 0.0
    %286 = vmatpush1.msra.mxu0 %v125
    %287 = vmatprep.subr.mxu0 0.0
    %288 = vmatpush1.msra.mxu0 %v124
    %289 = vmatprep.subr.mxu0 0.0
    %290 = vmatpush1.msra.mxu0 %v123
    %291 = vmatprep.subr.mxu0 0.0
    %292 = vmatpush1.msra.mxu0 %v122
    %293 = vmatprep.subr.mxu0 0.0
    %294 = vmatpush1.msra.mxu0 %v121
    %295 = vmatprep.subr.mxu0 0.0
    %296 = vmatpush1.msra.mxu0 %v120
    %297 = vmatprep.subr.mxu0 0.0
    %298 = vmatpush1.msra.mxu0 %v119
    %299 = vmatprep.subr.mxu0 0.0
    %300 = vmatpush1.msra.mxu0 %v118
    %301 = vmatprep.subr.mxu0 0.0
    %302 = vmatpush1.msra.mxu0 %v117
    %303 = vmatprep.subr.mxu0 0.0
    %304 = vmatpush1.msra.mxu0 %v116
    %305 = vmatprep.subr.mxu0 0.0
    %306 = vmatpush1.msra.mxu0 %v115
    %307 = vmatprep.subr.mxu0 0.0
    %308 = vmatpush1.msra.mxu0 %v114
    %309 = vmatprep.subr.mxu0 0.0
    %310 = vmatpush1.msra.mxu0 %v113
    %311 = vmatprep.subr.mxu0 0.0
    %312 = vmatpush2.msra.mxu0 %v144
    %313 = vmatprep.subr.mxu0 0.0
    %314 = vmatpush2.msra.mxu0 %v143
    %315 = vmatprep.subr.mxu0 0.0
    %316 = vmatpush2.msra.mxu0 %v142
    %317 = vmatprep.subr.mxu0 0.0
    %318 = vmatpush2.msra.mxu0 %v141
    %319 = vmatprep.subr.mxu0 0.0
    %320 = vmatpush2.msra.mxu0 %v140
    %321 = vmatprep.subr.mxu0 0.0
    %322 = vmatpush2.msra.mxu0 %v139
    %323 = vmatprep.subr.mxu0 0.0
    %324 = vmatpush2.msra.mxu0 %v138
    %325 = vmatprep.subr.mxu0 0.0
    %326 = vmatpush2.msra.mxu0 %v137
    %327 = vmatprep.subr.mxu0 0.0
    %328 = vmatpush2.msra.mxu0 %v136
    %329 = vmatprep.subr.mxu0 0.0
    %330 = vmatpush2.msra.mxu0 %v135
    %331 = vmatprep.subr.mxu0 0.0
    %332 = vmatpush2.msra.mxu0 %v134
    %333 = vmatprep.subr.mxu0 0.0
    %334 = vmatpush2.msra.mxu0 %v133
    %335 = vmatprep.subr.mxu0 0.0
    %336 = vmatpush2.msra.mxu0 %v132
    %337 = vmatprep.subr.mxu0 0.0
    %338 = vmatpush2.msra.mxu0 %v131
    %339 = vmatprep.subr.mxu0 0.0
    %340 = vmatpush2.msra.mxu0 %v130
    %341 = vmatprep.subr.mxu0 0.0
    %342 = vmatpush2.msra.mxu0 %v129
    %343 = vmatprep.mubr.f32.mxu0 %v72
    %344 = vmatmul.mubr.f32.gmra.mxu0 %v71
    %v345 = vpop.f32.mrf.mxu0
    %v346 = vadd.f32 %v271, %v345
    %v347 = vpop.f32.mrf.mxu0
    %348 = vmatprep.mubr.f32.mxu0 %v78
    %349 = vmatmul.mubr.f32.gmra.mxu0 %v77
    %v350 = vpop.f32.mrf.mxu0
    %v351 = vadd.f32 %v276, %v350
    %v352 = vpop.f32.mrf.mxu0
    %353 = vdwg.mxu0
    %354 = vmatprep.subr.mxu0 0.0
    %355 = vmatpush1.msra.mxu0 %v160
    %356 = vmatprep.subr.mxu0 0.0
    %357 = vmatpush1.msra.mxu0 %v159
    %358 = vmatprep.subr.mxu0 0.0
    %359 = vmatpush1.msra.mxu0 %v158
    %360 = vmatprep.subr.mxu0 0.0
    %361 = vmatpush1.msra.mxu0 %v157
    %362 = vmatprep.subr.mxu0 0.0
    %363 = vmatpush1.msra.mxu0 %v156
    %364 = vmatprep.subr.mxu0 0.0
    %365 = vmatpush1.msra.mxu0 %v155
    %366 = vmatprep.subr.mxu0 0.0
    %367 = vmatpush1.msra.mxu0 %v154
    %368 = vmatprep.subr.mxu0 0.0
    %369 = vmatpush1.msra.mxu0 %v153
    %370 = vmatprep.subr.mxu0 0.0
    %371 = vmatpush1.msra.mxu0 %v152
    %372 = vmatprep.subr.mxu0 0.0
    %373 = vmatpush1.msra.mxu0 %v151
    %374 = vmatprep.subr.mxu0 0.0
    %375 = vmatpush1.msra.mxu0 %v150
    %376 = vmatprep.subr.mxu0 0.0
    %377 = vmatpush1.msra.mxu0 %v149
    %378 = vmatprep.subr.mxu0 0.0
    %379 = vmatpush1.msra.mxu0 %v148
    %380 = vmatprep.subr.mxu0 0.0
    %381 = vmatpush1.msra.mxu0 %v147
    %382 = vmatprep.subr.mxu0 0.0
    %383 = vmatpush1.msra.mxu0 %v146
    %384 = vmatprep.subr.mxu0 0.0
    %385 = vmatpush1.msra.mxu0 %v145
    %386 = vmatprep.subr.mxu0 0.0
    %387 = vmatpush2.msra.mxu0 %v176
    %388 = vmatprep.subr.mxu0 0.0
    %389 = vmatpush2.msra.mxu0 %v175
    %390 = vmatprep.subr.mxu0 0.0
    %391 = vmatpush2.msra.mxu0 %v174
    %392 = vmatprep.subr.mxu0 0.0
    %393 = vmatpush2.msra.mxu0 %v173
    %394 = vmatprep.subr.mxu0 0.0
    %395 = vmatpush2.msra.mxu0 %v172
    %396 = vmatprep.subr.mxu0 0.0
    %397 = vmatpush2.msra.mxu0 %v171
    %398 = vmatprep.subr.mxu0 0.0
    %399 = vmatpush2.msra.mxu0 %v170
    %400 = vmatprep.subr.mxu0 0.0
    %401 = vmatpush2.msra.mxu0 %v169
    %402 = vmatprep.subr.mxu0 0.0
    %403 = vmatpush2.msra.mxu0 %v168
    %404 = vmatprep.subr.mxu0 0.0
    %405 = vmatpush2.msra.mxu0 %v167
    %406 = vmatprep.subr.mxu0 0.0
    %407 = vmatpush2.msra.mxu0 %v166
    %408 = vmatprep.subr.mxu0 0.0
    %409 = vmatpush2.msra.mxu0 %v165
    %410 = vmatprep.subr.mxu0 0.0
    %411 = vmatpush2.msra.mxu0 %v164
    %412 = vmatprep.subr.mxu0 0.0
    %413 = vmatpush2.msra.mxu0 %v163
    %414 = vmatprep.subr.mxu0 0.0
    %415 = vmatpush2.msra.mxu0 %v162
    %416 = vmatprep.subr.mxu0 0.0
    %417 = vmatpush2.msra.mxu0 %v161
    %418 = vmatprep.mubr.f32.mxu0 %v74
    %419 = vmatmul.mubr.f32.gmra.mxu0 %v73
    %v420 = vpop.f32.mrf.mxu0
    %v421 = vadd.f32 %v346, %v420
    %v422 = vpop.f32.mrf.mxu0
    %423 = vmatprep.mubr.f32.mxu0 %v80
    %424 = vmatmul.mubr.f32.gmra.mxu0 %v79
    %v425 = vpop.f32.mrf.mxu0
    %v426 = vadd.f32 %v351, %v425
    %v427 = vpop.f32.mrf.mxu0
    %428 = vdwg.mxu0
    %v429 = vld [vmem:[%s3] sm:$0x1]
    %v431 = vlaneseq
    %v432 = vshrl.u32 %v431, 7
    %v433 = vsub.s32 0, %v432
    %v434 = vrot.slane %v429, %v433
    %v436 = vmul.f32 %v192, %v434
    %v437 = vmul.f32 %v193, %v434
    %v438 = vadd.f32 %v421, %v436
    %v439 = vadd.f32 %v426, %v437
    %v440 = vadd.f32 %v438, %v194
    %v441 = vadd.f32 %v439, %v194
    %v442 = vlaneseq
    %v443 = vand.u32 %v442, 127
    %vm444 = vcmp.ge.s32.totalorder %v443, 5
    %v445 = vsel %vm444, -1e+30, 0.0
    %v446 = vld [vmem:[%s5] sm:$0x1]
    %v447 = vld [vmem:[%s6] sm:$0x1]
    %vm448 = vcmask 261120
    %v449 = vsel %vm448, %v440, 0.0
    %450 = vadd.xlane.f32.xlu0 %v449
    %v451 = vpop.xlane.xlu0 %450
    %v452 = vsel %vm448, %v441, 0.0
    %453 = vadd.xlane.f32.xlu0 %v452
    %v454 = vpop.xlane.xlu0 %453
    %v455 = vrcp.pop 32.0
    %v456 = vmul.f32 %v451, %v455
    %v457 = vmul.f32 %v454, %v455
    %v458 = vsub.f32 %v440, %v456
    %v459 = vsub.f32 %v441, %v457
    %v460 = vmul.f32 %v458, %v458
    %v461 = vmul.f32 %v459, %v459
    %v462 = vsel %vm448, %v460, 0.0
    %463 = vadd.xlane.f32.xlu0 %v462
    %v464 = vpop.xlane.xlu0 %463
    %v465 = vsel %vm448, %v461, 0.0
    %466 = vadd.xlane.f32.xlu0 %v465
    %v467 = vpop.xlane.xlu0 %466
    %v468 = vmul.f32 %v464, %v455
    %v469 = vmul.f32 %v467, %v455
    %v470 = vadd.f32 %v468, 1e-06
    %v471 = vadd.f32 %v469, 1e-06
    %v472 = vrsqrt.pop %v470
    %v473 = vrsqrt.pop %v471
    %v474 = vmul.f32 %v458, %v472
    %v475 = vmul.f32 %v459, %v473
    %v477 = vlaneseq
    %v478 = vshrl.u32 %v477, 7
    %v479 = vsub.s32 0, %v478
    %v480 = vrot.slane %v446, %v479
    %v482 = vmul.f32 %v474, %v480
    %v483 = vmul.f32 %v475, %v480
    %v485 = vlaneseq
    %v486 = vshrl.u32 %v485, 7
    %v487 = vsub.s32 0, %v486
    %v488 = vrot.slane %v447, %v487
    %v490 = vadd.f32 %v482, %v488
    %v491 = vadd.f32 %v483, %v488
    %v492 = vld [vmem:[%s7] sm:$0xff]
    %v493 = vld [vmem:[%s7 + $0x8] sm:$0xff]
    %v494 = vld [vmem:[%s7 + $0x10] sm:$0xff]
    %v495 = vld [vmem:[%s7 + $0x18] sm:$0xff]
    %v496 = vld [vmem:[%s8] sm:$0x1]
    %v498 = vlaneseq
    %v499 = vshrl.u32 %v498, 7
    %v500 = vsub.s32 0, %v499
    %v501 = vrot.slane %v496, %v500
    %v504 = vsel %vm448, %v490, 0
    %v507 = vsel %vm448, %v491, 0
    %509 = vmatprep.subr.mxu0 0.0
    %510 = vmatpush1.msra.mxu0 0.0
    %511 = vmatprep.subr.mxu0 0.0
    %512 = vmatpush1.msra.mxu0 0.0
    %513 = vmatprep.subr.mxu0 0.0
    %514 = vmatpush1.msra.mxu0 0.0
    %515 = vmatprep.subr.mxu0 0.0
    %516 = vmatpush1.msra.mxu0 0.0
    %517 = vmatprep.subr.mxu0 0.0
    %518 = vmatpush1.msra.mxu0 0.0
    %519 = vmatprep.subr.mxu0 0.0
    %520 = vmatpush1.msra.mxu0 0.0
    %521 = vmatprep.subr.mxu0 0.0
    %522 = vmatpush1.msra.mxu0 0.0
    %523 = vmatprep.subr.mxu0 0.0
    %524 = vmatpush1.msra.mxu0 0.0
    %525 = vmatprep.subr.mxu0 0.0
    %526 = vmatpush1.msra.mxu0 0.0
    %527 = vmatprep.subr.mxu0 0.0
    %528 = vmatpush1.msra.mxu0 0.0
    %529 = vmatprep.subr.mxu0 0.0
    %530 = vmatpush1.msra.mxu0 0.0
    %531 = vmatprep.subr.mxu0 0.0
    %532 = vmatpush1.msra.mxu0 0.0
    %533 = vmatprep.subr.mxu0 0.0
    %534 = vmatpush1.msra.mxu0 %v495
    %535 = vmatprep.subr.mxu0 0.0
    %536 = vmatpush1.msra.mxu0 %v494
    %537 = vmatprep.subr.mxu0 0.0
    %538 = vmatpush1.msra.mxu0 %v493
    %539 = vmatprep.subr.mxu0 0.0
    %540 = vmatpush1.msra.mxu0 %v492
    %541 = vmatprep.subr.mxu0 0.0
    %542 = vmatpush2.msra.mxu0 0.0
    %543 = vmatprep.subr.mxu0 0.0
    %544 = vmatpush2.msra.mxu0 0.0
    %545 = vmatprep.subr.mxu0 0.0
    %546 = vmatpush2.msra.mxu0 0.0
    %547 = vmatprep.subr.mxu0 0.0
    %548 = vmatpush2.msra.mxu0 0.0
    %549 = vmatprep.subr.mxu0 0.0
    %550 = vmatpush2.msra.mxu0 0.0
    %551 = vmatprep.subr.mxu0 0.0
    %552 = vmatpush2.msra.mxu0 0.0
    %553 = vmatprep.subr.mxu0 0.0
    %554 = vmatpush2.msra.mxu0 0.0
    %555 = vmatprep.subr.mxu0 0.0
    %556 = vmatpush2.msra.mxu0 0.0
    %557 = vmatprep.subr.mxu0 0.0
    %558 = vmatpush2.msra.mxu0 0.0
    %559 = vmatprep.subr.mxu0 0.0
    %560 = vmatpush2.msra.mxu0 0.0
    %561 = vmatprep.subr.mxu0 0.0
    %562 = vmatpush2.msra.mxu0 0.0
    %563 = vmatprep.subr.mxu0 0.0
    %564 = vmatpush2.msra.mxu0 0.0
    %565 = vmatprep.subr.mxu0 0.0
    %566 = vmatpush2.msra.mxu0 0.0
    %567 = vmatprep.subr.mxu0 0.0
    %568 = vmatpush2.msra.mxu0 0.0
    %569 = vmatprep.subr.mxu0 0.0
    %570 = vmatpush2.msra.mxu0 0.0
    %571 = vmatprep.subr.mxu0 0.0
    %572 = vmatpush2.msra.mxu0 0.0
    %573 = vmatprep.mubr.f32.mxu0 0.0
    %574 = vmatmul.mubr.f32.gmra.mxu0 %v504
    %v575 = vpop.f32.mrf.mxu0
    %v576 = vadd.f32 %v501, %v575
    %v577 = vpop.f32.mrf.mxu0
    %578 = vmatprep.mubr.f32.mxu0 0.0
    %579 = vmatmul.mubr.f32.gmra.mxu0 %v507
    %v580 = vpop.f32.mrf.mxu0
    %v581 = vadd.f32 %v501, %v580
    %v582 = vpop.f32.mrf.mxu0
    %583 = vdwg.mxu0
    %v584 = vmul.f32 %v576, 0.35355338
    %v585 = vmul.f32 %v581, 0.35355338
    %588 = vrot.lane.b32.xlu0 %v584, 120
    %v589 = vpop.permute.xlu0 %588
    %590 = vrot.lane.b32.xlu0 %v585, 120
    %v591 = vpop.permute.xlu0 %590
    %592 = vrot.lane.b32.xlu0 %v584, 112
    %v593 = vpop.permute.xlu0 %592
    %594 = vrot.lane.b32.xlu0 %v585, 112
    %v595 = vpop.permute.xlu0 %594
    %596 = vrot.lane.b32.xlu0 %v584, 104
    %v597 = vpop.permute.xlu0 %596
    %598 = vrot.lane.b32.xlu0 %v585, 104
    %v599 = vpop.permute.xlu0 %598
    %602 = vrot.lane.b32.xlu0 %v576, 120
    %v603 = vpop.permute.xlu0 %602
    %604 = vrot.lane.b32.xlu0 %v581, 120
    %v605 = vpop.permute.xlu0 %604
    %606 = vrot.lane.b32.xlu0 %v576, 112
    %v607 = vpop.permute.xlu0 %606
    %608 = vrot.lane.b32.xlu0 %v581, 112
    %v609 = vpop.permute.xlu0 %608
    %610 = vrot.lane.b32.xlu0 %v576, 104
    %v611 = vpop.permute.xlu0 %610
    %612 = vrot.lane.b32.xlu0 %v581, 104
    %v613 = vpop.permute.xlu0 %612
    %614 = vrot.lane.b32.xlu0 %v576, 96
    %v615 = vpop.permute.xlu0 %614
    %vm616 = vcmask 64512
    %v617 = vsel %vm616, %v584, 0
    %v619 = vsel %vm616, %v615, 0
    %621 = vmatprep.subr.mxu0 0.0
    %622 = vmatpush1.xpose.msra.mxu0 0.0
    %623 = vmatprep.subr.mxu0 0.0
    %624 = vmatpush1.xpose.msra.mxu0 0.0
    %625 = vmatprep.subr.mxu0 0.0
    %626 = vmatpush1.xpose.msra.mxu0 0.0
    %627 = vmatprep.subr.mxu0 0.0
    %628 = vmatpush1.xpose.msra.mxu0 0.0
    %629 = vmatprep.subr.mxu0 0.0
    %630 = vmatpush1.xpose.msra.mxu0 0.0
    %631 = vmatprep.subr.mxu0 0.0
    %632 = vmatpush1.xpose.msra.mxu0 0.0
    %633 = vmatprep.subr.mxu0 0.0
    %634 = vmatpush1.xpose.msra.mxu0 0.0
    %635 = vmatprep.subr.mxu0 0.0
    %636 = vmatpush1.xpose.msra.mxu0 0.0
    %637 = vmatprep.subr.mxu0 0.0
    %638 = vmatpush1.xpose.msra.mxu0 0.0
    %639 = vmatprep.subr.mxu0 0.0
    %640 = vmatpush1.xpose.msra.mxu0 0.0
    %641 = vmatprep.subr.mxu0 0.0
    %642 = vmatpush1.xpose.msra.mxu0 0.0
    %643 = vmatprep.subr.mxu0 0.0
    %644 = vmatpush1.xpose.msra.mxu0 0.0
    %645 = vmatprep.subr.mxu0 0.0
    %646 = vmatpush1.xpose.msra.mxu0 0.0
    %647 = vmatprep.subr.mxu0 0.0
    %648 = vmatpush1.xpose.msra.mxu0 0.0
    %649 = vmatprep.subr.mxu0 0.0
    %650 = vmatpush1.xpose.msra.mxu0 0.0
    %651 = vmatprep.subr.mxu0 0.0
    %652 = vmatpush1.xpose.msra.mxu0 %v619
    %653 = vmatprep.subr.mxu0 0.0
    %654 = vmatpush2.xpose.msra.mxu0 0.0
    %655 = vmatprep.subr.mxu0 0.0
    %656 = vmatpush2.xpose.msra.mxu0 0.0
    %657 = vmatprep.subr.mxu0 0.0
    %658 = vmatpush2.xpose.msra.mxu0 0.0
    %659 = vmatprep.subr.mxu0 0.0
    %660 = vmatpush2.xpose.msra.mxu0 0.0
    %661 = vmatprep.subr.mxu0 0.0
    %662 = vmatpush2.xpose.msra.mxu0 0.0
    %663 = vmatprep.subr.mxu0 0.0
    %664 = vmatpush2.xpose.msra.mxu0 0.0
    %665 = vmatprep.subr.mxu0 0.0
    %666 = vmatpush2.xpose.msra.mxu0 0.0
    %667 = vmatprep.subr.mxu0 0.0
    %668 = vmatpush2.xpose.msra.mxu0 0.0
    %669 = vmatprep.subr.mxu0 0.0
    %670 = vmatpush2.xpose.msra.mxu0 0.0
    %671 = vmatprep.subr.mxu0 0.0
    %672 = vmatpush2.xpose.msra.mxu0 0.0
    %673 = vmatprep.subr.mxu0 0.0
    %674 = vmatpush2.xpose.msra.mxu0 0.0
    %675 = vmatprep.subr.mxu0 0.0
    %676 = vmatpush2.xpose.msra.mxu0 0.0
    %677 = vmatprep.subr.mxu0 0.0
    %678 = vmatpush2.xpose.msra.mxu0 0.0
    %679 = vmatprep.subr.mxu0 0.0
    %680 = vmatpush2.xpose.msra.mxu0 0.0
    %681 = vmatprep.subr.mxu0 0.0
    %682 = vmatpush2.xpose.msra.mxu0 0.0
    %683 = vmatprep.subr.mxu0 0.0
    %684 = vmatpush2.xpose.msra.mxu0 0.0
    %685 = vmatprep.mubr.f32.mxu0 0.0
    %686 = vmatmul.mubr.f32.gmra.mxu0 %v617
    %v687 = vpop.f32.mrf.mxu0
    %v688 = vadd.f32 %v445, %v687
    %v689 = vpop.f32.mrf.mxu0
    %690 = vdwg.mxu0
    %691 = vrot.lane.b32.xlu0 %v581, 96
    %v692 = vpop.permute.xlu0 %691
    %v693 = vsel %vm616, %v585, 0
    %v695 = vsel %vm616, %v692, 0
    %697 = vmatprep.subr.mxu0 0.0
    %698 = vmatpush1.xpose.msra.mxu0 0.0
    %699 = vmatprep.subr.mxu0 0.0
    %700 = vmatpush1.xpose.msra.mxu0 0.0
    %701 = vmatprep.subr.mxu0 0.0
    %702 = vmatpush1.xpose.msra.mxu0 0.0
    %703 = vmatprep.subr.mxu0 0.0
    %704 = vmatpush1.xpose.msra.mxu0 0.0
    %705 = vmatprep.subr.mxu0 0.0
    %706 = vmatpush1.xpose.msra.mxu0 0.0
    %707 = vmatprep.subr.mxu0 0.0
    %708 = vmatpush1.xpose.msra.mxu0 0.0
    %709 = vmatprep.subr.mxu0 0.0
    %710 = vmatpush1.xpose.msra.mxu0 0.0
    %711 = vmatprep.subr.mxu0 0.0
    %712 = vmatpush1.xpose.msra.mxu0 0.0
    %713 = vmatprep.subr.mxu0 0.0
    %714 = vmatpush1.xpose.msra.mxu0 0.0
    %715 = vmatprep.subr.mxu0 0.0
    %716 = vmatpush1.xpose.msra.mxu0 0.0
    %717 = vmatprep.subr.mxu0 0.0
    %718 = vmatpush1.xpose.msra.mxu0 0.0
    %719 = vmatprep.subr.mxu0 0.0
    %720 = vmatpush1.xpose.msra.mxu0 0.0
    %721 = vmatprep.subr.mxu0 0.0
    %722 = vmatpush1.xpose.msra.mxu0 0.0
    %723 = vmatprep.subr.mxu0 0.0
    %724 = vmatpush1.xpose.msra.mxu0 0.0
    %725 = vmatprep.subr.mxu0 0.0
    %726 = vmatpush1.xpose.msra.mxu0 0.0
    %727 = vmatprep.subr.mxu0 0.0
    %728 = vmatpush1.xpose.msra.mxu0 %v695
    %729 = vmatprep.subr.mxu0 0.0
    %730 = vmatpush2.xpose.msra.mxu0 0.0
    %731 = vmatprep.subr.mxu0 0.0
    %732 = vmatpush2.xpose.msra.mxu0 0.0
    %733 = vmatprep.subr.mxu0 0.0
    %734 = vmatpush2.xpose.msra.mxu0 0.0
    %735 = vmatprep.subr.mxu0 0.0
    %736 = vmatpush2.xpose.msra.mxu0 0.0
    %737 = vmatprep.subr.mxu0 0.0
    %738 = vmatpush2.xpose.msra.mxu0 0.0
    %739 = vmatprep.subr.mxu0 0.0
    %740 = vmatpush2.xpose.msra.mxu0 0.0
    %741 = vmatprep.subr.mxu0 0.0
    %742 = vmatpush2.xpose.msra.mxu0 0.0
    %743 = vmatprep.subr.mxu0 0.0
    %744 = vmatpush2.xpose.msra.mxu0 0.0
    %745 = vmatprep.subr.mxu0 0.0
    %746 = vmatpush2.xpose.msra.mxu0 0.0
    %747 = vmatprep.subr.mxu0 0.0
    %748 = vmatpush2.xpose.msra.mxu0 0.0
    %749 = vmatprep.subr.mxu0 0.0
    %750 = vmatpush2.xpose.msra.mxu0 0.0
    %751 = vmatprep.subr.mxu0 0.0
    %752 = vmatpush2.xpose.msra.mxu0 0.0
    %753 = vmatprep.subr.mxu0 0.0
    %754 = vmatpush2.xpose.msra.mxu0 0.0
    %755 = vmatprep.subr.mxu0 0.0
    %756 = vmatpush2.xpose.msra.mxu0 0.0
    %757 = vmatprep.subr.mxu0 0.0
    %758 = vmatpush2.xpose.msra.mxu0 0.0
    %759 = vmatprep.subr.mxu0 0.0
    %760 = vmatpush2.xpose.msra.mxu0 0.0
    %761 = vmatprep.mubr.f32.mxu0 0.0
    %762 = vmatmul.mubr.f32.gmra.mxu0 %v693
    %v763 = vpop.f32.mrf.mxu0
    %v764 = vadd.f32 %v445, %v763
    %v765 = vpop.f32.mrf.mxu0
    %766 = vdwg.mxu0
    %767 = vrot.lane.b32.xlu0 %v603, 96
    %v768 = vpop.permute.xlu0 %767
    %v769 = vsel %vm616, %v589, 0
    %v771 = vsel %vm616, %v768, 0
    %773 = vmatprep.subr.mxu0 0.0
    %774 = vmatpush1.xpose.msra.mxu0 0.0
    %775 = vmatprep.subr.mxu0 0.0
    %776 = vmatpush1.xpose.msra.mxu0 0.0
    %777 = vmatprep.subr.mxu0 0.0
    %778 = vmatpush1.xpose.msra.mxu0 0.0
    %779 = vmatprep.subr.mxu0 0.0
    %780 = vmatpush1.xpose.msra.mxu0 0.0
    %781 = vmatprep.subr.mxu0 0.0
    %782 = vmatpush1.xpose.msra.mxu0 0.0
    %783 = vmatprep.subr.mxu0 0.0
    %784 = vmatpush1.xpose.msra.mxu0 0.0
    %785 = vmatprep.subr.mxu0 0.0
    %786 = vmatpush1.xpose.msra.mxu0 0.0
    %787 = vmatprep.subr.mxu0 0.0
    %788 = vmatpush1.xpose.msra.mxu0 0.0
    %789 = vmatprep.subr.mxu0 0.0
    %790 = vmatpush1.xpose.msra.mxu0 0.0
    %791 = vmatprep.subr.mxu0 0.0
    %792 = vmatpush1.xpose.msra.mxu0 0.0
    %793 = vmatprep.subr.mxu0 0.0
    %794 = vmatpush1.xpose.msra.mxu0 0.0
    %795 = vmatprep.subr.mxu0 0.0
    %796 = vmatpush1.xpose.msra.mxu0 0.0
    %797 = vmatprep.subr.mxu0 0.0
    %798 = vmatpush1.xpose.msra.mxu0 0.0
    %799 = vmatprep.subr.mxu0 0.0
    %800 = vmatpush1.xpose.msra.mxu0 0.0
    %801 = vmatprep.subr.mxu0 0.0
    %802 = vmatpush1.xpose.msra.mxu0 0.0
    %803 = vmatprep.subr.mxu0 0.0
    %804 = vmatpush1.xpose.msra.mxu0 %v771
    %805 = vmatprep.subr.mxu0 0.0
    %806 = vmatpush2.xpose.msra.mxu0 0.0
    %807 = vmatprep.subr.mxu0 0.0
    %808 = vmatpush2.xpose.msra.mxu0 0.0
    %809 = vmatprep.subr.mxu0 0.0
    %810 = vmatpush2.xpose.msra.mxu0 0.0
    %811 = vmatprep.subr.mxu0 0.0
    %812 = vmatpush2.xpose.msra.mxu0 0.0
    %813 = vmatprep.subr.mxu0 0.0
    %814 = vmatpush2.xpose.msra.mxu0 0.0
    %815 = vmatprep.subr.mxu0 0.0
    %816 = vmatpush2.xpose.msra.mxu0 0.0
    %817 = vmatprep.subr.mxu0 0.0
    %818 = vmatpush2.xpose.msra.mxu0 0.0
    %819 = vmatprep.subr.mxu0 0.0
    %820 = vmatpush2.xpose.msra.mxu0 0.0
    %821 = vmatprep.subr.mxu0 0.0
    %822 = vmatpush2.xpose.msra.mxu0 0.0
    %823 = vmatprep.subr.mxu0 0.0
    %824 = vmatpush2.xpose.msra.mxu0 0.0
    %825 = vmatprep.subr.mxu0 0.0
    %826 = vmatpush2.xpose.msra.mxu0 0.0
    %827 = vmatprep.subr.mxu0 0.0
    %828 = vmatpush2.xpose.msra.mxu0 0.0
    %829 = vmatprep.subr.mxu0 0.0
    %830 = vmatpush2.xpose.msra.mxu0 0.0
    %831 = vmatprep.subr.mxu0 0.0
    %832 = vmatpush2.xpose.msra.mxu0 0.0
    %833 = vmatprep.subr.mxu0 0.0
    %834 = vmatpush2.xpose.msra.mxu0 0.0
    %835 = vmatprep.subr.mxu0 0.0
    %836 = vmatpush2.xpose.msra.mxu0 0.0
    %837 = vmatprep.mubr.f32.mxu0 0.0
    %838 = vmatmul.mubr.f32.gmra.mxu0 %v769
    %v839 = vpop.f32.mrf.mxu0
    %v840 = vadd.f32 %v445, %v839
    %v841 = vpop.f32.mrf.mxu0
    %842 = vdwg.mxu0
    %843 = vrot.lane.b32.xlu0 %v605, 96
    %v844 = vpop.permute.xlu0 %843
    %v845 = vsel %vm616, %v591, 0
    %v847 = vsel %vm616, %v844, 0
    %849 = vmatprep.subr.mxu0 0.0
    %850 = vmatpush1.xpose.msra.mxu0 0.0
    %851 = vmatprep.subr.mxu0 0.0
    %852 = vmatpush1.xpose.msra.mxu0 0.0
    %853 = vmatprep.subr.mxu0 0.0
    %854 = vmatpush1.xpose.msra.mxu0 0.0
    %855 = vmatprep.subr.mxu0 0.0
    %856 = vmatpush1.xpose.msra.mxu0 0.0
    %857 = vmatprep.subr.mxu0 0.0
    %858 = vmatpush1.xpose.msra.mxu0 0.0
    %859 = vmatprep.subr.mxu0 0.0
    %860 = vmatpush1.xpose.msra.mxu0 0.0
    %861 = vmatprep.subr.mxu0 0.0
    %862 = vmatpush1.xpose.msra.mxu0 0.0
    %863 = vmatprep.subr.mxu0 0.0
    %864 = vmatpush1.xpose.msra.mxu0 0.0
    %865 = vmatprep.subr.mxu0 0.0
    %866 = vmatpush1.xpose.msra.mxu0 0.0
    %867 = vmatprep.subr.mxu0 0.0
    %868 = vmatpush1.xpose.msra.mxu0 0.0
    %869 = vmatprep.subr.mxu0 0.0
    %870 = vmatpush1.xpose.msra.mxu0 0.0
    %871 = vmatprep.subr.mxu0 0.0
    %872 = vmatpush1.xpose.msra.mxu0 0.0
    %873 = vmatprep.subr.mxu0 0.0
    %874 = vmatpush1.xpose.msra.mxu0 0.0
    %875 = vmatprep.subr.mxu0 0.0
    %876 = vmatpush1.xpose.msra.mxu0 0.0
    %877 = vmatprep.subr.mxu0 0.0
    %878 = vmatpush1.xpose.msra.mxu0 0.0
    %879 = vmatprep.subr.mxu0 0.0
    %880 = vmatpush1.xpose.msra.mxu0 %v847
    %881 = vmatprep.subr.mxu0 0.0
    %882 = vmatpush2.xpose.msra.mxu0 0.0
    %883 = vmatprep.subr.mxu0 0.0
    %884 = vmatpush2.xpose.msra.mxu0 0.0
    %885 = vmatprep.subr.mxu0 0.0
    %886 = vmatpush2.xpose.msra.mxu0 0.0
    %887 = vmatprep.subr.mxu0 0.0
    %888 = vmatpush2.xpose.msra.mxu0 0.0
    %889 = vmatprep.subr.mxu0 0.0
    %890 = vmatpush2.xpose.msra.mxu0 0.0
    %891 = vmatprep.subr.mxu0 0.0
    %892 = vmatpush2.xpose.msra.mxu0 0.0
    %893 = vmatprep.subr.mxu0 0.0
    %894 = vmatpush2.xpose.msra.mxu0 0.0
    %895 = vmatprep.subr.mxu0 0.0
    %896 = vmatpush2.xpose.msra.mxu0 0.0
    %897 = vmatprep.subr.mxu0 0.0
    %898 = vmatpush2.xpose.msra.mxu0 0.0
    %899 = vmatprep.subr.mxu0 0.0
    %900 = vmatpush2.xpose.msra.mxu0 0.0
    %901 = vmatprep.subr.mxu0 0.0
    %902 = vmatpush2.xpose.msra.mxu0 0.0
    %903 = vmatprep.subr.mxu0 0.0
    %904 = vmatpush2.xpose.msra.mxu0 0.0
    %905 = vmatprep.subr.mxu0 0.0
    %906 = vmatpush2.xpose.msra.mxu0 0.0
    %907 = vmatprep.subr.mxu0 0.0
    %908 = vmatpush2.xpose.msra.mxu0 0.0
    %909 = vmatprep.subr.mxu0 0.0
    %910 = vmatpush2.xpose.msra.mxu0 0.0
    %911 = vmatprep.subr.mxu0 0.0
    %912 = vmatpush2.xpose.msra.mxu0 0.0
    %913 = vmatprep.mubr.f32.mxu0 0.0
    %914 = vmatmul.mubr.f32.gmra.mxu0 %v845
    %v915 = vpop.f32.mrf.mxu0
    %v916 = vadd.f32 %v445, %v915
    %v917 = vpop.f32.mrf.mxu0
    %918 = vdwg.mxu0
    %919 = vrot.lane.b32.xlu0 %v607, 96
    %v920 = vpop.permute.xlu0 %919
    %v921 = vsel %vm616, %v593, 0
    %v923 = vsel %vm616, %v920, 0
    %925 = vmatprep.subr.mxu0 0.0
    %926 = vmatpush1.xpose.msra.mxu0 0.0
    %927 = vmatprep.subr.mxu0 0.0
    %928 = vmatpush1.xpose.msra.mxu0 0.0
    %929 = vmatprep.subr.mxu0 0.0
    %930 = vmatpush1.xpose.msra.mxu0 0.0
    %931 = vmatprep.subr.mxu0 0.0
    %932 = vmatpush1.xpose.msra.mxu0 0.0
    %933 = vmatprep.subr.mxu0 0.0
    %934 = vmatpush1.xpose.msra.mxu0 0.0
    %935 = vmatprep.subr.mxu0 0.0
    %936 = vmatpush1.xpose.msra.mxu0 0.0
    %937 = vmatprep.subr.mxu0 0.0
    %938 = vmatpush1.xpose.msra.mxu0 0.0
    %939 = vmatprep.subr.mxu0 0.0
    %940 = vmatpush1.xpose.msra.mxu0 0.0
    %941 = vmatprep.subr.mxu0 0.0
    %942 = vmatpush1.xpose.msra.mxu0 0.0
    %943 = vmatprep.subr.mxu0 0.0
    %944 = vmatpush1.xpose.msra.mxu0 0.0
    %945 = vmatprep.subr.mxu0 0.0
    %946 = vmatpush1.xpose.msra.mxu0 0.0
    %947 = vmatprep.subr.mxu0 0.0
    %948 = vmatpush1.xpose.msra.mxu0 0.0
    %949 = vmatprep.subr.mxu0 0.0
    %950 = vmatpush1.xpose.msra.mxu0 0.0
    %951 = vmatprep.subr.mxu0 0.0
    %952 = vmatpush1.xpose.msra.mxu0 0.0
    %953 = vmatprep.subr.mxu0 0.0
    %954 = vmatpush1.xpose.msra.mxu0 0.0
    %955 = vmatprep.subr.mxu0 0.0
    %956 = vmatpush1.xpose.msra.mxu0 %v923
    %957 = vmatprep.subr.mxu0 0.0
    %958 = vmatpush2.xpose.msra.mxu0 0.0
    %959 = vmatprep.subr.mxu0 0.0
    %960 = vmatpush2.xpose.msra.mxu0 0.0
    %961 = vmatprep.subr.mxu0 0.0
    %962 = vmatpush2.xpose.msra.mxu0 0.0
    %963 = vmatprep.subr.mxu0 0.0
    %964 = vmatpush2.xpose.msra.mxu0 0.0
    %965 = vmatprep.subr.mxu0 0.0
    %966 = vmatpush2.xpose.msra.mxu0 0.0
    %967 = vmatprep.subr.mxu0 0.0
    %968 = vmatpush2.xpose.msra.mxu0 0.0
    %969 = vmatprep.subr.mxu0 0.0
    %970 = vmatpush2.xpose.msra.mxu0 0.0
    %971 = vmatprep.subr.mxu0 0.0
    %972 = vmatpush2.xpose.msra.mxu0 0.0
    %973 = vmatprep.subr.mxu0 0.0
    %974 = vmatpush2.xpose.msra.mxu0 0.0
    %975 = vmatprep.subr.mxu0 0.0
    %976 = vmatpush2.xpose.msra.mxu0 0.0
    %977 = vmatprep.subr.mxu0 0.0
    %978 = vmatpush2.xpose.msra.mxu0 0.0
    %979 = vmatprep.subr.mxu0 0.0
    %980 = vmatpush2.xpose.msra.mxu0 0.0
    %981 = vmatprep.subr.mxu0 0.0
    %982 = vmatpush2.xpose.msra.mxu0 0.0
    %983 = vmatprep.subr.mxu0 0.0
    %984 = vmatpush2.xpose.msra.mxu0 0.0
    %985 = vmatprep.subr.mxu0 0.0
    %986 = vmatpush2.xpose.msra.mxu0 0.0
    %987 = vmatprep.subr.mxu0 0.0
    %988 = vmatpush2.xpose.msra.mxu0 0.0
    %989 = vmatprep.mubr.f32.mxu0 0.0
    %990 = vmatmul.mubr.f32.gmra.mxu0 %v921
    %v991 = vpop.f32.mrf.mxu0
    %v992 = vadd.f32 %v445, %v991
    %v993 = vpop.f32.mrf.mxu0
    %994 = vdwg.mxu0
    %995 = vrot.lane.b32.xlu0 %v609, 96
    %v996 = vpop.permute.xlu0 %995
    %v997 = vsel %vm616, %v595, 0
    %v999 = vsel %vm616, %v996, 0
    %1001 = vmatprep.subr.mxu0 0.0
    %1002 = vmatpush1.xpose.msra.mxu0 0.0
    %1003 = vmatprep.subr.mxu0 0.0
    %1004 = vmatpush1.xpose.msra.mxu0 0.0
    %1005 = vmatprep.subr.mxu0 0.0
    %1006 = vmatpush1.xpose.msra.mxu0 0.0
    %1007 = vmatprep.subr.mxu0 0.0
    %1008 = vmatpush1.xpose.msra.mxu0 0.0
    %1009 = vmatprep.subr.mxu0 0.0
    %1010 = vmatpush1.xpose.msra.mxu0 0.0
    %1011 = vmatprep.subr.mxu0 0.0
    %1012 = vmatpush1.xpose.msra.mxu0 0.0
    %1013 = vmatprep.subr.mxu0 0.0
    %1014 = vmatpush1.xpose.msra.mxu0 0.0
    %1015 = vmatprep.subr.mxu0 0.0
    %1016 = vmatpush1.xpose.msra.mxu0 0.0
    %1017 = vmatprep.subr.mxu0 0.0
    %1018 = vmatpush1.xpose.msra.mxu0 0.0
    %1019 = vmatprep.subr.mxu0 0.0
    %1020 = vmatpush1.xpose.msra.mxu0 0.0
    %1021 = vmatprep.subr.mxu0 0.0
    %1022 = vmatpush1.xpose.msra.mxu0 0.0
    %1023 = vmatprep.subr.mxu0 0.0
    %1024 = vmatpush1.xpose.msra.mxu0 0.0
    %1025 = vmatprep.subr.mxu0 0.0
    %1026 = vmatpush1.xpose.msra.mxu0 0.0
    %1027 = vmatprep.subr.mxu0 0.0
    %1028 = vmatpush1.xpose.msra.mxu0 0.0
    %1029 = vmatprep.subr.mxu0 0.0
    %1030 = vmatpush1.xpose.msra.mxu0 0.0
    %1031 = vmatprep.subr.mxu0 0.0
    %1032 = vmatpush1.xpose.msra.mxu0 %v999
    %1033 = vmatprep.subr.mxu0 0.0
    %1034 = vmatpush2.xpose.msra.mxu0 0.0
    %1035 = vmatprep.subr.mxu0 0.0
    %1036 = vmatpush2.xpose.msra.mxu0 0.0
    %1037 = vmatprep.subr.mxu0 0.0
    %1038 = vmatpush2.xpose.msra.mxu0 0.0
    %1039 = vmatprep.subr.mxu0 0.0
    %1040 = vmatpush2.xpose.msra.mxu0 0.0
    %1041 = vmatprep.subr.mxu0 0.0
    %1042 = vmatpush2.xpose.msra.mxu0 0.0
    %1043 = vmatprep.subr.mxu0 0.0
    %1044 = vmatpush2.xpose.msra.mxu0 0.0
    %1045 = vmatprep.subr.mxu0 0.0
    %1046 = vmatpush2.xpose.msra.mxu0 0.0
    %1047 = vmatprep.subr.mxu0 0.0
    %1048 = vmatpush2.xpose.msra.mxu0 0.0
    %1049 = vmatprep.subr.mxu0 0.0
    %1050 = vmatpush2.xpose.msra.mxu0 0.0
    %1051 = vmatprep.subr.mxu0 0.0
    %1052 = vmatpush2.xpose.msra.mxu0 0.0
    %1053 = vmatprep.subr.mxu0 0.0
    %1054 = vmatpush2.xpose.msra.mxu0 0.0
    %1055 = vmatprep.subr.mxu0 0.0
    %1056 = vmatpush2.xpose.msra.mxu0 0.0
    %1057 = vmatprep.subr.mxu0 0.0
    %1058 = vmatpush2.xpose.msra.mxu0 0.0
    %1059 = vmatprep.subr.mxu0 0.0
    %1060 = vmatpush2.xpose.msra.mxu0 0.0
    %1061 = vmatprep.subr.mxu0 0.0
    %1062 = vmatpush2.xpose.msra.mxu0 0.0
    %1063 = vmatprep.subr.mxu0 0.0
    %1064 = vmatpush2.xpose.msra.mxu0 0.0
    %1065 = vmatprep.mubr.f32.mxu0 0.0
    %1066 = vmatmul.mubr.f32.gmra.mxu0 %v997
    %v1067 = vpop.f32.mrf.mxu0
    %v1068 = vadd.f32 %v445, %v1067
    %v1069 = vpop.f32.mrf.mxu0
    %1070 = vdwg.mxu0
    %1071 = vrot.lane.b32.xlu0 %v611, 96
    %v1072 = vpop.permute.xlu0 %1071
    %v1073 = vsel %vm616, %v597, 0
    %v1075 = vsel %vm616, %v1072, 0
    %1077 = vmatprep.subr.mxu0 0.0
    %1078 = vmatpush1.xpose.msra.mxu0 0.0
    %1079 = vmatprep.subr.mxu0 0.0
    %1080 = vmatpush1.xpose.msra.mxu0 0.0
    %1081 = vmatprep.subr.mxu0 0.0
    %1082 = vmatpush1.xpose.msra.mxu0 0.0
    %1083 = vmatprep.subr.mxu0 0.0
    %1084 = vmatpush1.xpose.msra.mxu0 0.0
    %1085 = vmatprep.subr.mxu0 0.0
    %1086 = vmatpush1.xpose.msra.mxu0 0.0
    %1087 = vmatprep.subr.mxu0 0.0
    %1088 = vmatpush1.xpose.msra.mxu0 0.0
    %1089 = vmatprep.subr.mxu0 0.0
    %1090 = vmatpush1.xpose.msra.mxu0 0.0
    %1091 = vmatprep.subr.mxu0 0.0
    %1092 = vmatpush1.xpose.msra.mxu0 0.0
    %1093 = vmatprep.subr.mxu0 0.0
    %1094 = vmatpush1.xpose.msra.mxu0 0.0
    %1095 = vmatprep.subr.mxu0 0.0
    %1096 = vmatpush1.xpose.msra.mxu0 0.0
    %1097 = vmatprep.subr.mxu0 0.0
    %1098 = vmatpush1.xpose.msra.mxu0 0.0
    %1099 = vmatprep.subr.mxu0 0.0
    %1100 = vmatpush1.xpose.msra.mxu0 0.0
    %1101 = vmatprep.subr.mxu0 0.0
    %1102 = vmatpush1.xpose.msra.mxu0 0.0
    %1103 = vmatprep.subr.mxu0 0.0
    %1104 = vmatpush1.xpose.msra.mxu0 0.0
    %1105 = vmatprep.subr.mxu0 0.0
    %1106 = vmatpush1.xpose.msra.mxu0 0.0
    %1107 = vmatprep.subr.mxu0 0.0
    %1108 = vmatpush1.xpose.msra.mxu0 %v1075
    %1109 = vmatprep.subr.mxu0 0.0
    %1110 = vmatpush2.xpose.msra.mxu0 0.0
    %1111 = vmatprep.subr.mxu0 0.0
    %1112 = vmatpush2.xpose.msra.mxu0 0.0
    %1113 = vmatprep.subr.mxu0 0.0
    %1114 = vmatpush2.xpose.msra.mxu0 0.0
    %1115 = vmatprep.subr.mxu0 0.0
    %1116 = vmatpush2.xpose.msra.mxu0 0.0
    %1117 = vmatprep.subr.mxu0 0.0
    %1118 = vmatpush2.xpose.msra.mxu0 0.0
    %1119 = vmatprep.subr.mxu0 0.0
    %1120 = vmatpush2.xpose.msra.mxu0 0.0
    %1121 = vmatprep.subr.mxu0 0.0
    %1122 = vmatpush2.xpose.msra.mxu0 0.0
    %1123 = vmatprep.subr.mxu0 0.0
    %1124 = vmatpush2.xpose.msra.mxu0 0.0
    %1125 = vmatprep.subr.mxu0 0.0
    %1126 = vmatpush2.xpose.msra.mxu0 0.0
    %1127 = vmatprep.subr.mxu0 0.0
    %1128 = vmatpush2.xpose.msra.mxu0 0.0
    %1129 = vmatprep.subr.mxu0 0.0
    %1130 = vmatpush2.xpose.msra.mxu0 0.0
    %1131 = vmatprep.subr.mxu0 0.0
    %1132 = vmatpush2.xpose.msra.mxu0 0.0
    %1133 = vmatprep.subr.mxu0 0.0
    %1134 = vmatpush2.xpose.msra.mxu0 0.0
    %1135 = vmatprep.subr.mxu0 0.0
    %1136 = vmatpush2.xpose.msra.mxu0 0.0
    %1137 = vmatprep.subr.mxu0 0.0
    %1138 = vmatpush2.xpose.msra.mxu0 0.0
    %1139 = vmatprep.subr.mxu0 0.0
    %1140 = vmatpush2.xpose.msra.mxu0 0.0
    %1141 = vmatprep.mubr.f32.mxu0 0.0
    %1142 = vmatmul.mubr.f32.gmra.mxu0 %v1073
    %v1143 = vpop.f32.mrf.mxu0
    %v1144 = vadd.f32 %v445, %v1143
    %v1145 = vpop.f32.mrf.mxu0
    %1146 = vdwg.mxu0
    %1147 = vrot.lane.b32.xlu0 %v613, 96
    %v1148 = vpop.permute.xlu0 %1147
    %v1149 = vsel %vm616, %v599, 0
    %v1151 = vsel %vm616, %v1148, 0
    %1153 = vmatprep.subr.mxu0 0.0
    %1154 = vmatpush1.xpose.msra.mxu0 0.0
    %1155 = vmatprep.subr.mxu0 0.0
    %1156 = vmatpush1.xpose.msra.mxu0 0.0
    %1157 = vmatprep.subr.mxu0 0.0
    %1158 = vmatpush1.xpose.msra.mxu0 0.0
    %1159 = vmatprep.subr.mxu0 0.0
    %1160 = vmatpush1.xpose.msra.mxu0 0.0
    %1161 = vmatprep.subr.mxu0 0.0
    %1162 = vmatpush1.xpose.msra.mxu0 0.0
    %1163 = vmatprep.subr.mxu0 0.0
    %1164 = vmatpush1.xpose.msra.mxu0 0.0
    %1165 = vmatprep.subr.mxu0 0.0
    %1166 = vmatpush1.xpose.msra.mxu0 0.0
    %1167 = vmatprep.subr.mxu0 0.0
    %1168 = vmatpush1.xpose.msra.mxu0 0.0
    %1169 = vmatprep.subr.mxu0 0.0
    %1170 = vmatpush1.xpose.msra.mxu0 0.0
    %1171 = vmatprep.subr.mxu0 0.0
    %1172 = vmatpush1.xpose.msra.mxu0 0.0
    %1173 = vmatprep.subr.mxu0 0.0
    %1174 = vmatpush1.xpose.msra.mxu0 0.0
    %1175 = vmatprep.subr.mxu0 0.0
    %1176 = vmatpush1.xpose.msra.mxu0 0.0
    %1177 = vmatprep.subr.mxu0 0.0
    %1178 = vmatpush1.xpose.msra.mxu0 0.0
    %1179 = vmatprep.subr.mxu0 0.0
    %1180 = vmatpush1.xpose.msra.mxu0 0.0
    %1181 = vmatprep.subr.mxu0 0.0
    %1182 = vmatpush1.xpose.msra.mxu0 0.0
    %1183 = vmatprep.subr.mxu0 0.0
    %1184 = vmatpush1.xpose.msra.mxu0 %v1151
    %1185 = vmatprep.subr.mxu0 0.0
    %1186 = vmatpush2.xpose.msra.mxu0 0.0
    %1187 = vmatprep.subr.mxu0 0.0
    %1188 = vmatpush2.xpose.msra.mxu0 0.0
    %1189 = vmatprep.subr.mxu0 0.0
    %1190 = vmatpush2.xpose.msra.mxu0 0.0
    %1191 = vmatprep.subr.mxu0 0.0
    %1192 = vmatpush2.xpose.msra.mxu0 0.0
    %1193 = vmatprep.subr.mxu0 0.0
    %1194 = vmatpush2.xpose.msra.mxu0 0.0
    %1195 = vmatprep.subr.mxu0 0.0
    %1196 = vmatpush2.xpose.msra.mxu0 0.0
    %1197 = vmatprep.subr.mxu0 0.0
    %1198 = vmatpush2.xpose.msra.mxu0 0.0
    %1199 = vmatprep.subr.mxu0 0.0
    %1200 = vmatpush2.xpose.msra.mxu0 0.0
    %1201 = vmatprep.subr.mxu0 0.0
    %1202 = vmatpush2.xpose.msra.mxu0 0.0
    %1203 = vmatprep.subr.mxu0 0.0
    %1204 = vmatpush2.xpose.msra.mxu0 0.0
    %1205 = vmatprep.subr.mxu0 0.0
    %1206 = vmatpush2.xpose.msra.mxu0 0.0
    %1207 = vmatprep.subr.mxu0 0.0
    %1208 = vmatpush2.xpose.msra.mxu0 0.0
    %1209 = vmatprep.subr.mxu0 0.0
    %1210 = vmatpush2.xpose.msra.mxu0 0.0
    %1211 = vmatprep.subr.mxu0 0.0
    %1212 = vmatpush2.xpose.msra.mxu0 0.0
    %1213 = vmatprep.subr.mxu0 0.0
    %1214 = vmatpush2.xpose.msra.mxu0 0.0
    %1215 = vmatprep.subr.mxu0 0.0
    %1216 = vmatpush2.xpose.msra.mxu0 0.0
    %1217 = vmatprep.mubr.f32.mxu0 0.0
    %1218 = vmatmul.mubr.f32.gmra.mxu0 %v1149
    %v1219 = vpop.f32.mrf.mxu0
    %v1220 = vadd.f32 %v445, %v1219
    %v1221 = vpop.f32.mrf.mxu0
    %1222 = vdwg.mxu0
    %v1223 = vsel %vm616, %v688, -inf
    %1224 = vmax.xlane.f32.xlu0 %v1223
    %v1225 = vpop.xlane.xlu0 %1224
    %v1226 = vsel %vm616, %v764, -inf
    %1227 = vmax.xlane.f32.xlu0 %v1226
    %v1228 = vpop.xlane.xlu0 %1227
    %v1229 = vsel %vm616, %v840, -inf
    %1230 = vmax.xlane.f32.xlu0 %v1229
    %v1231 = vpop.xlane.xlu0 %1230
    %v1232 = vsel %vm616, %v916, -inf
    %1233 = vmax.xlane.f32.xlu0 %v1232
    %v1234 = vpop.xlane.xlu0 %1233
    %v1235 = vsel %vm616, %v992, -inf
    %1236 = vmax.xlane.f32.xlu0 %v1235
    %v1237 = vpop.xlane.xlu0 %1236
    %v1238 = vsel %vm616, %v1068, -inf
    %1239 = vmax.xlane.f32.xlu0 %v1238
    %v1240 = vpop.xlane.xlu0 %1239
    %v1241 = vsel %vm616, %v1144, -inf
    %1242 = vmax.xlane.f32.xlu0 %v1241
    %v1243 = vpop.xlane.xlu0 %1242
    %v1244 = vsel %vm616, %v1220, -inf
    %1245 = vmax.xlane.f32.xlu0 %v1244
    %v1246 = vpop.xlane.xlu0 %1245
    %v1247 = vsub.f32 %v688, %v1225
    %v1248 = vsub.f32 %v764, %v1228
    %v1249 = vsub.f32 %v840, %v1231
    %v1250 = vsub.f32 %v916, %v1234
    %v1251 = vsub.f32 %v992, %v1237
    %v1252 = vsub.f32 %v1068, %v1240
    %v1253 = vsub.f32 %v1144, %v1243
    %v1254 = vsub.f32 %v1220, %v1246
    %v1255 = vmul.f32 %v1247, 1.442695
    %v1256 = vpow.pop %v1255
    %v1257 = vmul.f32 %v1248, 1.442695
    %v1258 = vpow.pop %v1257
    %v1259 = vmul.f32 %v1249, 1.442695
    %v1260 = vpow.pop %v1259
    %v1261 = vmul.f32 %v1250, 1.442695
    %v1262 = vpow.pop %v1261
    %v1263 = vmul.f32 %v1251, 1.442695
    %v1264 = vpow.pop %v1263
    %v1265 = vmul.f32 %v1252, 1.442695
    %v1266 = vpow.pop %v1265
    %v1267 = vmul.f32 %v1253, 1.442695
    %v1268 = vpow.pop %v1267
    %v1269 = vmul.f32 %v1254, 1.442695
    %v1270 = vpow.pop %v1269
    %v1271 = vsel %vm616, %v1256, 0.0
    %1272 = vadd.xlane.f32.xlu0 %v1271
    %v1273 = vpop.xlane.xlu0 %1272
    %v1274 = vsel %vm616, %v1258, 0.0
    %1275 = vadd.xlane.f32.xlu0 %v1274
    %v1276 = vpop.xlane.xlu0 %1275
    %v1277 = vsel %vm616, %v1260, 0.0
    %1278 = vadd.xlane.f32.xlu0 %v1277
    %v1279 = vpop.xlane.xlu0 %1278
    %v1280 = vsel %vm616, %v1262, 0.0
    %1281 = vadd.xlane.f32.xlu0 %v1280
    %v1282 = vpop.xlane.xlu0 %1281
    %v1283 = vsel %vm616, %v1264, 0.0
    %1284 = vadd.xlane.f32.xlu0 %v1283
    %v1285 = vpop.xlane.xlu0 %1284
    %v1286 = vsel %vm616, %v1266, 0.0
    %1287 = vadd.xlane.f32.xlu0 %v1286
    %v1288 = vpop.xlane.xlu0 %1287
    %v1289 = vsel %vm616, %v1268, 0.0
    %1290 = vadd.xlane.f32.xlu0 %v1289
    %v1291 = vpop.xlane.xlu0 %1290
    %v1292 = vsel %vm616, %v1270, 0.0
    %1293 = vadd.xlane.f32.xlu0 %v1292
    %v1294 = vpop.xlane.xlu0 %1293
    %v1295 = vrcp.pop %v1273
    %v1296 = vrcp.pop %v1276
    %v1297 = vrcp.pop %v1279
    %v1298 = vrcp.pop %v1282
    %v1299 = vrcp.pop %v1285
    %v1300 = vrcp.pop %v1288
    %v1301 = vrcp.pop %v1291
    %v1302 = vrcp.pop %v1294
    %v1303 = vmul.f32 %v1256, %v1295
    %v1304 = vmul.f32 %v1258, %v1296
    %v1305 = vmul.f32 %v1260, %v1297
    %v1306 = vmul.f32 %v1262, %v1298
    %v1307 = vmul.f32 %v1264, %v1299
    %v1308 = vmul.f32 %v1266, %v1300
    %v1309 = vmul.f32 %v1268, %v1301
    %v1310 = vmul.f32 %v1270, %v1302
    %1311 = vrot.lane.b32.xlu0 %v576, 64
    %v1312 = vpop.permute.xlu0 %1311
    %v1315 = vsel %vm616, %v1303, 0
    %1317 = vmatprep.subr.mxu0 0.0
    %1318 = vmatpush1.msra.mxu0 0.0
    %1319 = vmatprep.subr.mxu0 0.0
    %1320 = vmatpush1.msra.mxu0 0.0
    %1321 = vmatprep.subr.mxu0 0.0
    %1322 = vmatpush1.msra.mxu0 0.0
    %1323 = vmatprep.subr.mxu0 0.0
    %1324 = vmatpush1.msra.mxu0 0.0
    %1325 = vmatprep.subr.mxu0 0.0
    %1326 = vmatpush1.msra.mxu0 0.0
    %1327 = vmatprep.subr.mxu0 0.0
    %1328 = vmatpush1.msra.mxu0 0.0
    %1329 = vmatprep.subr.mxu0 0.0
    %1330 = vmatpush1.msra.mxu0 0.0
    %1331 = vmatprep.subr.mxu0 0.0
    %1332 = vmatpush1.msra.mxu0 0.0
    %1333 = vmatprep.subr.mxu0 0.0
    %1334 = vmatpush1.msra.mxu0 0.0
    %1335 = vmatprep.subr.mxu0 0.0
    %1336 = vmatpush1.msra.mxu0 0.0
    %1337 = vmatprep.subr.mxu0 0.0
    %1338 = vmatpush1.msra.mxu0 0.0
    %1339 = vmatprep.subr.mxu0 0.0
    %1340 = vmatpush1.msra.mxu0 0.0
    %1341 = vmatprep.subr.mxu0 0.0
    %1342 = vmatpush1.msra.mxu0 0.0
    %1343 = vmatprep.subr.mxu0 0.0
    %1344 = vmatpush1.msra.mxu0 0.0
    %1345 = vmatprep.subr.mxu0 0.0
    %1346 = vmatpush1.msra.mxu0 0.0
    %1347 = vmatprep.subr.mxu0 0.0
    %1348 = vmatpush1.msra.mxu0 %v1312
    %1349 = vmatprep.subr.mxu0 0.0
    %1350 = vmatpush2.msra.mxu0 0.0
    %1351 = vmatprep.subr.mxu0 0.0
    %1352 = vmatpush2.msra.mxu0 0.0
    %1353 = vmatprep.subr.mxu0 0.0
    %1354 = vmatpush2.msra.mxu0 0.0
    %1355 = vmatprep.subr.mxu0 0.0
    %1356 = vmatpush2.msra.mxu0 0.0
    %1357 = vmatprep.subr.mxu0 0.0
    %1358 = vmatpush2.msra.mxu0 0.0
    %1359 = vmatprep.subr.mxu0 0.0
    %1360 = vmatpush2.msra.mxu0 0.0
    %1361 = vmatprep.subr.mxu0 0.0
    %1362 = vmatpush2.msra.mxu0 0.0
    %1363 = vmatprep.subr.mxu0 0.0
    %1364 = vmatpush2.msra.mxu0 0.0
    %1365 = vmatprep.subr.mxu0 0.0
    %1366 = vmatpush2.msra.mxu0 0.0
    %1367 = vmatprep.subr.mxu0 0.0
    %1368 = vmatpush2.msra.mxu0 0.0
    %1369 = vmatprep.subr.mxu0 0.0
    %1370 = vmatpush2.msra.mxu0 0.0
    %1371 = vmatprep.subr.mxu0 0.0
    %1372 = vmatpush2.msra.mxu0 0.0
    %1373 = vmatprep.subr.mxu0 0.0
    %1374 = vmatpush2.msra.mxu0 0.0
    %1375 = vmatprep.subr.mxu0 0.0
    %1376 = vmatpush2.msra.mxu0 0.0
    %1377 = vmatprep.subr.mxu0 0.0
    %1378 = vmatpush2.msra.mxu0 0.0
    %1379 = vmatprep.subr.mxu0 0.0
    %1380 = vmatpush2.msra.mxu0 0.0
    %1381 = vmatprep.mubr.f32.mxu0 0.0
    %1382 = vmatmul.mubr.f32.gmra.mxu0 %v1315
    %v1383 = vpop.f32.mrf.mxu0
    %v1384 = vadd.f32 0.0, %v1383
    %v1385 = vpop.f32.mrf.mxu0
    %1386 = vdwg.mxu0
    %1387 = vrot.lane.b32.xlu0 %v581, 64
    %v1388 = vpop.permute.xlu0 %1387
    %v1391 = vsel %vm616, %v1304, 0
    %1393 = vmatprep.subr.mxu0 0.0
    %1394 = vmatpush1.msra.mxu0 0.0
    %1395 = vmatprep.subr.mxu0 0.0
    %1396 = vmatpush1.msra.mxu0 0.0
    %1397 = vmatprep.subr.mxu0 0.0
    %1398 = vmatpush1.msra.mxu0 0.0
    %1399 = vmatprep.subr.mxu0 0.0
    %1400 = vmatpush1.msra.mxu0 0.0
    %1401 = vmatprep.subr.mxu0 0.0
    %1402 = vmatpush1.msra.mxu0 0.0
    %1403 = vmatprep.subr.mxu0 0.0
    %1404 = vmatpush1.msra.mxu0 0.0
    %1405 = vmatprep.subr.mxu0 0.0
    %1406 = vmatpush1.msra.mxu0 0.0
    %1407 = vmatprep.subr.mxu0 0.0
    %1408 = vmatpush1.msra.mxu0 0.0
    %1409 = vmatprep.subr.mxu0 0.0
    %1410 = vmatpush1.msra.mxu0 0.0
    %1411 = vmatprep.subr.mxu0 0.0
    %1412 = vmatpush1.msra.mxu0 0.0
    %1413 = vmatprep.subr.mxu0 0.0
    %1414 = vmatpush1.msra.mxu0 0.0
    %1415 = vmatprep.subr.mxu0 0.0
    %1416 = vmatpush1.msra.mxu0 0.0
    %1417 = vmatprep.subr.mxu0 0.0
    %1418 = vmatpush1.msra.mxu0 0.0
    %1419 = vmatprep.subr.mxu0 0.0
    %1420 = vmatpush1.msra.mxu0 0.0
    %1421 = vmatprep.subr.mxu0 0.0
    %1422 = vmatpush1.msra.mxu0 0.0
    %1423 = vmatprep.subr.mxu0 0.0
    %1424 = vmatpush1.msra.mxu0 %v1388
    %1425 = vmatprep.subr.mxu0 0.0
    %1426 = vmatpush2.msra.mxu0 0.0
    %1427 = vmatprep.subr.mxu0 0.0
    %1428 = vmatpush2.msra.mxu0 0.0
    %1429 = vmatprep.subr.mxu0 0.0
    %1430 = vmatpush2.msra.mxu0 0.0
    %1431 = vmatprep.subr.mxu0 0.0
    %1432 = vmatpush2.msra.mxu0 0.0
    %1433 = vmatprep.subr.mxu0 0.0
    %1434 = vmatpush2.msra.mxu0 0.0
    %1435 = vmatprep.subr.mxu0 0.0
    %1436 = vmatpush2.msra.mxu0 0.0
    %1437 = vmatprep.subr.mxu0 0.0
    %1438 = vmatpush2.msra.mxu0 0.0
    %1439 = vmatprep.subr.mxu0 0.0
    %1440 = vmatpush2.msra.mxu0 0.0
    %1441 = vmatprep.subr.mxu0 0.0
    %1442 = vmatpush2.msra.mxu0 0.0
    %1443 = vmatprep.subr.mxu0 0.0
    %1444 = vmatpush2.msra.mxu0 0.0
    %1445 = vmatprep.subr.mxu0 0.0
    %1446 = vmatpush2.msra.mxu0 0.0
    %1447 = vmatprep.subr.mxu0 0.0
    %1448 = vmatpush2.msra.mxu0 0.0
    %1449 = vmatprep.subr.mxu0 0.0
    %1450 = vmatpush2.msra.mxu0 0.0
    %1451 = vmatprep.subr.mxu0 0.0
    %1452 = vmatpush2.msra.mxu0 0.0
    %1453 = vmatprep.subr.mxu0 0.0
    %1454 = vmatpush2.msra.mxu0 0.0
    %1455 = vmatprep.subr.mxu0 0.0
    %1456 = vmatpush2.msra.mxu0 0.0
    %1457 = vmatprep.mubr.f32.mxu0 0.0
    %1458 = vmatmul.mubr.f32.gmra.mxu0 %v1391
    %v1459 = vpop.f32.mrf.mxu0
    %v1460 = vadd.f32 0.0, %v1459
    %v1461 = vpop.f32.mrf.mxu0
    %1462 = vdwg.mxu0
    %1463 = vrot.lane.b32.xlu0 %v603, 64
    %v1464 = vpop.permute.xlu0 %1463
    %v1467 = vsel %vm616, %v1305, 0
    %1469 = vmatprep.subr.mxu0 0.0
    %1470 = vmatpush1.msra.mxu0 0.0
    %1471 = vmatprep.subr.mxu0 0.0
    %1472 = vmatpush1.msra.mxu0 0.0
    %1473 = vmatprep.subr.mxu0 0.0
    %1474 = vmatpush1.msra.mxu0 0.0
    %1475 = vmatprep.subr.mxu0 0.0
    %1476 = vmatpush1.msra.mxu0 0.0
    %1477 = vmatprep.subr.mxu0 0.0
    %1478 = vmatpush1.msra.mxu0 0.0
    %1479 = vmatprep.subr.mxu0 0.0
    %1480 = vmatpush1.msra.mxu0 0.0
    %1481 = vmatprep.subr.mxu0 0.0
    %1482 = vmatpush1.msra.mxu0 0.0
    %1483 = vmatprep.subr.mxu0 0.0
    %1484 = vmatpush1.msra.mxu0 0.0
    %1485 = vmatprep.subr.mxu0 0.0
    %1486 = vmatpush1.msra.mxu0 0.0
    %1487 = vmatprep.subr.mxu0 0.0
    %1488 = vmatpush1.msra.mxu0 0.0
    %1489 = vmatprep.subr.mxu0 0.0
    %1490 = vmatpush1.msra.mxu0 0.0
    %1491 = vmatprep.subr.mxu0 0.0
    %1492 = vmatpush1.msra.mxu0 0.0
    %1493 = vmatprep.subr.mxu0 0.0
    %1494 = vmatpush1.msra.mxu0 0.0
    %1495 = vmatprep.subr.mxu0 0.0
    %1496 = vmatpush1.msra.mxu0 0.0
    %1497 = vmatprep.subr.mxu0 0.0
    %1498 = vmatpush1.msra.mxu0 0.0
    %1499 = vmatprep.subr.mxu0 0.0
    %1500 = vmatpush1.msra.mxu0 %v1464
    %1501 = vmatprep.subr.mxu0 0.0
    %1502 = vmatpush2.msra.mxu0 0.0
    %1503 = vmatprep.subr.mxu0 0.0
    %1504 = vmatpush2.msra.mxu0 0.0
    %1505 = vmatprep.subr.mxu0 0.0
    %1506 = vmatpush2.msra.mxu0 0.0
    %1507 = vmatprep.subr.mxu0 0.0
    %1508 = vmatpush2.msra.mxu0 0.0
    %1509 = vmatprep.subr.mxu0 0.0
    %1510 = vmatpush2.msra.mxu0 0.0
    %1511 = vmatprep.subr.mxu0 0.0
    %1512 = vmatpush2.msra.mxu0 0.0
    %1513 = vmatprep.subr.mxu0 0.0
    %1514 = vmatpush2.msra.mxu0 0.0
    %1515 = vmatprep.subr.mxu0 0.0
    %1516 = vmatpush2.msra.mxu0 0.0
    %1517 = vmatprep.subr.mxu0 0.0
    %1518 = vmatpush2.msra.mxu0 0.0
    %1519 = vmatprep.subr.mxu0 0.0
    %1520 = vmatpush2.msra.mxu0 0.0
    %1521 = vmatprep.subr.mxu0 0.0
    %1522 = vmatpush2.msra.mxu0 0.0
    %1523 = vmatprep.subr.mxu0 0.0
    %1524 = vmatpush2.msra.mxu0 0.0
    %1525 = vmatprep.subr.mxu0 0.0
    %1526 = vmatpush2.msra.mxu0 0.0
    %1527 = vmatprep.subr.mxu0 0.0
    %1528 = vmatpush2.msra.mxu0 0.0
    %1529 = vmatprep.subr.mxu0 0.0
    %1530 = vmatpush2.msra.mxu0 0.0
    %1531 = vmatprep.subr.mxu0 0.0
    %1532 = vmatpush2.msra.mxu0 0.0
    %1533 = vmatprep.mubr.f32.mxu0 0.0
    %1534 = vmatmul.mubr.f32.gmra.mxu0 %v1467
    %v1535 = vpop.f32.mrf.mxu0
    %v1536 = vadd.f32 0.0, %v1535
    %v1537 = vpop.f32.mrf.mxu0
    %1538 = vdwg.mxu0
    %1539 = vrot.lane.b32.xlu0 %v605, 64
    %v1540 = vpop.permute.xlu0 %1539
    %v1543 = vsel %vm616, %v1306, 0
    %1545 = vmatprep.subr.mxu0 0.0
    %1546 = vmatpush1.msra.mxu0 0.0
    %1547 = vmatprep.subr.mxu0 0.0
    %1548 = vmatpush1.msra.mxu0 0.0
    %1549 = vmatprep.subr.mxu0 0.0
    %1550 = vmatpush1.msra.mxu0 0.0
    %1551 = vmatprep.subr.mxu0 0.0
    %1552 = vmatpush1.msra.mxu0 0.0
    %1553 = vmatprep.subr.mxu0 0.0
    %1554 = vmatpush1.msra.mxu0 0.0
    %1555 = vmatprep.subr.mxu0 0.0
    %1556 = vmatpush1.msra.mxu0 0.0
    %1557 = vmatprep.subr.mxu0 0.0
    %1558 = vmatpush1.msra.mxu0 0.0
    %1559 = vmatprep.subr.mxu0 0.0
    %1560 = vmatpush1.msra.mxu0 0.0
    %1561 = vmatprep.subr.mxu0 0.0
    %1562 = vmatpush1.msra.mxu0 0.0
    %1563 = vmatprep.subr.mxu0 0.0
    %1564 = vmatpush1.msra.mxu0 0.0
    %1565 = vmatprep.subr.mxu0 0.0
    %1566 = vmatpush1.msra.mxu0 0.0
    %1567 = vmatprep.subr.mxu0 0.0
    %1568 = vmatpush1.msra.mxu0 0.0
    %1569 = vmatprep.subr.mxu0 0.0
    %1570 = vmatpush1.msra.mxu0 0.0
    %1571 = vmatprep.subr.mxu0 0.0
    %1572 = vmatpush1.msra.mxu0 0.0
    %1573 = vmatprep.subr.mxu0 0.0
    %1574 = vmatpush1.msra.mxu0 0.0
    %1575 = vmatprep.subr.mxu0 0.0
    %1576 = vmatpush1.msra.mxu0 %v1540
    %1577 = vmatprep.subr.mxu0 0.0
    %1578 = vmatpush2.msra.mxu0 0.0
    %1579 = vmatprep.subr.mxu0 0.0
    %1580 = vmatpush2.msra.mxu0 0.0
    %1581 = vmatprep.subr.mxu0 0.0
    %1582 = vmatpush2.msra.mxu0 0.0
    %1583 = vmatprep.subr.mxu0 0.0
    %1584 = vmatpush2.msra.mxu0 0.0
    %1585 = vmatprep.subr.mxu0 0.0
    %1586 = vmatpush2.msra.mxu0 0.0
    %1587 = vmatprep.subr.mxu0 0.0
    %1588 = vmatpush2.msra.mxu0 0.0
    %1589 = vmatprep.subr.mxu0 0.0
    %1590 = vmatpush2.msra.mxu0 0.0
    %1591 = vmatprep.subr.mxu0 0.0
    %1592 = vmatpush2.msra.mxu0 0.0
    %1593 = vmatprep.subr.mxu0 0.0
    %1594 = vmatpush2.msra.mxu0 0.0
    %1595 = vmatprep.subr.mxu0 0.0
    %1596 = vmatpush2.msra.mxu0 0.0
    %1597 = vmatprep.subr.mxu0 0.0
    %1598 = vmatpush2.msra.mxu0 0.0
    %1599 = vmatprep.subr.mxu0 0.0
    %1600 = vmatpush2.msra.mxu0 0.0
    %1601 = vmatprep.subr.mxu0 0.0
    %1602 = vmatpush2.msra.mxu0 0.0
    %1603 = vmatprep.subr.mxu0 0.0
    %1604 = vmatpush2.msra.mxu0 0.0
    %1605 = vmatprep.subr.mxu0 0.0
    %1606 = vmatpush2.msra.mxu0 0.0
    %1607 = vmatprep.subr.mxu0 0.0
    %1608 = vmatpush2.msra.mxu0 0.0
    %1609 = vmatprep.mubr.f32.mxu0 0.0
    %1610 = vmatmul.mubr.f32.gmra.mxu0 %v1543
    %v1611 = vpop.f32.mrf.mxu0
    %v1612 = vadd.f32 0.0, %v1611
    %v1613 = vpop.f32.mrf.mxu0
    %1614 = vdwg.mxu0
    %1615 = vrot.lane.b32.xlu0 %v607, 64
    %v1616 = vpop.permute.xlu0 %1615
    %v1619 = vsel %vm616, %v1307, 0
    %1621 = vmatprep.subr.mxu0 0.0
    %1622 = vmatpush1.msra.mxu0 0.0
    %1623 = vmatprep.subr.mxu0 0.0
    %1624 = vmatpush1.msra.mxu0 0.0
    %1625 = vmatprep.subr.mxu0 0.0
    %1626 = vmatpush1.msra.mxu0 0.0
    %1627 = vmatprep.subr.mxu0 0.0
    %1628 = vmatpush1.msra.mxu0 0.0
    %1629 = vmatprep.subr.mxu0 0.0
    %1630 = vmatpush1.msra.mxu0 0.0
    %1631 = vmatprep.subr.mxu0 0.0
    %1632 = vmatpush1.msra.mxu0 0.0
    %1633 = vmatprep.subr.mxu0 0.0
    %1634 = vmatpush1.msra.mxu0 0.0
    %1635 = vmatprep.subr.mxu0 0.0
    %1636 = vmatpush1.msra.mxu0 0.0
    %1637 = vmatprep.subr.mxu0 0.0
    %1638 = vmatpush1.msra.mxu0 0.0
    %1639 = vmatprep.subr.mxu0 0.0
    %1640 = vmatpush1.msra.mxu0 0.0
    %1641 = vmatprep.subr.mxu0 0.0
    %1642 = vmatpush1.msra.mxu0 0.0
    %1643 = vmatprep.subr.mxu0 0.0
    %1644 = vmatpush1.msra.mxu0 0.0
    %1645 = vmatprep.subr.mxu0 0.0
    %1646 = vmatpush1.msra.mxu0 0.0
    %1647 = vmatprep.subr.mxu0 0.0
    %1648 = vmatpush1.msra.mxu0 0.0
    %1649 = vmatprep.subr.mxu0 0.0
    %1650 = vmatpush1.msra.mxu0 0.0
    %1651 = vmatprep.subr.mxu0 0.0
    %1652 = vmatpush1.msra.mxu0 %v1616
    %1653 = vmatprep.subr.mxu0 0.0
    %1654 = vmatpush2.msra.mxu0 0.0
    %1655 = vmatprep.subr.mxu0 0.0
    %1656 = vmatpush2.msra.mxu0 0.0
    %1657 = vmatprep.subr.mxu0 0.0
    %1658 = vmatpush2.msra.mxu0 0.0
    %1659 = vmatprep.subr.mxu0 0.0
    %1660 = vmatpush2.msra.mxu0 0.0
    %1661 = vmatprep.subr.mxu0 0.0
    %1662 = vmatpush2.msra.mxu0 0.0
    %1663 = vmatprep.subr.mxu0 0.0
    %1664 = vmatpush2.msra.mxu0 0.0
    %1665 = vmatprep.subr.mxu0 0.0
    %1666 = vmatpush2.msra.mxu0 0.0
    %1667 = vmatprep.subr.mxu0 0.0
    %1668 = vmatpush2.msra.mxu0 0.0
    %1669 = vmatprep.subr.mxu0 0.0
    %1670 = vmatpush2.msra.mxu0 0.0
    %1671 = vmatprep.subr.mxu0 0.0
    %1672 = vmatpush2.msra.mxu0 0.0
    %1673 = vmatprep.subr.mxu0 0.0
    %1674 = vmatpush2.msra.mxu0 0.0
    %1675 = vmatprep.subr.mxu0 0.0
    %1676 = vmatpush2.msra.mxu0 0.0
    %1677 = vmatprep.subr.mxu0 0.0
    %1678 = vmatpush2.msra.mxu0 0.0
    %1679 = vmatprep.subr.mxu0 0.0
    %1680 = vmatpush2.msra.mxu0 0.0
    %1681 = vmatprep.subr.mxu0 0.0
    %1682 = vmatpush2.msra.mxu0 0.0
    %1683 = vmatprep.subr.mxu0 0.0
    %1684 = vmatpush2.msra.mxu0 0.0
    %1685 = vmatprep.mubr.f32.mxu0 0.0
    %1686 = vmatmul.mubr.f32.gmra.mxu0 %v1619
    %v1687 = vpop.f32.mrf.mxu0
    %v1688 = vadd.f32 0.0, %v1687
    %v1689 = vpop.f32.mrf.mxu0
    %1690 = vdwg.mxu0
    %1691 = vrot.lane.b32.xlu0 %v609, 64
    %v1692 = vpop.permute.xlu0 %1691
    %v1695 = vsel %vm616, %v1308, 0
    %1697 = vmatprep.subr.mxu0 0.0
    %1698 = vmatpush1.msra.mxu0 0.0
    %1699 = vmatprep.subr.mxu0 0.0
    %1700 = vmatpush1.msra.mxu0 0.0
    %1701 = vmatprep.subr.mxu0 0.0
    %1702 = vmatpush1.msra.mxu0 0.0
    %1703 = vmatprep.subr.mxu0 0.0
    %1704 = vmatpush1.msra.mxu0 0.0
    %1705 = vmatprep.subr.mxu0 0.0
    %1706 = vmatpush1.msra.mxu0 0.0
    %1707 = vmatprep.subr.mxu0 0.0
    %1708 = vmatpush1.msra.mxu0 0.0
    %1709 = vmatprep.subr.mxu0 0.0
    %1710 = vmatpush1.msra.mxu0 0.0
    %1711 = vmatprep.subr.mxu0 0.0
    %1712 = vmatpush1.msra.mxu0 0.0
    %1713 = vmatprep.subr.mxu0 0.0
    %1714 = vmatpush1.msra.mxu0 0.0
    %1715 = vmatprep.subr.mxu0 0.0
    %1716 = vmatpush1.msra.mxu0 0.0
    %1717 = vmatprep.subr.mxu0 0.0
    %1718 = vmatpush1.msra.mxu0 0.0
    %1719 = vmatprep.subr.mxu0 0.0
    %1720 = vmatpush1.msra.mxu0 0.0
    %1721 = vmatprep.subr.mxu0 0.0
    %1722 = vmatpush1.msra.mxu0 0.0
    %1723 = vmatprep.subr.mxu0 0.0
    %1724 = vmatpush1.msra.mxu0 0.0
    %1725 = vmatprep.subr.mxu0 0.0
    %1726 = vmatpush1.msra.mxu0 0.0
    %1727 = vmatprep.subr.mxu0 0.0
    %1728 = vmatpush1.msra.mxu0 %v1692
    %1729 = vmatprep.subr.mxu0 0.0
    %1730 = vmatpush2.msra.mxu0 0.0
    %1731 = vmatprep.subr.mxu0 0.0
    %1732 = vmatpush2.msra.mxu0 0.0
    %1733 = vmatprep.subr.mxu0 0.0
    %1734 = vmatpush2.msra.mxu0 0.0
    %1735 = vmatprep.subr.mxu0 0.0
    %1736 = vmatpush2.msra.mxu0 0.0
    %1737 = vmatprep.subr.mxu0 0.0
    %1738 = vmatpush2.msra.mxu0 0.0
    %1739 = vmatprep.subr.mxu0 0.0
    %1740 = vmatpush2.msra.mxu0 0.0
    %1741 = vmatprep.subr.mxu0 0.0
    %1742 = vmatpush2.msra.mxu0 0.0
    %1743 = vmatprep.subr.mxu0 0.0
    %1744 = vmatpush2.msra.mxu0 0.0
    %1745 = vmatprep.subr.mxu0 0.0
    %1746 = vmatpush2.msra.mxu0 0.0
    %1747 = vmatprep.subr.mxu0 0.0
    %1748 = vmatpush2.msra.mxu0 0.0
    %1749 = vmatprep.subr.mxu0 0.0
    %1750 = vmatpush2.msra.mxu0 0.0
    %1751 = vmatprep.subr.mxu0 0.0
    %1752 = vmatpush2.msra.mxu0 0.0
    %1753 = vmatprep.subr.mxu0 0.0
    %1754 = vmatpush2.msra.mxu0 0.0
    %1755 = vmatprep.subr.mxu0 0.0
    %1756 = vmatpush2.msra.mxu0 0.0
    %1757 = vmatprep.subr.mxu0 0.0
    %1758 = vmatpush2.msra.mxu0 0.0
    %1759 = vmatprep.subr.mxu0 0.0
    %1760 = vmatpush2.msra.mxu0 0.0
    %1761 = vmatprep.mubr.f32.mxu0 0.0
    %1762 = vmatmul.mubr.f32.gmra.mxu0 %v1695
    %v1763 = vpop.f32.mrf.mxu0
    %v1764 = vadd.f32 0.0, %v1763
    %v1765 = vpop.f32.mrf.mxu0
    %1766 = vdwg.mxu0
    %1767 = vrot.lane.b32.xlu0 %v611, 64
    %v1768 = vpop.permute.xlu0 %1767
    %v1771 = vsel %vm616, %v1309, 0
    %1773 = vmatprep.subr.mxu0 0.0
    %1774 = vmatpush1.msra.mxu0 0.0
    %1775 = vmatprep.subr.mxu0 0.0
    %1776 = vmatpush1.msra.mxu0 0.0
    %1777 = vmatprep.subr.mxu0 0.0
    %1778 = vmatpush1.msra.mxu0 0.0
    %1779 = vmatprep.subr.mxu0 0.0
    %1780 = vmatpush1.msra.mxu0 0.0
    %1781 = vmatprep.subr.mxu0 0.0
    %1782 = vmatpush1.msra.mxu0 0.0
    %1783 = vmatprep.subr.mxu0 0.0
    %1784 = vmatpush1.msra.mxu0 0.0
    %1785 = vmatprep.subr.mxu0 0.0
    %1786 = vmatpush1.msra.mxu0 0.0
    %1787 = vmatprep.subr.mxu0 0.0
    %1788 = vmatpush1.msra.mxu0 0.0
    %1789 = vmatprep.subr.mxu0 0.0
    %1790 = vmatpush1.msra.mxu0 0.0
    %1791 = vmatprep.subr.mxu0 0.0
    %1792 = vmatpush1.msra.mxu0 0.0
    %1793 = vmatprep.subr.mxu0 0.0
    %1794 = vmatpush1.msra.mxu0 0.0
    %1795 = vmatprep.subr.mxu0 0.0
    %1796 = vmatpush1.msra.mxu0 0.0
    %1797 = vmatprep.subr.mxu0 0.0
    %1798 = vmatpush1.msra.mxu0 0.0
    %1799 = vmatprep.subr.mxu0 0.0
    %1800 = vmatpush1.msra.mxu0 0.0
    %1801 = vmatprep.subr.mxu0 0.0
    %1802 = vmatpush1.msra.mxu0 0.0
    %1803 = vmatprep.subr.mxu0 0.0
    %1804 = vmatpush1.msra.mxu0 %v1768
    %1805 = vmatprep.subr.mxu0 0.0
    %1806 = vmatpush2.msra.mxu0 0.0
    %1807 = vmatprep.subr.mxu0 0.0
    %1808 = vmatpush2.msra.mxu0 0.0
    %1809 = vmatprep.subr.mxu0 0.0
    %1810 = vmatpush2.msra.mxu0 0.0
    %1811 = vmatprep.subr.mxu0 0.0
    %1812 = vmatpush2.msra.mxu0 0.0
    %1813 = vmatprep.subr.mxu0 0.0
    %1814 = vmatpush2.msra.mxu0 0.0
    %1815 = vmatprep.subr.mxu0 0.0
    %1816 = vmatpush2.msra.mxu0 0.0
    %1817 = vmatprep.subr.mxu0 0.0
    %1818 = vmatpush2.msra.mxu0 0.0
    %1819 = vmatprep.subr.mxu0 0.0
    %1820 = vmatpush2.msra.mxu0 0.0
    %1821 = vmatprep.subr.mxu0 0.0
    %1822 = vmatpush2.msra.mxu0 0.0
    %1823 = vmatprep.subr.mxu0 0.0
    %1824 = vmatpush2.msra.mxu0 0.0
    %1825 = vmatprep.subr.mxu0 0.0
    %1826 = vmatpush2.msra.mxu0 0.0
    %1827 = vmatprep.subr.mxu0 0.0
    %1828 = vmatpush2.msra.mxu0 0.0
    %1829 = vmatprep.subr.mxu0 0.0
    %1830 = vmatpush2.msra.mxu0 0.0
    %1831 = vmatprep.subr.mxu0 0.0
    %1832 = vmatpush2.msra.mxu0 0.0
    %1833 = vmatprep.subr.mxu0 0.0
    %1834 = vmatpush2.msra.mxu0 0.0
    %1835 = vmatprep.subr.mxu0 0.0
    %1836 = vmatpush2.msra.mxu0 0.0
    %1837 = vmatprep.mubr.f32.mxu0 0.0
    %1838 = vmatmul.mubr.f32.gmra.mxu0 %v1771
    %v1839 = vpop.f32.mrf.mxu0
    %v1840 = vadd.f32 0.0, %v1839
    %v1841 = vpop.f32.mrf.mxu0
    %1842 = vdwg.mxu0
    %1843 = vrot.lane.b32.xlu0 %v613, 64
    %v1844 = vpop.permute.xlu0 %1843
    %v1847 = vsel %vm616, %v1310, 0
    %1849 = vmatprep.subr.mxu0 0.0
    %1850 = vmatpush1.msra.mxu0 0.0
    %1851 = vmatprep.subr.mxu0 0.0
    %1852 = vmatpush1.msra.mxu0 0.0
    %1853 = vmatprep.subr.mxu0 0.0
    %1854 = vmatpush1.msra.mxu0 0.0
    %1855 = vmatprep.subr.mxu0 0.0
    %1856 = vmatpush1.msra.mxu0 0.0
    %1857 = vmatprep.subr.mxu0 0.0
    %1858 = vmatpush1.msra.mxu0 0.0
    %1859 = vmatprep.subr.mxu0 0.0
    %1860 = vmatpush1.msra.mxu0 0.0
    %1861 = vmatprep.subr.mxu0 0.0
    %1862 = vmatpush1.msra.mxu0 0.0
    %1863 = vmatprep.subr.mxu0 0.0
    %1864 = vmatpush1.msra.mxu0 0.0
    %1865 = vmatprep.subr.mxu0 0.0
    %1866 = vmatpush1.msra.mxu0 0.0
    %1867 = vmatprep.subr.mxu0 0.0
    %1868 = vmatpush1.msra.mxu0 0.0
    %1869 = vmatprep.subr.mxu0 0.0
    %1870 = vmatpush1.msra.mxu0 0.0
    %1871 = vmatprep.subr.mxu0 0.0
    %1872 = vmatpush1.msra.mxu0 0.0
    %1873 = vmatprep.subr.mxu0 0.0
    %1874 = vmatpush1.msra.mxu0 0.0
    %1875 = vmatprep.subr.mxu0 0.0
    %1876 = vmatpush1.msra.mxu0 0.0
    %1877 = vmatprep.subr.mxu0 0.0
    %1878 = vmatpush1.msra.mxu0 0.0
    %1879 = vmatprep.subr.mxu0 0.0
    %1880 = vmatpush1.msra.mxu0 %v1844
    %1881 = vmatprep.subr.mxu0 0.0
    %1882 = vmatpush2.msra.mxu0 0.0
    %1883 = vmatprep.subr.mxu0 0.0
    %1884 = vmatpush2.msra.mxu0 0.0
    %1885 = vmatprep.subr.mxu0 0.0
    %1886 = vmatpush2.msra.mxu0 0.0
    %1887 = vmatprep.subr.mxu0 0.0
    %1888 = vmatpush2.msra.mxu0 0.0
    %1889 = vmatprep.subr.mxu0 0.0
    %1890 = vmatpush2.msra.mxu0 0.0
    %1891 = vmatprep.subr.mxu0 0.0
    %1892 = vmatpush2.msra.mxu0 0.0
    %1893 = vmatprep.subr.mxu0 0.0
    %1894 = vmatpush2.msra.mxu0 0.0
    %1895 = vmatprep.subr.mxu0 0.0
    %1896 = vmatpush2.msra.mxu0 0.0
    %1897 = vmatprep.subr.mxu0 0.0
    %1898 = vmatpush2.msra.mxu0 0.0
    %1899 = vmatprep.subr.mxu0 0.0
    %1900 = vmatpush2.msra.mxu0 0.0
    %1901 = vmatprep.subr.mxu0 0.0
    %1902 = vmatpush2.msra.mxu0 0.0
    %1903 = vmatprep.subr.mxu0 0.0
    %1904 = vmatpush2.msra.mxu0 0.0
    %1905 = vmatprep.subr.mxu0 0.0
    %1906 = vmatpush2.msra.mxu0 0.0
    %1907 = vmatprep.subr.mxu0 0.0
    %1908 = vmatpush2.msra.mxu0 0.0
    %1909 = vmatprep.subr.mxu0 0.0
    %1910 = vmatpush2.msra.mxu0 0.0
    %1911 = vmatprep.subr.mxu0 0.0
    %1912 = vmatpush2.msra.mxu0 0.0
    %1913 = vmatprep.mubr.f32.mxu0 0.0
    %1914 = vmatmul.mubr.f32.gmra.mxu0 %v1847
    %v1915 = vpop.f32.mrf.mxu0
    %v1916 = vadd.f32 0.0, %v1915
    %v1917 = vpop.f32.mrf.mxu0
    %1918 = vdwg.mxu0
    %1921 = vrot.lane.b32.xlu0 %v1536, 8
    %v1922 = vpop.permute.xlu0 %1921
    %1923 = vrot.lane.b32.xlu0 %v1612, 8
    %v1924 = vpop.permute.xlu0 %1923
    %1929 = vrot.lane.b32.xlu0 %v1688, 16
    %v1930 = vpop.permute.xlu0 %1929
    %1931 = vrot.lane.b32.xlu0 %v1764, 16
    %v1932 = vpop.permute.xlu0 %1931
    %1937 = vrot.lane.b32.xlu0 %v1840, 24
    %v1938 = vpop.permute.xlu0 %1937
    %1939 = vrot.lane.b32.xlu0 %v1916, 24
    %v1940 = vpop.permute.xlu0 %1939
    %v1943 = vsel %vm616, %v1384, %v1922
    %v1944 = vsel %vm616, %v1460, %v1924
    %vm1945 = vcmask 130048
    %v1946 = vsel %vm1945, %v1943, %v1930
    %v1947 = vsel %vm1945, %v1944, %v1932
    %vm1948 = vcmask 195584
    %v1949 = vsel %vm1948, %v1946, %v1938
    %v1950 = vsel %vm1948, %v1947, %v1940
    %v1951 = vld [vmem:[%s9] sm:$0xff]
    %v1952 = vld [vmem:[%s9 + $0x8] sm:$0xff]
    %v1953 = vld [vmem:[%s9 + $0x10] sm:$0xff]
    %v1954 = vld [vmem:[%s9 + $0x18] sm:$0xff]
    %v1956 = vsel %vm448, %v1949, 0
    %v1959 = vsel %vm448, %v1950, 0
    %1961 = vmatprep.subr.mxu0 0.0
    %1962 = vmatpush1.msra.mxu0 0.0
    %1963 = vmatprep.subr.mxu0 0.0
    %1964 = vmatpush1.msra.mxu0 0.0
    %1965 = vmatprep.subr.mxu0 0.0
    %1966 = vmatpush1.msra.mxu0 0.0
    %1967 = vmatprep.subr.mxu0 0.0
    %1968 = vmatpush1.msra.mxu0 0.0
    %1969 = vmatprep.subr.mxu0 0.0
    %1970 = vmatpush1.msra.mxu0 0.0
    %1971 = vmatprep.subr.mxu0 0.0
    %1972 = vmatpush1.msra.mxu0 0.0
    %1973 = vmatprep.subr.mxu0 0.0
    %1974 = vmatpush1.msra.mxu0 0.0
    %1975 = vmatprep.subr.mxu0 0.0
    %1976 = vmatpush1.msra.mxu0 0.0
    %1977 = vmatprep.subr.mxu0 0.0
    %1978 = vmatpush1.msra.mxu0 0.0
    %1979 = vmatprep.subr.mxu0 0.0
    %1980 = vmatpush1.msra.mxu0 0.0
    %1981 = vmatprep.subr.mxu0 0.0
    %1982 = vmatpush1.msra.mxu0 0.0
    %1983 = vmatprep.subr.mxu0 0.0
    %1984 = vmatpush1.msra.mxu0 0.0
    %1985 = vmatprep.subr.mxu0 0.0
    %1986 = vmatpush1.msra.mxu0 %v1954
    %1987 = vmatprep.subr.mxu0 0.0
    %1988 = vmatpush1.msra.mxu0 %v1953
    %1989 = vmatprep.subr.mxu0 0.0
    %1990 = vmatpush1.msra.mxu0 %v1952
    %1991 = vmatprep.subr.mxu0 0.0
    %1992 = vmatpush1.msra.mxu0 %v1951
    %1993 = vmatprep.subr.mxu0 0.0
    %1994 = vmatpush2.msra.mxu0 0.0
    %1995 = vmatprep.subr.mxu0 0.0
    %1996 = vmatpush2.msra.mxu0 0.0
    %1997 = vmatprep.subr.mxu0 0.0
    %1998 = vmatpush2.msra.mxu0 0.0
    %1999 = vmatprep.subr.mxu0 0.0
    %2000 = vmatpush2.msra.mxu0 0.0
    %2001 = vmatprep.subr.mxu0 0.0
    %2002 = vmatpush2.msra.mxu0 0.0
    %2003 = vmatprep.subr.mxu0 0.0
    %2004 = vmatpush2.msra.mxu0 0.0
    %2005 = vmatprep.subr.mxu0 0.0
    %2006 = vmatpush2.msra.mxu0 0.0
    %2007 = vmatprep.subr.mxu0 0.0
    %2008 = vmatpush2.msra.mxu0 0.0
    %2009 = vmatprep.subr.mxu0 0.0
    %2010 = vmatpush2.msra.mxu0 0.0
    %2011 = vmatprep.subr.mxu0 0.0
    %2012 = vmatpush2.msra.mxu0 0.0
    %2013 = vmatprep.subr.mxu0 0.0
    %2014 = vmatpush2.msra.mxu0 0.0
    %2015 = vmatprep.subr.mxu0 0.0
    %2016 = vmatpush2.msra.mxu0 0.0
    %2017 = vmatprep.subr.mxu0 0.0
    %2018 = vmatpush2.msra.mxu0 0.0
    %2019 = vmatprep.subr.mxu0 0.0
    %2020 = vmatpush2.msra.mxu0 0.0
    %2021 = vmatprep.subr.mxu0 0.0
    %2022 = vmatpush2.msra.mxu0 0.0
    %2023 = vmatprep.subr.mxu0 0.0
    %2024 = vmatpush2.msra.mxu0 0.0
    %2025 = vmatprep.mubr.f32.mxu0 0.0
    %2026 = vmatmul.mubr.f32.gmra.mxu0 %v1956
    %v2027 = vpop.f32.mrf.mxu0
    %v2028 = vadd.f32 0.0, %v2027
    %v2029 = vpop.f32.mrf.mxu0
    %2030 = vmatprep.mubr.f32.mxu0 0.0
    %2031 = vmatmul.mubr.f32.gmra.mxu0 %v1959
    %v2032 = vpop.f32.mrf.mxu0
    %v2033 = vadd.f32 0.0, %v2032
    %v2034 = vpop.f32.mrf.mxu0
    %2035 = vdwg.mxu0
    %v2036 = vadd.f32 %v440, %v2028
    %v2037 = vadd.f32 %v441, %v2033
    %v2038 = vld [vmem:[%s10] sm:$0x1]
    %v2040 = vlaneseq
    %v2041 = vshrl.u32 %v2040, 7
    %v2042 = vsub.s32 0, %v2041
    %v2043 = vrot.slane %v2038, %v2042
    %v2045 = vadd.f32 %v2036, %v2043
    %v2046 = vadd.f32 %v2037, %v2043
    %v2047 = vld [vmem:[%s11] sm:$0x1]
    %v2048 = vld [vmem:[%s12] sm:$0x1]
    %v2049 = vsel %vm448, %v2045, 0.0
    %2050 = vadd.xlane.f32.xlu0 %v2049
    %v2051 = vpop.xlane.xlu0 %2050
    %v2052 = vsel %vm448, %v2046, 0.0
    %2053 = vadd.xlane.f32.xlu0 %v2052
    %v2054 = vpop.xlane.xlu0 %2053
    %v2055 = vmul.f32 %v2051, %v455
    %v2056 = vmul.f32 %v2054, %v455
    %v2057 = vsub.f32 %v2045, %v2055
    %v2058 = vsub.f32 %v2046, %v2056
    %v2059 = vmul.f32 %v2057, %v2057
    %v2060 = vmul.f32 %v2058, %v2058
    %v2061 = vsel %vm448, %v2059, 0.0
    %2062 = vadd.xlane.f32.xlu0 %v2061
    %v2063 = vpop.xlane.xlu0 %2062
    %v2064 = vsel %vm448, %v2060, 0.0
    %2065 = vadd.xlane.f32.xlu0 %v2064
    %v2066 = vpop.xlane.xlu0 %2065
    %v2067 = vmul.f32 %v2063, %v455
    %v2068 = vmul.f32 %v2066, %v455
    %v2069 = vadd.f32 %v2067, 1e-06
    %v2070 = vadd.f32 %v2068, 1e-06
    %v2071 = vrsqrt.pop %v2069
    %v2072 = vrsqrt.pop %v2070
    %v2073 = vmul.f32 %v2057, %v2071
    %v2074 = vmul.f32 %v2058, %v2072
    %v2076 = vlaneseq
    %v2077 = vshrl.u32 %v2076, 7
    %v2078 = vsub.s32 0, %v2077
    %v2079 = vrot.slane %v2047, %v2078
    %v2081 = vmul.f32 %v2073, %v2079
    %v2082 = vmul.f32 %v2074, %v2079
    %v2084 = vlaneseq
    %v2085 = vshrl.u32 %v2084, 7
    %v2086 = vsub.s32 0, %v2085
    %v2087 = vrot.slane %v2048, %v2086
    %v2089 = vadd.f32 %v2081, %v2087
    %v2090 = vadd.f32 %v2082, %v2087
    %v2091 = vld [vmem:[%s13] sm:$0xff]
    %v2092 = vld [vmem:[%s13 + $0x8] sm:$0xff]
    %v2093 = vld [vmem:[%s13 + $0x10] sm:$0xff]
    %v2094 = vld [vmem:[%s13 + $0x18] sm:$0xff]
    %v2095 = vld [vmem:[%s14] sm:$0x1]
    %v2097 = vlaneseq
    %v2098 = vshrl.u32 %v2097, 7
    %v2099 = vsub.s32 0, %v2098
    %v2100 = vrot.slane %v2095, %v2099
    %v2103 = vsel %vm448, %v2089, 0
    %v2106 = vsel %vm448, %v2090, 0
    %2108 = vmatprep.subr.mxu0 0.0
    %2109 = vmatpush1.msra.mxu0 0.0
    %2110 = vmatprep.subr.mxu0 0.0
    %2111 = vmatpush1.msra.mxu0 0.0
    %2112 = vmatprep.subr.mxu0 0.0
    %2113 = vmatpush1.msra.mxu0 0.0
    %2114 = vmatprep.subr.mxu0 0.0
    %2115 = vmatpush1.msra.mxu0 0.0
    %2116 = vmatprep.subr.mxu0 0.0
    %2117 = vmatpush1.msra.mxu0 0.0
    %2118 = vmatprep.subr.mxu0 0.0
    %2119 = vmatpush1.msra.mxu0 0.0
    %2120 = vmatprep.subr.mxu0 0.0
    %2121 = vmatpush1.msra.mxu0 0.0
    %2122 = vmatprep.subr.mxu0 0.0
    %2123 = vmatpush1.msra.mxu0 0.0
    %2124 = vmatprep.subr.mxu0 0.0
    %2125 = vmatpush1.msra.mxu0 0.0
    %2126 = vmatprep.subr.mxu0 0.0
    %2127 = vmatpush1.msra.mxu0 0.0
    %2128 = vmatprep.subr.mxu0 0.0
    %2129 = vmatpush1.msra.mxu0 0.0
    %2130 = vmatprep.subr.mxu0 0.0
    %2131 = vmatpush1.msra.mxu0 0.0
    %2132 = vmatprep.subr.mxu0 0.0
    %2133 = vmatpush1.msra.mxu0 %v2094
    %2134 = vmatprep.subr.mxu0 0.0
    %2135 = vmatpush1.msra.mxu0 %v2093
    %2136 = vmatprep.subr.mxu0 0.0
    %2137 = vmatpush1.msra.mxu0 %v2092
    %2138 = vmatprep.subr.mxu0 0.0
    %2139 = vmatpush1.msra.mxu0 %v2091
    %2140 = vmatprep.subr.mxu0 0.0
    %2141 = vmatpush2.msra.mxu0 0.0
    %2142 = vmatprep.subr.mxu0 0.0
    %2143 = vmatpush2.msra.mxu0 0.0
    %2144 = vmatprep.subr.mxu0 0.0
    %2145 = vmatpush2.msra.mxu0 0.0
    %2146 = vmatprep.subr.mxu0 0.0
    %2147 = vmatpush2.msra.mxu0 0.0
    %2148 = vmatprep.subr.mxu0 0.0
    %2149 = vmatpush2.msra.mxu0 0.0
    %2150 = vmatprep.subr.mxu0 0.0
    %2151 = vmatpush2.msra.mxu0 0.0
    %2152 = vmatprep.subr.mxu0 0.0
    %2153 = vmatpush2.msra.mxu0 0.0
    %2154 = vmatprep.subr.mxu0 0.0
    %2155 = vmatpush2.msra.mxu0 0.0
    %2156 = vmatprep.subr.mxu0 0.0
    %2157 = vmatpush2.msra.mxu0 0.0
    %2158 = vmatprep.subr.mxu0 0.0
    %2159 = vmatpush2.msra.mxu0 0.0
    %2160 = vmatprep.subr.mxu0 0.0
    %2161 = vmatpush2.msra.mxu0 0.0
    %2162 = vmatprep.subr.mxu0 0.0
    %2163 = vmatpush2.msra.mxu0 0.0
    %2164 = vmatprep.subr.mxu0 0.0
    %2165 = vmatpush2.msra.mxu0 0.0
    %2166 = vmatprep.subr.mxu0 0.0
    %2167 = vmatpush2.msra.mxu0 0.0
    %2168 = vmatprep.subr.mxu0 0.0
    %2169 = vmatpush2.msra.mxu0 0.0
    %2170 = vmatprep.subr.mxu0 0.0
    %2171 = vmatpush2.msra.mxu0 0.0
    %2172 = vmatprep.mubr.f32.mxu0 0.0
    %2173 = vmatmul.mubr.f32.gmra.mxu0 %v2103
    %v2174 = vpop.f32.mrf.mxu0
    %v2175 = vadd.f32 %v2100, %v2174
    %v2176 = vpop.f32.mrf.mxu0
    %2177 = vmatprep.mubr.f32.mxu0 0.0
    %2178 = vmatmul.mubr.f32.gmra.mxu0 %v2106
    %v2179 = vpop.f32.mrf.mxu0
    %v2180 = vadd.f32 %v2100, %v2179
    %v2181 = vpop.f32.mrf.mxu0
    %2182 = vdwg.mxu0
    %v2183 = vmul.f32 %v2175, 0.5
    %v2184 = vmul.f32 %v2180, 0.5
    %v2185 = vmul.f32 %v2175, 0.044715
    %v2186 = vmul.f32 %v2180, 0.044715
    %v2187 = vmul.f32 %v2185, %v2175
    %v2188 = vmul.f32 %v2186, %v2180
    %v2189 = vmul.f32 %v2187, %v2175
    %v2190 = vmul.f32 %v2188, %v2180
    %v2191 = vadd.f32 %v2175, %v2189
    %v2192 = vadd.f32 %v2180, %v2190
    %v2193 = vmul.f32 %v2191, 0.7978846
    %v2194 = vmul.f32 %v2192, 0.7978846
    %v2195 = vtanh.pop %v2193
    %v2196 = vtanh.pop %v2194
    %v2197 = vadd.f32 %v2195, 1.0
    %v2198 = vadd.f32 %v2196, 1.0
    %v2199 = vmul.f32 %v2183, %v2197
    %v2200 = vmul.f32 %v2184, %v2198
    %v2201 = vld [vmem:[%s15] sm:$0xff]
    %v2202 = vld [vmem:[%s15 + $0x8] sm:$0xff]
    %v2203 = vld [vmem:[%s15 + $0x10] sm:$0xff]
    %v2204 = vld [vmem:[%s15 + $0x18] sm:$0xff]
    %v2205 = vld [vmem:[%s15 + $0x20] sm:$0xff]
    %v2206 = vld [vmem:[%s15 + $0x28] sm:$0xff]
    %v2207 = vld [vmem:[%s15 + $0x30] sm:$0xff]
    %v2208 = vld [vmem:[%s15 + $0x38] sm:$0xff]
    %vm2209 = vcmask 523264
    %v2211 = vsel %vm2209, %v2199, 0
    %v2214 = vsel %vm2209, %v2200, 0
    %2216 = vmatprep.subr.mxu0 0.0
    %2217 = vmatpush1.msra.mxu0 0.0
    %2218 = vmatprep.subr.mxu0 0.0
    %2219 = vmatpush1.msra.mxu0 0.0
    %2220 = vmatprep.subr.mxu0 0.0
    %2221 = vmatpush1.msra.mxu0 0.0
    %2222 = vmatprep.subr.mxu0 0.0
    %2223 = vmatpush1.msra.mxu0 0.0
    %2224 = vmatprep.subr.mxu0 0.0
    %2225 = vmatpush1.msra.mxu0 0.0
    %2226 = vmatprep.subr.mxu0 0.0
    %2227 = vmatpush1.msra.mxu0 0.0
    %2228 = vmatprep.subr.mxu0 0.0
    %2229 = vmatpush1.msra.mxu0 0.0
    %2230 = vmatprep.subr.mxu0 0.0
    %2231 = vmatpush1.msra.mxu0 0.0
    %2232 = vmatprep.subr.mxu0 0.0
    %2233 = vmatpush1.msra.mxu0 %v2208
    %2234 = vmatprep.subr.mxu0 0.0
    %2235 = vmatpush1.msra.mxu0 %v2207
    %2236 = vmatprep.subr.mxu0 0.0
    %2237 = vmatpush1.msra.mxu0 %v2206
    %2238 = vmatprep.subr.mxu0 0.0
    %2239 = vmatpush1.msra.mxu0 %v2205
    %2240 = vmatprep.subr.mxu0 0.0
    %2241 = vmatpush1.msra.mxu0 %v2204
    %2242 = vmatprep.subr.mxu0 0.0
    %2243 = vmatpush1.msra.mxu0 %v2203
    %2244 = vmatprep.subr.mxu0 0.0
    %2245 = vmatpush1.msra.mxu0 %v2202
    %2246 = vmatprep.subr.mxu0 0.0
    %2247 = vmatpush1.msra.mxu0 %v2201
    %2248 = vmatprep.subr.mxu0 0.0
    %2249 = vmatpush2.msra.mxu0 0.0
    %2250 = vmatprep.subr.mxu0 0.0
    %2251 = vmatpush2.msra.mxu0 0.0
    %2252 = vmatprep.subr.mxu0 0.0
    %2253 = vmatpush2.msra.mxu0 0.0
    %2254 = vmatprep.subr.mxu0 0.0
    %2255 = vmatpush2.msra.mxu0 0.0
    %2256 = vmatprep.subr.mxu0 0.0
    %2257 = vmatpush2.msra.mxu0 0.0
    %2258 = vmatprep.subr.mxu0 0.0
    %2259 = vmatpush2.msra.mxu0 0.0
    %2260 = vmatprep.subr.mxu0 0.0
    %2261 = vmatpush2.msra.mxu0 0.0
    %2262 = vmatprep.subr.mxu0 0.0
    %2263 = vmatpush2.msra.mxu0 0.0
    %2264 = vmatprep.subr.mxu0 0.0
    %2265 = vmatpush2.msra.mxu0 0.0
    %2266 = vmatprep.subr.mxu0 0.0
    %2267 = vmatpush2.msra.mxu0 0.0
    %2268 = vmatprep.subr.mxu0 0.0
    %2269 = vmatpush2.msra.mxu0 0.0
    %2270 = vmatprep.subr.mxu0 0.0
    %2271 = vmatpush2.msra.mxu0 0.0
    %2272 = vmatprep.subr.mxu0 0.0
    %2273 = vmatpush2.msra.mxu0 0.0
    %2274 = vmatprep.subr.mxu0 0.0
    %2275 = vmatpush2.msra.mxu0 0.0
    %2276 = vmatprep.subr.mxu0 0.0
    %2277 = vmatpush2.msra.mxu0 0.0
    %2278 = vmatprep.subr.mxu0 0.0
    %2279 = vmatpush2.msra.mxu0 0.0
    %2280 = vmatprep.mubr.f32.mxu0 0.0
    %2281 = vmatmul.mubr.f32.gmra.mxu0 %v2211
    %v2282 = vpop.f32.mrf.mxu0
    %v2283 = vadd.f32 0.0, %v2282
    %v2284 = vpop.f32.mrf.mxu0
    %2285 = vmatprep.mubr.f32.mxu0 0.0
    %2286 = vmatmul.mubr.f32.gmra.mxu0 %v2214
    %v2287 = vpop.f32.mrf.mxu0
    %v2288 = vadd.f32 0.0, %v2287
    %v2289 = vpop.f32.mrf.mxu0
    %2290 = vdwg.mxu0
    %v2291 = vadd.f32 %v2045, %v2283
    %v2292 = vadd.f32 %v2046, %v2288
    %v2293 = vld [vmem:[%s16] sm:$0x1]
    %v2295 = vlaneseq
    %v2296 = vshrl.u32 %v2295, 7
    %v2297 = vsub.s32 0, %v2296
    %v2298 = vrot.slane %v2293, %v2297
    %v2300 = vadd.f32 %v2291, %v2298
    %v2301 = vadd.f32 %v2292, %v2298
    %s2302 = scalar_lea.vmem %s5, 1
    %v2303 = vld [vmem:[%s2302] sm:$0x1]
    %s2304 = scalar_lea.vmem %s6, 1
    %v2305 = vld [vmem:[%s2304] sm:$0x1]
    %v2306 = vsel %vm448, %v2300, 0.0
    %2307 = vadd.xlane.f32.xlu0 %v2306
    %v2308 = vpop.xlane.xlu0 %2307
    %v2309 = vsel %vm448, %v2301, 0.0
    %2310 = vadd.xlane.f32.xlu0 %v2309
    %v2311 = vpop.xlane.xlu0 %2310
    %v2312 = vmul.f32 %v2308, %v455
    %v2313 = vmul.f32 %v2311, %v455
    %v2314 = vsub.f32 %v2300, %v2312
    %v2315 = vsub.f32 %v2301, %v2313
    %v2316 = vmul.f32 %v2314, %v2314
    %v2317 = vmul.f32 %v2315, %v2315
    %v2318 = vsel %vm448, %v2316, 0.0
    %2319 = vadd.xlane.f32.xlu0 %v2318
    %v2320 = vpop.xlane.xlu0 %2319
    %v2321 = vsel %vm448, %v2317, 0.0
    %2322 = vadd.xlane.f32.xlu0 %v2321
    %v2323 = vpop.xlane.xlu0 %2322
    %v2324 = vmul.f32 %v2320, %v455
    %v2325 = vmul.f32 %v2323, %v455
    %v2326 = vadd.f32 %v2324, 1e-06
    %v2327 = vadd.f32 %v2325, 1e-06
    %v2328 = vrsqrt.pop %v2326
    %v2329 = vrsqrt.pop %v2327
    %v2330 = vmul.f32 %v2314, %v2328
    %v2331 = vmul.f32 %v2315, %v2329
    %v2333 = vlaneseq
    %v2334 = vshrl.u32 %v2333, 7
    %v2335 = vsub.s32 0, %v2334
    %v2336 = vrot.slane %v2303, %v2335
    %v2338 = vmul.f32 %v2330, %v2336
    %v2339 = vmul.f32 %v2331, %v2336
    %v2341 = vlaneseq
    %v2342 = vshrl.u32 %v2341, 7
    %v2343 = vsub.s32 0, %v2342
    %v2344 = vrot.slane %v2305, %v2343
    %v2346 = vadd.f32 %v2338, %v2344
    %v2347 = vadd.f32 %v2339, %v2344
    %s2348 = scalar_lea.vmem %s7, 32
    %v2349 = vld [vmem:[%s2348] sm:$0xff]
    %v2350 = vld [vmem:[%s2348 + $0x8] sm:$0xff]
    %v2351 = vld [vmem:[%s2348 + $0x10] sm:$0xff]
    %v2352 = vld [vmem:[%s2348 + $0x18] sm:$0xff]
    %s2353 = scalar_lea.vmem %s8, 1
    %v2354 = vld [vmem:[%s2353] sm:$0x1]
    %v2356 = vlaneseq
    %v2357 = vshrl.u32 %v2356, 7
    %v2358 = vsub.s32 0, %v2357
    %v2359 = vrot.slane %v2354, %v2358
    %v2362 = vsel %vm448, %v2346, 0
    %v2365 = vsel %vm448, %v2347, 0
    %2367 = vmatprep.subr.mxu0 0.0
    %2368 = vmatpush1.msra.mxu0 0.0
    %2369 = vmatprep.subr.mxu0 0.0
    %2370 = vmatpush1.msra.mxu0 0.0
    %2371 = vmatprep.subr.mxu0 0.0
    %2372 = vmatpush1.msra.mxu0 0.0
    %2373 = vmatprep.subr.mxu0 0.0
    %2374 = vmatpush1.msra.mxu0 0.0
    %2375 = vmatprep.subr.mxu0 0.0
    %2376 = vmatpush1.msra.mxu0 0.0
    %2377 = vmatprep.subr.mxu0 0.0
    %2378 = vmatpush1.msra.mxu0 0.0
    %2379 = vmatprep.subr.mxu0 0.0
    %2380 = vmatpush1.msra.mxu0 0.0
    %2381 = vmatprep.subr.mxu0 0.0
    %2382 = vmatpush1.msra.mxu0 0.0
    %2383 = vmatprep.subr.mxu0 0.0
    %2384 = vmatpush1.msra.mxu0 0.0
    %2385 = vmatprep.subr.mxu0 0.0
    %2386 = vmatpush1.msra.mxu0 0.0
    %2387 = vmatprep.subr.mxu0 0.0
    %2388 = vmatpush1.msra.mxu0 0.0
    %2389 = vmatprep.subr.mxu0 0.0
    %2390 = vmatpush1.msra.mxu0 0.0
    %2391 = vmatprep.subr.mxu0 0.0
    %2392 = vmatpush1.msra.mxu0 %v2352
    %2393 = vmatprep.subr.mxu0 0.0
    %2394 = vmatpush1.msra.mxu0 %v2351
    %2395 = vmatprep.subr.mxu0 0.0
    %2396 = vmatpush1.msra.mxu0 %v2350
    %2397 = vmatprep.subr.mxu0 0.0
    %2398 = vmatpush1.msra.mxu0 %v2349
    %2399 = vmatprep.subr.mxu0 0.0
    %2400 = vmatpush2.msra.mxu0 0.0
    %2401 = vmatprep.subr.mxu0 0.0
    %2402 = vmatpush2.msra.mxu0 0.0
    %2403 = vmatprep.subr.mxu0 0.0
    %2404 = vmatpush2.msra.mxu0 0.0
    %2405 = vmatprep.subr.mxu0 0.0
    %2406 = vmatpush2.msra.mxu0 0.0
    %2407 = vmatprep.subr.mxu0 0.0
    %2408 = vmatpush2.msra.mxu0 0.0
    %2409 = vmatprep.subr.mxu0 0.0
    %2410 = vmatpush2.msra.mxu0 0.0
    %2411 = vmatprep.subr.mxu0 0.0
    %2412 = vmatpush2.msra.mxu0 0.0
    %2413 = vmatprep.subr.mxu0 0.0
    %2414 = vmatpush2.msra.mxu0 0.0
    %2415 = vmatprep.subr.mxu0 0.0
    %2416 = vmatpush2.msra.mxu0 0.0
    %2417 = vmatprep.subr.mxu0 0.0
    %2418 = vmatpush2.msra.mxu0 0.0
    %2419 = vmatprep.subr.mxu0 0.0
    %2420 = vmatpush2.msra.mxu0 0.0
    %2421 = vmatprep.subr.mxu0 0.0
    %2422 = vmatpush2.msra.mxu0 0.0
    %2423 = vmatprep.subr.mxu0 0.0
    %2424 = vmatpush2.msra.mxu0 0.0
    %2425 = vmatprep.subr.mxu0 0.0
    %2426 = vmatpush2.msra.mxu0 0.0
    %2427 = vmatprep.subr.mxu0 0.0
    %2428 = vmatpush2.msra.mxu0 0.0
    %2429 = vmatprep.subr.mxu0 0.0
    %2430 = vmatpush2.msra.mxu0 0.0
    %2431 = vmatprep.mubr.f32.mxu0 0.0
    %2432 = vmatmul.mubr.f32.gmra.mxu0 %v2362
    %v2433 = vpop.f32.mrf.mxu0
    %v2434 = vadd.f32 %v2359, %v2433
    %v2435 = vpop.f32.mrf.mxu0
    %2436 = vmatprep.mubr.f32.mxu0 0.0
    %2437 = vmatmul.mubr.f32.gmra.mxu0 %v2365
    %v2438 = vpop.f32.mrf.mxu0
    %v2439 = vadd.f32 %v2359, %v2438
    %v2440 = vpop.f32.mrf.mxu0
    %2441 = vdwg.mxu0
    %v2442 = vmul.f32 %v2434, 0.35355338
    %v2443 = vmul.f32 %v2439, 0.35355338
    %2446 = vrot.lane.b32.xlu0 %v2442, 120
    %v2447 = vpop.permute.xlu0 %2446
    %2448 = vrot.lane.b32.xlu0 %v2443, 120
    %v2449 = vpop.permute.xlu0 %2448
    %2450 = vrot.lane.b32.xlu0 %v2442, 112
    %v2451 = vpop.permute.xlu0 %2450
    %2452 = vrot.lane.b32.xlu0 %v2443, 112
    %v2453 = vpop.permute.xlu0 %2452
    %2454 = vrot.lane.b32.xlu0 %v2442, 104
    %v2455 = vpop.permute.xlu0 %2454
    %2456 = vrot.lane.b32.xlu0 %v2443, 104
    %v2457 = vpop.permute.xlu0 %2456
    %2460 = vrot.lane.b32.xlu0 %v2434, 120
    %v2461 = vpop.permute.xlu0 %2460
    %2462 = vrot.lane.b32.xlu0 %v2439, 120
    %v2463 = vpop.permute.xlu0 %2462
    %2464 = vrot.lane.b32.xlu0 %v2434, 112
    %v2465 = vpop.permute.xlu0 %2464
    %2466 = vrot.lane.b32.xlu0 %v2439, 112
    %v2467 = vpop.permute.xlu0 %2466
    %2468 = vrot.lane.b32.xlu0 %v2434, 104
    %v2469 = vpop.permute.xlu0 %2468
    %2470 = vrot.lane.b32.xlu0 %v2439, 104
    %v2471 = vpop.permute.xlu0 %2470
    %2472 = vrot.lane.b32.xlu0 %v2434, 96
    %v2473 = vpop.permute.xlu0 %2472
    %v2474 = vsel %vm616, %v2442, 0
    %v2476 = vsel %vm616, %v2473, 0
    %2478 = vmatprep.subr.mxu0 0.0
    %2479 = vmatpush1.xpose.msra.mxu0 0.0
    %2480 = vmatprep.subr.mxu0 0.0
    %2481 = vmatpush1.xpose.msra.mxu0 0.0
    %2482 = vmatprep.subr.mxu0 0.0
    %2483 = vmatpush1.xpose.msra.mxu0 0.0
    %2484 = vmatprep.subr.mxu0 0.0
    %2485 = vmatpush1.xpose.msra.mxu0 0.0
    %2486 = vmatprep.subr.mxu0 0.0
    %2487 = vmatpush1.xpose.msra.mxu0 0.0
    %2488 = vmatprep.subr.mxu0 0.0
    %2489 = vmatpush1.xpose.msra.mxu0 0.0
    %2490 = vmatprep.subr.mxu0 0.0
    %2491 = vmatpush1.xpose.msra.mxu0 0.0
    %2492 = vmatprep.subr.mxu0 0.0
    %2493 = vmatpush1.xpose.msra.mxu0 0.0
    %2494 = vmatprep.subr.mxu0 0.0
    %2495 = vmatpush1.xpose.msra.mxu0 0.0
    %2496 = vmatprep.subr.mxu0 0.0
    %2497 = vmatpush1.xpose.msra.mxu0 0.0
    %2498 = vmatprep.subr.mxu0 0.0
    %2499 = vmatpush1.xpose.msra.mxu0 0.0
    %2500 = vmatprep.subr.mxu0 0.0
    %2501 = vmatpush1.xpose.msra.mxu0 0.0
    %2502 = vmatprep.subr.mxu0 0.0
    %2503 = vmatpush1.xpose.msra.mxu0 0.0
    %2504 = vmatprep.subr.mxu0 0.0
    %2505 = vmatpush1.xpose.msra.mxu0 0.0
    %2506 = vmatprep.subr.mxu0 0.0
    %2507 = vmatpush1.xpose.msra.mxu0 0.0
    %2508 = vmatprep.subr.mxu0 0.0
    %2509 = vmatpush1.xpose.msra.mxu0 %v2476
    %2510 = vmatprep.subr.mxu0 0.0
    %2511 = vmatpush2.xpose.msra.mxu0 0.0
    %2512 = vmatprep.subr.mxu0 0.0
    %2513 = vmatpush2.xpose.msra.mxu0 0.0
    %2514 = vmatprep.subr.mxu0 0.0
    %2515 = vmatpush2.xpose.msra.mxu0 0.0
    %2516 = vmatprep.subr.mxu0 0.0
    %2517 = vmatpush2.xpose.msra.mxu0 0.0
    %2518 = vmatprep.subr.mxu0 0.0
    %2519 = vmatpush2.xpose.msra.mxu0 0.0
    %2520 = vmatprep.subr.mxu0 0.0
    %2521 = vmatpush2.xpose.msra.mxu0 0.0
    %2522 = vmatprep.subr.mxu0 0.0
    %2523 = vmatpush2.xpose.msra.mxu0 0.0
    %2524 = vmatprep.subr.mxu0 0.0
    %2525 = vmatpush2.xpose.msra.mxu0 0.0
    %2526 = vmatprep.subr.mxu0 0.0
    %2527 = vmatpush2.xpose.msra.mxu0 0.0
    %2528 = vmatprep.subr.mxu0 0.0
    %2529 = vmatpush2.xpose.msra.mxu0 0.0
    %2530 = vmatprep.subr.mxu0 0.0
    %2531 = vmatpush2.xpose.msra.mxu0 0.0
    %2532 = vmatprep.subr.mxu0 0.0
    %2533 = vmatpush2.xpose.msra.mxu0 0.0
    %2534 = vmatprep.subr.mxu0 0.0
    %2535 = vmatpush2.xpose.msra.mxu0 0.0
    %2536 = vmatprep.subr.mxu0 0.0
    %2537 = vmatpush2.xpose.msra.mxu0 0.0
    %2538 = vmatprep.subr.mxu0 0.0
    %2539 = vmatpush2.xpose.msra.mxu0 0.0
    %2540 = vmatprep.subr.mxu0 0.0
    %2541 = vmatpush2.xpose.msra.mxu0 0.0
    %2542 = vmatprep.mubr.f32.mxu0 0.0
    %2543 = vmatmul.mubr.f32.gmra.mxu0 %v2474
    %v2544 = vpop.f32.mrf.mxu0
    %v2545 = vadd.f32 %v445, %v2544
    %v2546 = vpop.f32.mrf.mxu0
    %2547 = vdwg.mxu0
    %2548 = vrot.lane.b32.xlu0 %v2439, 96
    %v2549 = vpop.permute.xlu0 %2548
    %v2550 = vsel %vm616, %v2443, 0
    %v2552 = vsel %vm616, %v2549, 0
    %2554 = vmatprep.subr.mxu0 0.0
    %2555 = vmatpush1.xpose.msra.mxu0 0.0
    %2556 = vmatprep.subr.mxu0 0.0
    %2557 = vmatpush1.xpose.msra.mxu0 0.0
    %2558 = vmatprep.subr.mxu0 0.0
    %2559 = vmatpush1.xpose.msra.mxu0 0.0
    %2560 = vmatprep.subr.mxu0 0.0
    %2561 = vmatpush1.xpose.msra.mxu0 0.0
    %2562 = vmatprep.subr.mxu0 0.0
    %2563 = vmatpush1.xpose.msra.mxu0 0.0
    %2564 = vmatprep.subr.mxu0 0.0
    %2565 = vmatpush1.xpose.msra.mxu0 0.0
    %2566 = vmatprep.subr.mxu0 0.0
    %2567 = vmatpush1.xpose.msra.mxu0 0.0
    %2568 = vmatprep.subr.mxu0 0.0
    %2569 = vmatpush1.xpose.msra.mxu0 0.0
    %2570 = vmatprep.subr.mxu0 0.0
    %2571 = vmatpush1.xpose.msra.mxu0 0.0
    %2572 = vmatprep.subr.mxu0 0.0
    %2573 = vmatpush1.xpose.msra.mxu0 0.0
    %2574 = vmatprep.subr.mxu0 0.0
    %2575 = vmatpush1.xpose.msra.mxu0 0.0
    %2576 = vmatprep.subr.mxu0 0.0
    %2577 = vmatpush1.xpose.msra.mxu0 0.0
    %2578 = vmatprep.subr.mxu0 0.0
    %2579 = vmatpush1.xpose.msra.mxu0 0.0
    %2580 = vmatprep.subr.mxu0 0.0
    %2581 = vmatpush1.xpose.msra.mxu0 0.0
    %2582 = vmatprep.subr.mxu0 0.0
    %2583 = vmatpush1.xpose.msra.mxu0 0.0
    %2584 = vmatprep.subr.mxu0 0.0
    %2585 = vmatpush1.xpose.msra.mxu0 %v2552
    %2586 = vmatprep.subr.mxu0 0.0
    %2587 = vmatpush2.xpose.msra.mxu0 0.0
    %2588 = vmatprep.subr.mxu0 0.0
    %2589 = vmatpush2.xpose.msra.mxu0 0.0
    %2590 = vmatprep.subr.mxu0 0.0
    %2591 = vmatpush2.xpose.msra.mxu0 0.0
    %2592 = vmatprep.subr.mxu0 0.0
    %2593 = vmatpush2.xpose.msra.mxu0 0.0
    %2594 = vmatprep.subr.mxu0 0.0
    %2595 = vmatpush2.xpose.msra.mxu0 0.0
    %2596 = vmatprep.subr.mxu0 0.0
    %2597 = vmatpush2.xpose.msra.mxu0 0.0
    %2598 = vmatprep.subr.mxu0 0.0
    %2599 = vmatpush2.xpose.msra.mxu0 0.0
    %2600 = vmatprep.subr.mxu0 0.0
    %2601 = vmatpush2.xpose.msra.mxu0 0.0
    %2602 = vmatprep.subr.mxu0 0.0
    %2603 = vmatpush2.xpose.msra.mxu0 0.0
    %2604 = vmatprep.subr.mxu0 0.0
    %2605 = vmatpush2.xpose.msra.mxu0 0.0
    %2606 = vmatprep.subr.mxu0 0.0
    %2607 = vmatpush2.xpose.msra.mxu0 0.0
    %2608 = vmatprep.subr.mxu0 0.0
    %2609 = vmatpush2.xpose.msra.mxu0 0.0
    %2610 = vmatprep.subr.mxu0 0.0
    %2611 = vmatpush2.xpose.msra.mxu0 0.0
    %2612 = vmatprep.subr.mxu0 0.0
    %2613 = vmatpush2.xpose.msra.mxu0 0.0
    %2614 = vmatprep.subr.mxu0 0.0
    %2615 = vmatpush2.xpose.msra.mxu0 0.0
    %2616 = vmatprep.subr.mxu0 0.0
    %2617 = vmatpush2.xpose.msra.mxu0 0.0
    %2618 = vmatprep.mubr.f32.mxu0 0.0
    %2619 = vmatmul.mubr.f32.gmra.mxu0 %v2550
    %v2620 = vpop.f32.mrf.mxu0
    %v2621 = vadd.f32 %v445, %v2620
    %v2622 = vpop.f32.mrf.mxu0
    %2623 = vdwg.mxu0
    %2624 = vrot.lane.b32.xlu0 %v2461, 96
    %v2625 = vpop.permute.xlu0 %2624
    %v2626 = vsel %vm616, %v2447, 0
    %v2628 = vsel %vm616, %v2625, 0
    %2630 = vmatprep.subr.mxu0 0.0
    %2631 = vmatpush1.xpose.msra.mxu0 0.0
    %2632 = vmatprep.subr.mxu0 0.0
    %2633 = vmatpush1.xpose.msra.mxu0 0.0
    %2634 = vmatprep.subr.mxu0 0.0
    %2635 = vmatpush1.xpose.msra.mxu0 0.0
    %2636 = vmatprep.subr.mxu0 0.0
    %2637 = vmatpush1.xpose.msra.mxu0 0.0
    %2638 = vmatprep.subr.mxu0 0.0
    %2639 = vmatpush1.xpose.msra.mxu0 0.0
    %2640 = vmatprep.subr.mxu0 0.0
    %2641 = vmatpush1.xpose.msra.mxu0 0.0
    %2642 = vmatprep.subr.mxu0 0.0
    %2643 = vmatpush1.xpose.msra.mxu0 0.0
    %2644 = vmatprep.subr.mxu0 0.0
    %2645 = vmatpush1.xpose.msra.mxu0 0.0
    %2646 = vmatprep.subr.mxu0 0.0
    %2647 = vmatpush1.xpose.msra.mxu0 0.0
    %2648 = vmatprep.subr.mxu0 0.0
    %2649 = vmatpush1.xpose.msra.mxu0 0.0
    %2650 = vmatprep.subr.mxu0 0.0
    %2651 = vmatpush1.xpose.msra.mxu0 0.0
    %2652 = vmatprep.subr.mxu0 0.0
    %2653 = vmatpush1.xpose.msra.mxu0 0.0
    %2654 = vmatprep.subr.mxu0 0.0
    %2655 = vmatpush1.xpose.msra.mxu0 0.0
    %2656 = vmatprep.subr.mxu0 0.0
    %2657 = vmatpush1.xpose.msra.mxu0 0.0
    %2658 = vmatprep.subr.mxu0 0.0
    %2659 = vmatpush1.xpose.msra.mxu0 0.0
    %2660 = vmatprep.subr.mxu0 0.0
    %2661 = vmatpush1.xpose.msra.mxu0 %v2628
    %2662 = vmatprep.subr.mxu0 0.0
    %2663 = vmatpush2.xpose.msra.mxu0 0.0
    %2664 = vmatprep.subr.mxu0 0.0
    %2665 = vmatpush2.xpose.msra.mxu0 0.0
    %2666 = vmatprep.subr.mxu0 0.0
    %2667 = vmatpush2.xpose.msra.mxu0 0.0
    %2668 = vmatprep.subr.mxu0 0.0
    %2669 = vmatpush2.xpose.msra.mxu0 0.0
    %2670 = vmatprep.subr.mxu0 0.0
    %2671 = vmatpush2.xpose.msra.mxu0 0.0
    %2672 = vmatprep.subr.mxu0 0.0
    %2673 = vmatpush2.xpose.msra.mxu0 0.0
    %2674 = vmatprep.subr.mxu0 0.0
    %2675 = vmatpush2.xpose.msra.mxu0 0.0
    %2676 = vmatprep.subr.mxu0 0.0
    %2677 = vmatpush2.xpose.msra.mxu0 0.0
    %2678 = vmatprep.subr.mxu0 0.0
    %2679 = vmatpush2.xpose.msra.mxu0 0.0
    %2680 = vmatprep.subr.mxu0 0.0
    %2681 = vmatpush2.xpose.msra.mxu0 0.0
    %2682 = vmatprep.subr.mxu0 0.0
    %2683 = vmatpush2.xpose.msra.mxu0 0.0
    %2684 = vmatprep.subr.mxu0 0.0
    %2685 = vmatpush2.xpose.msra.mxu0 0.0
    %2686 = vmatprep.subr.mxu0 0.0
    %2687 = vmatpush2.xpose.msra.mxu0 0.0
    %2688 = vmatprep.subr.mxu0 0.0
    %2689 = vmatpush2.xpose.msra.mxu0 0.0
    %2690 = vmatprep.subr.mxu0 0.0
    %2691 = vmatpush2.xpose.msra.mxu0 0.0
    %2692 = vmatprep.subr.mxu0 0.0
    %2693 = vmatpush2.xpose.msra.mxu0 0.0
    %2694 = vmatprep.mubr.f32.mxu0 0.0
    %2695 = vmatmul.mubr.f32.gmra.mxu0 %v2626
    %v2696 = vpop.f32.mrf.mxu0
    %v2697 = vadd.f32 %v445, %v2696
    %v2698 = vpop.f32.mrf.mxu0
    %2699 = vdwg.mxu0
    %2700 = vrot.lane.b32.xlu0 %v2463, 96
    %v2701 = vpop.permute.xlu0 %2700
    %v2702 = vsel %vm616, %v2449, 0
    %v2704 = vsel %vm616, %v2701, 0
    %2706 = vmatprep.subr.mxu0 0.0
    %2707 = vmatpush1.xpose.msra.mxu0 0.0
    %2708 = vmatprep.subr.mxu0 0.0
    %2709 = vmatpush1.xpose.msra.mxu0 0.0
    %2710 = vmatprep.subr.mxu0 0.0
    %2711 = vmatpush1.xpose.msra.mxu0 0.0
    %2712 = vmatprep.subr.mxu0 0.0
    %2713 = vmatpush1.xpose.msra.mxu0 0.0
    %2714 = vmatprep.subr.mxu0 0.0
    %2715 = vmatpush1.xpose.msra.mxu0 0.0
    %2716 = vmatprep.subr.mxu0 0.0
    %2717 = vmatpush1.xpose.msra.mxu0 0.0
    %2718 = vmatprep.subr.mxu0 0.0
    %2719 = vmatpush1.xpose.msra.mxu0 0.0
    %2720 = vmatprep.subr.mxu0 0.0
    %2721 = vmatpush1.xpose.msra.mxu0 0.0
    %2722 = vmatprep.subr.mxu0 0.0
    %2723 = vmatpush1.xpose.msra.mxu0 0.0
    %2724 = vmatprep.subr.mxu0 0.0
    %2725 = vmatpush1.xpose.msra.mxu0 0.0
    %2726 = vmatprep.subr.mxu0 0.0
    %2727 = vmatpush1.xpose.msra.mxu0 0.0
    %2728 = vmatprep.subr.mxu0 0.0
    %2729 = vmatpush1.xpose.msra.mxu0 0.0
    %2730 = vmatprep.subr.mxu0 0.0
    %2731 = vmatpush1.xpose.msra.mxu0 0.0
    %2732 = vmatprep.subr.mxu0 0.0
    %2733 = vmatpush1.xpose.msra.mxu0 0.0
    %2734 = vmatprep.subr.mxu0 0.0
    %2735 = vmatpush1.xpose.msra.mxu0 0.0
    %2736 = vmatprep.subr.mxu0 0.0
    %2737 = vmatpush1.xpose.msra.mxu0 %v2704
    %2738 = vmatprep.subr.mxu0 0.0
    %2739 = vmatpush2.xpose.msra.mxu0 0.0
    %2740 = vmatprep.subr.mxu0 0.0
    %2741 = vmatpush2.xpose.msra.mxu0 0.0
    %2742 = vmatprep.subr.mxu0 0.0
    %2743 = vmatpush2.xpose.msra.mxu0 0.0
    %2744 = vmatprep.subr.mxu0 0.0
    %2745 = vmatpush2.xpose.msra.mxu0 0.0
    %2746 = vmatprep.subr.mxu0 0.0
    %2747 = vmatpush2.xpose.msra.mxu0 0.0
    %2748 = vmatprep.subr.mxu0 0.0
    %2749 = vmatpush2.xpose.msra.mxu0 0.0
    %2750 = vmatprep.subr.mxu0 0.0
    %2751 = vmatpush2.xpose.msra.mxu0 0.0
    %2752 = vmatprep.subr.mxu0 0.0
    %2753 = vmatpush2.xpose.msra.mxu0 0.0
    %2754 = vmatprep.subr.mxu0 0.0
    %2755 = vmatpush2.xpose.msra.mxu0 0.0
    %2756 = vmatprep.subr.mxu0 0.0
    %2757 = vmatpush2.xpose.msra.mxu0 0.0
    %2758 = vmatprep.subr.mxu0 0.0
    %2759 = vmatpush2.xpose.msra.mxu0 0.0
    %2760 = vmatprep.subr.mxu0 0.0
    %2761 = vmatpush2.xpose.msra.mxu0 0.0
    %2762 = vmatprep.subr.mxu0 0.0
    %2763 = vmatpush2.xpose.msra.mxu0 0.0
    %2764 = vmatprep.subr.mxu0 0.0
    %2765 = vmatpush2.xpose.msra.mxu0 0.0
    %2766 = vmatprep.subr.mxu0 0.0
    %2767 = vmatpush2.xpose.msra.mxu0 0.0
    %2768 = vmatprep.subr.mxu0 0.0
    %2769 = vmatpush2.xpose.msra.mxu0 0.0
    %2770 = vmatprep.mubr.f32.mxu0 0.0
    %2771 = vmatmul.mubr.f32.gmra.mxu0 %v2702
    %v2772 = vpop.f32.mrf.mxu0
    %v2773 = vadd.f32 %v445, %v2772
    %v2774 = vpop.f32.mrf.mxu0
    %2775 = vdwg.mxu0
    %2776 = vrot.lane.b32.xlu0 %v2465, 96
    %v2777 = vpop.permute.xlu0 %2776
    %v2778 = vsel %vm616, %v2451, 0
    %v2780 = vsel %vm616, %v2777, 0
    %2782 = vmatprep.subr.mxu0 0.0
    %2783 = vmatpush1.xpose.msra.mxu0 0.0
    %2784 = vmatprep.subr.mxu0 0.0
    %2785 = vmatpush1.xpose.msra.mxu0 0.0
    %2786 = vmatprep.subr.mxu0 0.0
    %2787 = vmatpush1.xpose.msra.mxu0 0.0
    %2788 = vmatprep.subr.mxu0 0.0
    %2789 = vmatpush1.xpose.msra.mxu0 0.0
    %2790 = vmatprep.subr.mxu0 0.0
    %2791 = vmatpush1.xpose.msra.mxu0 0.0
    %2792 = vmatprep.subr.mxu0 0.0
    %2793 = vmatpush1.xpose.msra.mxu0 0.0
    %2794 = vmatprep.subr.mxu0 0.0
    %2795 = vmatpush1.xpose.msra.mxu0 0.0
    %2796 = vmatprep.subr.mxu0 0.0
    %2797 = vmatpush1.xpose.msra.mxu0 0.0
    %2798 = vmatprep.subr.mxu0 0.0
    %2799 = vmatpush1.xpose.msra.mxu0 0.0
    %2800 = vmatprep.subr.mxu0 0.0
    %2801 = vmatpush1.xpose.msra.mxu0 0.0
    %2802 = vmatprep.subr.mxu0 0.0
    %2803 = vmatpush1.xpose.msra.mxu0 0.0
    %2804 = vmatprep.subr.mxu0 0.0
    %2805 = vmatpush1.xpose.msra.mxu0 0.0
    %2806 = vmatprep.subr.mxu0 0.0
    %2807 = vmatpush1.xpose.msra.mxu0 0.0
    %2808 = vmatprep.subr.mxu0 0.0
    %2809 = vmatpush1.xpose.msra.mxu0 0.0
    %2810 = vmatprep.subr.mxu0 0.0
    %2811 = vmatpush1.xpose.msra.mxu0 0.0
    %2812 = vmatprep.subr.mxu0 0.0
    %2813 = vmatpush1.xpose.msra.mxu0 %v2780
    %2814 = vmatprep.subr.mxu0 0.0
    %2815 = vmatpush2.xpose.msra.mxu0 0.0
    %2816 = vmatprep.subr.mxu0 0.0
    %2817 = vmatpush2.xpose.msra.mxu0 0.0
    %2818 = vmatprep.subr.mxu0 0.0
    %2819 = vmatpush2.xpose.msra.mxu0 0.0
    %2820 = vmatprep.subr.mxu0 0.0
    %2821 = vmatpush2.xpose.msra.mxu0 0.0
    %2822 = vmatprep.subr.mxu0 0.0
    %2823 = vmatpush2.xpose.msra.mxu0 0.0
    %2824 = vmatprep.subr.mxu0 0.0
    %2825 = vmatpush2.xpose.msra.mxu0 0.0
    %2826 = vmatprep.subr.mxu0 0.0
    %2827 = vmatpush2.xpose.msra.mxu0 0.0
    %2828 = vmatprep.subr.mxu0 0.0
    %2829 = vmatpush2.xpose.msra.mxu0 0.0
    %2830 = vmatprep.subr.mxu0 0.0
    %2831 = vmatpush2.xpose.msra.mxu0 0.0
    %2832 = vmatprep.subr.mxu0 0.0
    %2833 = vmatpush2.xpose.msra.mxu0 0.0
    %2834 = vmatprep.subr.mxu0 0.0
    %2835 = vmatpush2.xpose.msra.mxu0 0.0
    %2836 = vmatprep.subr.mxu0 0.0
    %2837 = vmatpush2.xpose.msra.mxu0 0.0
    %2838 = vmatprep.subr.mxu0 0.0
    %2839 = vmatpush2.xpose.msra.mxu0 0.0
    %2840 = vmatprep.subr.mxu0 0.0
    %2841 = vmatpush2.xpose.msra.mxu0 0.0
    %2842 = vmatprep.subr.mxu0 0.0
    %2843 = vmatpush2.xpose.msra.mxu0 0.0
    %2844 = vmatprep.subr.mxu0 0.0
    %2845 = vmatpush2.xpose.msra.mxu0 0.0
    %2846 = vmatprep.mubr.f32.mxu0 0.0
    %2847 = vmatmul.mubr.f32.gmra.mxu0 %v2778
    %v2848 = vpop.f32.mrf.mxu0
    %v2849 = vadd.f32 %v445, %v2848
    %v2850 = vpop.f32.mrf.mxu0
    %2851 = vdwg.mxu0
    %2852 = vrot.lane.b32.xlu0 %v2467, 96
    %v2853 = vpop.permute.xlu0 %2852
    %v2854 = vsel %vm616, %v2453, 0
    %v2856 = vsel %vm616, %v2853, 0
    %2858 = vmatprep.subr.mxu0 0.0
    %2859 = vmatpush1.xpose.msra.mxu0 0.0
    %2860 = vmatprep.subr.mxu0 0.0
    %2861 = vmatpush1.xpose.msra.mxu0 0.0
    %2862 = vmatprep.subr.mxu0 0.0
    %2863 = vmatpush1.xpose.msra.mxu0 0.0
    %2864 = vmatprep.subr.mxu0 0.0
    %2865 = vmatpush1.xpose.msra.mxu0 0.0
    %2866 = vmatprep.subr.mxu0 0.0
    %2867 = vmatpush1.xpose.msra.mxu0 0.0
    %2868 = vmatprep.subr.mxu0 0.0
    %2869 = vmatpush1.xpose.msra.mxu0 0.0
    %2870 = vmatprep.subr.mxu0 0.0
    %2871 = vmatpush1.xpose.msra.mxu0 0.0
    %2872 = vmatprep.subr.mxu0 0.0
    %2873 = vmatpush1.xpose.msra.mxu0 0.0
    %2874 = vmatprep.subr.mxu0 0.0
    %2875 = vmatpush1.xpose.msra.mxu0 0.0
    %2876 = vmatprep.subr.mxu0 0.0
    %2877 = vmatpush1.xpose.msra.mxu0 0.0
    %2878 = vmatprep.subr.mxu0 0.0
    %2879 = vmatpush1.xpose.msra.mxu0 0.0
    %2880 = vmatprep.subr.mxu0 0.0
    %2881 = vmatpush1.xpose.msra.mxu0 0.0
    %2882 = vmatprep.subr.mxu0 0.0
    %2883 = vmatpush1.xpose.msra.mxu0 0.0
    %2884 = vmatprep.subr.mxu0 0.0
    %2885 = vmatpush1.xpose.msra.mxu0 0.0
    %2886 = vmatprep.subr.mxu0 0.0
    %2887 = vmatpush1.xpose.msra.mxu0 0.0
    %2888 = vmatprep.subr.mxu0 0.0
    %2889 = vmatpush1.xpose.msra.mxu0 %v2856
    %2890 = vmatprep.subr.mxu0 0.0
    %2891 = vmatpush2.xpose.msra.mxu0 0.0
    %2892 = vmatprep.subr.mxu0 0.0
    %2893 = vmatpush2.xpose.msra.mxu0 0.0
    %2894 = vmatprep.subr.mxu0 0.0
    %2895 = vmatpush2.xpose.msra.mxu0 0.0
    %2896 = vmatprep.subr.mxu0 0.0
    %2897 = vmatpush2.xpose.msra.mxu0 0.0
    %2898 = vmatprep.subr.mxu0 0.0
    %2899 = vmatpush2.xpose.msra.mxu0 0.0
    %2900 = vmatprep.subr.mxu0 0.0
    %2901 = vmatpush2.xpose.msra.mxu0 0.0
    %2902 = vmatprep.subr.mxu0 0.0
    %2903 = vmatpush2.xpose.msra.mxu0 0.0
    %2904 = vmatprep.subr.mxu0 0.0
    %2905 = vmatpush2.xpose.msra.mxu0 0.0
    %2906 = vmatprep.subr.mxu0 0.0
    %2907 = vmatpush2.xpose.msra.mxu0 0.0
    %2908 = vmatprep.subr.mxu0 0.0
    %2909 = vmatpush2.xpose.msra.mxu0 0.0
    %2910 = vmatprep.subr.mxu0 0.0
    %2911 = vmatpush2.xpose.msra.mxu0 0.0
    %2912 = vmatprep.subr.mxu0 0.0
    %2913 = vmatpush2.xpose.msra.mxu0 0.0
    %2914 = vmatprep.subr.mxu0 0.0
    %2915 = vmatpush2.xpose.msra.mxu0 0.0
    %2916 = vmatprep.subr.mxu0 0.0
    %2917 = vmatpush2.xpose.msra.mxu0 0.0
    %2918 = vmatprep.subr.mxu0 0.0
    %2919 = vmatpush2.xpose.msra.mxu0 0.0
    %2920 = vmatprep.subr.mxu0 0.0
    %2921 = vmatpush2.xpose.msra.mxu0 0.0
    %2922 = vmatprep.mubr.f32.mxu0 0.0
    %2923 = vmatmul.mubr.f32.gmra.mxu0 %v2854
    %v2924 = vpop.f32.mrf.mxu0
    %v2925 = vadd.f32 %v445, %v2924
    %v2926 = vpop.f32.mrf.mxu0
    %2927 = vdwg.mxu0
    %2928 = vrot.lane.b32.xlu0 %v2469, 96
    %v2929 = vpop.permute.xlu0 %2928
    %v2930 = vsel %vm616, %v2455, 0
    %v2932 = vsel %vm616, %v2929, 0
    %2934 = vmatprep.subr.mxu0 0.0
    %2935 = vmatpush1.xpose.msra.mxu0 0.0
    %2936 = vmatprep.subr.mxu0 0.0
    %2937 = vmatpush1.xpose.msra.mxu0 0.0
    %2938 = vmatprep.subr.mxu0 0.0
    %2939 = vmatpush1.xpose.msra.mxu0 0.0
    %2940 = vmatprep.subr.mxu0 0.0
    %2941 = vmatpush1.xpose.msra.mxu0 0.0
    %2942 = vmatprep.subr.mxu0 0.0
    %2943 = vmatpush1.xpose.msra.mxu0 0.0
    %2944 = vmatprep.subr.mxu0 0.0
    %2945 = vmatpush1.xpose.msra.mxu0 0.0
    %2946 = vmatprep.subr.mxu0 0.0
    %2947 = vmatpush1.xpose.msra.mxu0 0.0
    %2948 = vmatprep.subr.mxu0 0.0
    %2949 = vmatpush1.xpose.msra.mxu0 0.0
    %2950 = vmatprep.subr.mxu0 0.0
    %2951 = vmatpush1.xpose.msra.mxu0 0.0
    %2952 = vmatprep.subr.mxu0 0.0
    %2953 = vmatpush1.xpose.msra.mxu0 0.0
    %2954 = vmatprep.subr.mxu0 0.0
    %2955 = vmatpush1.xpose.msra.mxu0 0.0
    %2956 = vmatprep.subr.mxu0 0.0
    %2957 = vmatpush1.xpose.msra.mxu0 0.0
    %2958 = vmatprep.subr.mxu0 0.0
    %2959 = vmatpush1.xpose.msra.mxu0 0.0
    %2960 = vmatprep.subr.mxu0 0.0
    %2961 = vmatpush1.xpose.msra.mxu0 0.0
    %2962 = vmatprep.subr.mxu0 0.0
    %2963 = vmatpush1.xpose.msra.mxu0 0.0
    %2964 = vmatprep.subr.mxu0 0.0
    %2965 = vmatpush1.xpose.msra.mxu0 %v2932
    %2966 = vmatprep.subr.mxu0 0.0
    %2967 = vmatpush2.xpose.msra.mxu0 0.0
    %2968 = vmatprep.subr.mxu0 0.0
    %2969 = vmatpush2.xpose.msra.mxu0 0.0
    %2970 = vmatprep.subr.mxu0 0.0
    %2971 = vmatpush2.xpose.msra.mxu0 0.0
    %2972 = vmatprep.subr.mxu0 0.0
    %2973 = vmatpush2.xpose.msra.mxu0 0.0
    %2974 = vmatprep.subr.mxu0 0.0
    %2975 = vmatpush2.xpose.msra.mxu0 0.0
    %2976 = vmatprep.subr.mxu0 0.0
    %2977 = vmatpush2.xpose.msra.mxu0 0.0
    %2978 = vmatprep.subr.mxu0 0.0
    %2979 = vmatpush2.xpose.msra.mxu0 0.0
    %2980 = vmatprep.subr.mxu0 0.0
    %2981 = vmatpush2.xpose.msra.mxu0 0.0
    %2982 = vmatprep.subr.mxu0 0.0
    %2983 = vmatpush2.xpose.msra.mxu0 0.0
    %2984 = vmatprep.subr.mxu0 0.0
    %2985 = vmatpush2.xpose.msra.mxu0 0.0
    %2986 = vmatprep.subr.mxu0 0.0
    %2987 = vmatpush2.xpose.msra.mxu0 0.0
    %2988 = vmatprep.subr.mxu0 0.0
    %2989 = vmatpush2.xpose.msra.mxu0 0.0
    %2990 = vmatprep.subr.mxu0 0.0
    %2991 = vmatpush2.xpose.msra.mxu0 0.0
    %2992 = vmatprep.subr.mxu0 0.0
    %2993 = vmatpush2.xpose.msra.mxu0 0.0
    %2994 = vmatprep.subr.mxu0 0.0
    %2995 = vmatpush2.xpose.msra.mxu0 0.0
    %2996 = vmatprep.subr.mxu0 0.0
    %2997 = vmatpush2.xpose.msra.mxu0 0.0
    %2998 = vmatprep.mubr.f32.mxu0 0.0
    %2999 = vmatmul.mubr.f32.gmra.mxu0 %v2930
    %v3000 = vpop.f32.mrf.mxu0
    %v3001 = vadd.f32 %v445, %v3000
    %v3002 = vpop.f32.mrf.mxu0
    %3003 = vdwg.mxu0
    %3004 = vrot.lane.b32.xlu0 %v2471, 96
    %v3005 = vpop.permute.xlu0 %3004
    %v3006 = vsel %vm616, %v2457, 0
    %v3008 = vsel %vm616, %v3005, 0
    %3010 = vmatprep.subr.mxu0 0.0
    %3011 = vmatpush1.xpose.msra.mxu0 0.0
    %3012 = vmatprep.subr.mxu0 0.0
    %3013 = vmatpush1.xpose.msra.mxu0 0.0
    %3014 = vmatprep.subr.mxu0 0.0
    %3015 = vmatpush1.xpose.msra.mxu0 0.0
    %3016 = vmatprep.subr.mxu0 0.0
    %3017 = vmatpush1.xpose.msra.mxu0 0.0
    %3018 = vmatprep.subr.mxu0 0.0
    %3019 = vmatpush1.xpose.msra.mxu0 0.0
    %3020 = vmatprep.subr.mxu0 0.0
    %3021 = vmatpush1.xpose.msra.mxu0 0.0
    %3022 = vmatprep.subr.mxu0 0.0
    %3023 = vmatpush1.xpose.msra.mxu0 0.0
    %3024 = vmatprep.subr.mxu0 0.0
    %3025 = vmatpush1.xpose.msra.mxu0 0.0
    %3026 = vmatprep.subr.mxu0 0.0
    %3027 = vmatpush1.xpose.msra.mxu0 0.0
    %3028 = vmatprep.subr.mxu0 0.0
    %3029 = vmatpush1.xpose.msra.mxu0 0.0
    %3030 = vmatprep.subr.mxu0 0.0
    %3031 = vmatpush1.xpose.msra.mxu0 0.0
    %3032 = vmatprep.subr.mxu0 0.0
    %3033 = vmatpush1.xpose.msra.mxu0 0.0
    %3034 = vmatprep.subr.mxu0 0.0
    %3035 = vmatpush1.xpose.msra.mxu0 0.0
    %3036 = vmatprep.subr.mxu0 0.0
    %3037 = vmatpush1.xpose.msra.mxu0 0.0
    %3038 = vmatprep.subr.mxu0 0.0
    %3039 = vmatpush1.xpose.msra.mxu0 0.0
    %3040 = vmatprep.subr.mxu0 0.0
    %3041 = vmatpush1.xpose.msra.mxu0 %v3008
    %3042 = vmatprep.subr.mxu0 0.0
    %3043 = vmatpush2.xpose.msra.mxu0 0.0
    %3044 = vmatprep.subr.mxu0 0.0
    %3045 = vmatpush2.xpose.msra.mxu0 0.0
    %3046 = vmatprep.subr.mxu0 0.0
    %3047 = vmatpush2.xpose.msra.mxu0 0.0
    %3048 = vmatprep.subr.mxu0 0.0
    %3049 = vmatpush2.xpose.msra.mxu0 0.0
    %3050 = vmatprep.subr.mxu0 0.0
    %3051 = vmatpush2.xpose.msra.mxu0 0.0
    %3052 = vmatprep.subr.mxu0 0.0
    %3053 = vmatpush2.xpose.msra.mxu0 0.0
    %3054 = vmatprep.subr.mxu0 0.0
    %3055 = vmatpush2.xpose.msra.mxu0 0.0
    %3056 = vmatprep.subr.mxu0 0.0
    %3057 = vmatpush2.xpose.msra.mxu0 0.0
    %3058 = vmatprep.subr.mxu0 0.0
    %3059 = vmatpush2.xpose.msra.mxu0 0.0
    %3060 = vmatprep.subr.mxu0 0.0
    %3061 = vmatpush2.xpose.msra.mxu0 0.0
    %3062 = vmatprep.subr.mxu0 0.0
    %3063 = vmatpush2.xpose.msra.mxu0 0.0
    %3064 = vmatprep.subr.mxu0 0.0
    %3065 = vmatpush2.xpose.msra.mxu0 0.0
    %3066 = vmatprep.subr.mxu0 0.0
    %3067 = vmatpush2.xpose.msra.mxu0 0.0
    %3068 = vmatprep.subr.mxu0 0.0
    %3069 = vmatpush2.xpose.msra.mxu0 0.0
    %3070 = vmatprep.subr.mxu0 0.0
    %3071 = vmatpush2.xpose.msra.mxu0 0.0
    %3072 = vmatprep.subr.mxu0 0.0
    %3073 = vmatpush2.xpose.msra.mxu0 0.0
    %3074 = vmatprep.mubr.f32.mxu0 0.0
    %3075 = vmatmul.mubr.f32.gmra.mxu0 %v3006
    %v3076 = vpop.f32.mrf.mxu0
    %v3077 = vadd.f32 %v445, %v3076
    %v3078 = vpop.f32.mrf.mxu0
    %3079 = vdwg.mxu0
    %v3080 = vsel %vm616, %v2545, -inf
    %3081 = vmax.xlane.f32.xlu0 %v3080
    %v3082 = vpop.xlane.xlu0 %3081
    %v3083 = vsel %vm616, %v2621, -inf
    %3084 = vmax.xlane.f32.xlu0 %v3083
    %v3085 = vpop.xlane.xlu0 %3084
    %v3086 = vsel %vm616, %v2697, -inf
    %3087 = vmax.xlane.f32.xlu0 %v3086
    %v3088 = vpop.xlane.xlu0 %3087
    %v3089 = vsel %vm616, %v2773, -inf
    %3090 = vmax.xlane.f32.xlu0 %v3089
    %v3091 = vpop.xlane.xlu0 %3090
    %v3092 = vsel %vm616, %v2849, -inf
    %3093 = vmax.xlane.f32.xlu0 %v3092
    %v3094 = vpop.xlane.xlu0 %3093
    %v3095 = vsel %vm616, %v2925, -inf
    %3096 = vmax.xlane.f32.xlu0 %v3095
    %v3097 = vpop.xlane.xlu0 %3096
    %v3098 = vsel %vm616, %v3001, -inf
    %3099 = vmax.xlane.f32.xlu0 %v3098
    %v3100 = vpop.xlane.xlu0 %3099
    %v3101 = vsel %vm616, %v3077, -inf
    %3102 = vmax.xlane.f32.xlu0 %v3101
    %v3103 = vpop.xlane.xlu0 %3102
    %v3104 = vsub.f32 %v2545, %v3082
    %v3105 = vsub.f32 %v2621, %v3085
    %v3106 = vsub.f32 %v2697, %v3088
    %v3107 = vsub.f32 %v2773, %v3091
    %v3108 = vsub.f32 %v2849, %v3094
    %v3109 = vsub.f32 %v2925, %v3097
    %v3110 = vsub.f32 %v3001, %v3100
    %v3111 = vsub.f32 %v3077, %v3103
    %v3112 = vmul.f32 %v3104, 1.442695
    %v3113 = vpow.pop %v3112
    %v3114 = vmul.f32 %v3105, 1.442695
    %v3115 = vpow.pop %v3114
    %v3116 = vmul.f32 %v3106, 1.442695
    %v3117 = vpow.pop %v3116
    %v3118 = vmul.f32 %v3107, 1.442695
    %v3119 = vpow.pop %v3118
    %v3120 = vmul.f32 %v3108, 1.442695
    %v3121 = vpow.pop %v3120
    %v3122 = vmul.f32 %v3109, 1.442695
    %v3123 = vpow.pop %v3122
    %v3124 = vmul.f32 %v3110, 1.442695
    %v3125 = vpow.pop %v3124
    %v3126 = vmul.f32 %v3111, 1.442695
    %v3127 = vpow.pop %v3126
    %v3128 = vsel %vm616, %v3113, 0.0
    %3129 = vadd.xlane.f32.xlu0 %v3128
    %v3130 = vpop.xlane.xlu0 %3129
    %v3131 = vsel %vm616, %v3115, 0.0
    %3132 = vadd.xlane.f32.xlu0 %v3131
    %v3133 = vpop.xlane.xlu0 %3132
    %v3134 = vsel %vm616, %v3117, 0.0
    %3135 = vadd.xlane.f32.xlu0 %v3134
    %v3136 = vpop.xlane.xlu0 %3135
    %v3137 = vsel %vm616, %v3119, 0.0
    %3138 = vadd.xlane.f32.xlu0 %v3137
    %v3139 = vpop.xlane.xlu0 %3138
    %v3140 = vsel %vm616, %v3121, 0.0
    %3141 = vadd.xlane.f32.xlu0 %v3140
    %v3142 = vpop.xlane.xlu0 %3141
    %v3143 = vsel %vm616, %v3123, 0.0
    %3144 = vadd.xlane.f32.xlu0 %v3143
    %v3145 = vpop.xlane.xlu0 %3144
    %v3146 = vsel %vm616, %v3125, 0.0
    %3147 = vadd.xlane.f32.xlu0 %v3146
    %v3148 = vpop.xlane.xlu0 %3147
    %v3149 = vsel %vm616, %v3127, 0.0
    %3150 = vadd.xlane.f32.xlu0 %v3149
    %v3151 = vpop.xlane.xlu0 %3150
    %v3152 = vrcp.pop %v3130
    %v3153 = vrcp.pop %v3133
    %v3154 = vrcp.pop %v3136
    %v3155 = vrcp.pop %v3139
    %v3156 = vrcp.pop %v3142
    %v3157 = vrcp.pop %v3145
    %v3158 = vrcp.pop %v3148
    %v3159 = vrcp.pop %v3151
    %v3160 = vmul.f32 %v3113, %v3152
    %v3161 = vmul.f32 %v3115, %v3153
    %v3162 = vmul.f32 %v3117, %v3154
    %v3163 = vmul.f32 %v3119, %v3155
    %v3164 = vmul.f32 %v3121, %v3156
    %v3165 = vmul.f32 %v3123, %v3157
    %v3166 = vmul.f32 %v3125, %v3158
    %v3167 = vmul.f32 %v3127, %v3159
    %3168 = vrot.lane.b32.xlu0 %v2434, 64
    %v3169 = vpop.permute.xlu0 %3168
    %v3172 = vsel %vm616, %v3160, 0
    %3174 = vmatprep.subr.mxu0 0.0
    %3175 = vmatpush1.msra.mxu0 0.0
    %3176 = vmatprep.subr.mxu0 0.0
    %3177 = vmatpush1.msra.mxu0 0.0
    %3178 = vmatprep.subr.mxu0 0.0
    %3179 = vmatpush1.msra.mxu0 0.0
    %3180 = vmatprep.subr.mxu0 0.0
    %3181 = vmatpush1.msra.mxu0 0.0
    %3182 = vmatprep.subr.mxu0 0.0
    %3183 = vmatpush1.msra.mxu0 0.0
    %3184 = vmatprep.subr.mxu0 0.0
    %3185 = vmatpush1.msra.mxu0 0.0
    %3186 = vmatprep.subr.mxu0 0.0
    %3187 = vmatpush1.msra.mxu0 0.0
    %3188 = vmatprep.subr.mxu0 0.0
    %3189 = vmatpush1.msra.mxu0 0.0
    %3190 = vmatprep.subr.mxu0 0.0
    %3191 = vmatpush1.msra.mxu0 0.0
    %3192 = vmatprep.subr.mxu0 0.0
    %3193 = vmatpush1.msra.mxu0 0.0
    %3194 = vmatprep.subr.mxu0 0.0
    %3195 = vmatpush1.msra.mxu0 0.0
    %3196 = vmatprep.subr.mxu0 0.0
    %3197 = vmatpush1.msra.mxu0 0.0
    %3198 = vmatprep.subr.mxu0 0.0
    %3199 = vmatpush1.msra.mxu0 0.0
    %3200 = vmatprep.subr.mxu0 0.0
    %3201 = vmatpush1.msra.mxu0 0.0
    %3202 = vmatprep.subr.mxu0 0.0
    %3203 = vmatpush1.msra.mxu0 0.0
    %3204 = vmatprep.subr.mxu0 0.0
    %3205 = vmatpush1.msra.mxu0 %v3169
    %3206 = vmatprep.subr.mxu0 0.0
    %3207 = vmatpush2.msra.mxu0 0.0
    %3208 = vmatprep.subr.mxu0 0.0
    %3209 = vmatpush2.msra.mxu0 0.0
    %3210 = vmatprep.subr.mxu0 0.0
    %3211 = vmatpush2.msra.mxu0 0.0
    %3212 = vmatprep.subr.mxu0 0.0
    %3213 = vmatpush2.msra.mxu0 0.0
    %3214 = vmatprep.subr.mxu0 0.0
    %3215 = vmatpush2.msra.mxu0 0.0
    %3216 = vmatprep.subr.mxu0 0.0
    %3217 = vmatpush2.msra.mxu0 0.0
    %3218 = vmatprep.subr.mxu0 0.0
    %3219 = vmatpush2.msra.mxu0 0.0
    %3220 = vmatprep.subr.mxu0 0.0
    %3221 = vmatpush2.msra.mxu0 0.0
    %3222 = vmatprep.subr.mxu0 0.0
    %3223 = vmatpush2.msra.mxu0 0.0
    %3224 = vmatprep.subr.mxu0 0.0
    %3225 = vmatpush2.msra.mxu0 0.0
    %3226 = vmatprep.subr.mxu0 0.0
    %3227 = vmatpush2.msra.mxu0 0.0
    %3228 = vmatprep.subr.mxu0 0.0
    %3229 = vmatpush2.msra.mxu0 0.0
    %3230 = vmatprep.subr.mxu0 0.0
    %3231 = vmatpush2.msra.mxu0 0.0
    %3232 = vmatprep.subr.mxu0 0.0
    %3233 = vmatpush2.msra.mxu0 0.0
    %3234 = vmatprep.subr.mxu0 0.0
    %3235 = vmatpush2.msra.mxu0 0.0
    %3236 = vmatprep.subr.mxu0 0.0
    %3237 = vmatpush2.msra.mxu0 0.0
    %3238 = vmatprep.mubr.f32.mxu0 0.0
    %3239 = vmatmul.mubr.f32.gmra.mxu0 %v3172
    %v3240 = vpop.f32.mrf.mxu0
    %v3241 = vadd.f32 0.0, %v3240
    %v3242 = vpop.f32.mrf.mxu0
    %3243 = vdwg.mxu0
    %3244 = vrot.lane.b32.xlu0 %v2439, 64
    %v3245 = vpop.permute.xlu0 %3244
    %v3248 = vsel %vm616, %v3161, 0
    %3250 = vmatprep.subr.mxu0 0.0
    %3251 = vmatpush1.msra.mxu0 0.0
    %3252 = vmatprep.subr.mxu0 0.0
    %3253 = vmatpush1.msra.mxu0 0.0
    %3254 = vmatprep.subr.mxu0 0.0
    %3255 = vmatpush1.msra.mxu0 0.0
    %3256 = vmatprep.subr.mxu0 0.0
    %3257 = vmatpush1.msra.mxu0 0.0
    %3258 = vmatprep.subr.mxu0 0.0
    %3259 = vmatpush1.msra.mxu0 0.0
    %3260 = vmatprep.subr.mxu0 0.0
    %3261 = vmatpush1.msra.mxu0 0.0
    %3262 = vmatprep.subr.mxu0 0.0
    %3263 = vmatpush1.msra.mxu0 0.0
    %3264 = vmatprep.subr.mxu0 0.0
    %3265 = vmatpush1.msra.mxu0 0.0
    %3266 = vmatprep.subr.mxu0 0.0
    %3267 = vmatpush1.msra.mxu0 0.0
    %3268 = vmatprep.subr.mxu0 0.0
    %3269 = vmatpush1.msra.mxu0 0.0
    %3270 = vmatprep.subr.mxu0 0.0
    %3271 = vmatpush1.msra.mxu0 0.0
    %3272 = vmatprep.subr.mxu0 0.0
    %3273 = vmatpush1.msra.mxu0 0.0
    %3274 = vmatprep.subr.mxu0 0.0
    %3275 = vmatpush1.msra.mxu0 0.0
    %3276 = vmatprep.subr.mxu0 0.0
    %3277 = vmatpush1.msra.mxu0 0.0
    %3278 = vmatprep.subr.mxu0 0.0
    %3279 = vmatpush1.msra.mxu0 0.0
    %3280 = vmatprep.subr.mxu0 0.0
    %3281 = vmatpush1.msra.mxu0 %v3245
    %3282 = vmatprep.subr.mxu0 0.0
    %3283 = vmatpush2.msra.mxu0 0.0
    %3284 = vmatprep.subr.mxu0 0.0
    %3285 = vmatpush2.msra.mxu0 0.0
    %3286 = vmatprep.subr.mxu0 0.0
    %3287 = vmatpush2.msra.mxu0 0.0
    %3288 = vmatprep.subr.mxu0 0.0
    %3289 = vmatpush2.msra.mxu0 0.0
    %3290 = vmatprep.subr.mxu0 0.0
    %3291 = vmatpush2.msra.mxu0 0.0
    %3292 = vmatprep.subr.mxu0 0.0
    %3293 = vmatpush2.msra.mxu0 0.0
    %3294 = vmatprep.subr.mxu0 0.0
    %3295 = vmatpush2.msra.mxu0 0.0
    %3296 = vmatprep.subr.mxu0 0.0
    %3297 = vmatpush2.msra.mxu0 0.0
    %3298 = vmatprep.subr.mxu0 0.0
    %3299 = vmatpush2.msra.mxu0 0.0
    %3300 = vmatprep.subr.mxu0 0.0
    %3301 = vmatpush2.msra.mxu0 0.0
    %3302 = vmatprep.subr.mxu0 0.0
    %3303 = vmatpush2.msra.mxu0 0.0
    %3304 = vmatprep.subr.mxu0 0.0
    %3305 = vmatpush2.msra.mxu0 0.0
    %3306 = vmatprep.subr.mxu0 0.0
    %3307 = vmatpush2.msra.mxu0 0.0
    %3308 = vmatprep.subr.mxu0 0.0
    %3309 = vmatpush2.msra.mxu0 0.0
    %3310 = vmatprep.subr.mxu0 0.0
    %3311 = vmatpush2.msra.mxu0 0.0
    %3312 = vmatprep.subr.mxu0 0.0
    %3313 = vmatpush2.msra.mxu0 0.0
    %3314 = vmatprep.mubr.f32.mxu0 0.0
    %3315 = vmatmul.mubr.f32.gmra.mxu0 %v3248
    %v3316 = vpop.f32.mrf.mxu0
    %v3317 = vadd.f32 0.0, %v3316
    %v3318 = vpop.f32.mrf.mxu0
    %3319 = vdwg.mxu0
    %3320 = vrot.lane.b32.xlu0 %v2461, 64
    %v3321 = vpop.permute.xlu0 %3320
    %v3324 = vsel %vm616, %v3162, 0
    %3326 = vmatprep.subr.mxu0 0.0
    %3327 = vmatpush1.msra.mxu0 0.0
    %3328 = vmatprep.subr.mxu0 0.0
    %3329 = vmatpush1.msra.mxu0 0.0
    %3330 = vmatprep.subr.mxu0 0.0
    %3331 = vmatpush1.msra.mxu0 0.0
    %3332 = vmatprep.subr.mxu0 0.0
    %3333 = vmatpush1.msra.mxu0 0.0
    %3334 = vmatprep.subr.mxu0 0.0
    %3335 = vmatpush1.msra.mxu0 0.0
    %3336 = vmatprep.subr.mxu0 0.0
    %3337 = vmatpush1.msra.mxu0 0.0
    %3338 = vmatprep.subr.mxu0 0.0
    %3339 = vmatpush1.msra.mxu0 0.0
    %3340 = vmatprep.subr.mxu0 0.0
    %3341 = vmatpush1.msra.mxu0 0.0
    %3342 = vmatprep.subr.mxu0 0.0
    %3343 = vmatpush1.msra.mxu0 0.0
    %3344 = vmatprep.subr.mxu0 0.0
    %3345 = vmatpush1.msra.mxu0 0.0
    %3346 = vmatprep.subr.mxu0 0.0
    %3347 = vmatpush1.msra.mxu0 0.0
    %3348 = vmatprep.subr.mxu0 0.0
    %3349 = vmatpush1.msra.mxu0 0.0
    %3350 = vmatprep.subr.mxu0 0.0
    %3351 = vmatpush1.msra.mxu0 0.0
    %3352 = vmatprep.subr.mxu0 0.0
    %3353 = vmatpush1.msra.mxu0 0.0
    %3354 = vmatprep.subr.mxu0 0.0
    %3355 = vmatpush1.msra.mxu0 0.0
    %3356 = vmatprep.subr.mxu0 0.0
    %3357 = vmatpush1.msra.mxu0 %v3321
    %3358 = vmatprep.subr.mxu0 0.0
    %3359 = vmatpush2.msra.mxu0 0.0
    %3360 = vmatprep.subr.mxu0 0.0
    %3361 = vmatpush2.msra.mxu0 0.0
    %3362 = vmatprep.subr.mxu0 0.0
    %3363 = vmatpush2.msra.mxu0 0.0
    %3364 = vmatprep.subr.mxu0 0.0
    %3365 = vmatpush2.msra.mxu0 0.0
    %3366 = vmatprep.subr.mxu0 0.0
    %3367 = vmatpush2.msra.mxu0 0.0
    %3368 = vmatprep.subr.mxu0 0.0
    %3369 = vmatpush2.msra.mxu0 0.0
    %3370 = vmatprep.subr.mxu0 0.0
    %3371 = vmatpush2.msra.mxu0 0.0
    %3372 = vmatprep.subr.mxu0 0.0
    %3373 = vmatpush2.msra.mxu0 0.0
    %3374 = vmatprep.subr.mxu0 0.0
    %3375 = vmatpush2.msra.mxu0 0.0
    %3376 = vmatprep.subr.mxu0 0.0
    %3377 = vmatpush2.msra.mxu0 0.0
    %3378 = vmatprep.subr.mxu0 0.0
    %3379 = vmatpush2.msra.mxu0 0.0
    %3380 = vmatprep.subr.mxu0 0.0
    %3381 = vmatpush2.msra.mxu0 0.0
    %3382 = vmatprep.subr.mxu0 0.0
    %3383 = vmatpush2.msra.mxu0 0.0
    %3384 = vmatprep.subr.mxu0 0.0
    %3385 = vmatpush2.msra.mxu0 0.0
    %3386 = vmatprep.subr.mxu0 0.0
    %3387 = vmatpush2.msra.mxu0 0.0
    %3388 = vmatprep.subr.mxu0 0.0
    %3389 = vmatpush2.msra.mxu0 0.0
    %3390 = vmatprep.mubr.f32.mxu0 0.0
    %3391 = vmatmul.mubr.f32.gmra.mxu0 %v3324
    %v3392 = vpop.f32.mrf.mxu0
    %v3393 = vadd.f32 0.0, %v3392
    %v3394 = vpop.f32.mrf.mxu0
    %3395 = vdwg.mxu0
    %3396 = vrot.lane.b32.xlu0 %v2463, 64
    %v3397 = vpop.permute.xlu0 %3396
    %v3400 = vsel %vm616, %v3163, 0
    %3402 = vmatprep.subr.mxu0 0.0
    %3403 = vmatpush1.msra.mxu0 0.0
    %3404 = vmatprep.subr.mxu0 0.0
    %3405 = vmatpush1.msra.mxu0 0.0
    %3406 = vmatprep.subr.mxu0 0.0
    %3407 = vmatpush1.msra.mxu0 0.0
    %3408 = vmatprep.subr.mxu0 0.0
    %3409 = vmatpush1.msra.mxu0 0.0
    %3410 = vmatprep.subr.mxu0 0.0
    %3411 = vmatpush1.msra.mxu0 0.0
    %3412 = vmatprep.subr.mxu0 0.0
    %3413 = vmatpush1.msra.mxu0 0.0
    %3414 = vmatprep.subr.mxu0 0.0
    %3415 = vmatpush1.msra.mxu0 0.0
    %3416 = vmatprep.subr.mxu0 0.0
    %3417 = vmatpush1.msra.mxu0 0.0
    %3418 = vmatprep.subr.mxu0 0.0
    %3419 = vmatpush1.msra.mxu0 0.0
    %3420 = vmatprep.subr.mxu0 0.0
    %3421 = vmatpush1.msra.mxu0 0.0
    %3422 = vmatprep.subr.mxu0 0.0
    %3423 = vmatpush1.msra.mxu0 0.0
    %3424 = vmatprep.subr.mxu0 0.0
    %3425 = vmatpush1.msra.mxu0 0.0
    %3426 = vmatprep.subr.mxu0 0.0
    %3427 = vmatpush1.msra.mxu0 0.0
    %3428 = vmatprep.subr.mxu0 0.0
    %3429 = vmatpush1.msra.mxu0 0.0
    %3430 = vmatprep.subr.mxu0 0.0
    %3431 = vmatpush1.msra.mxu0 0.0
    %3432 = vmatprep.subr.mxu0 0.0
    %3433 = vmatpush1.msra.mxu0 %v3397
    %3434 = vmatprep.subr.mxu0 0.0
    %3435 = vmatpush2.msra.mxu0 0.0
    %3436 = vmatprep.subr.mxu0 0.0
    %3437 = vmatpush2.msra.mxu0 0.0
    %3438 = vmatprep.subr.mxu0 0.0
    %3439 = vmatpush2.msra.mxu0 0.0
    %3440 = vmatprep.subr.mxu0 0.0
    %3441 = vmatpush2.msra.mxu0 0.0
    %3442 = vmatprep.subr.mxu0 0.0
    %3443 = vmatpush2.msra.mxu0 0.0
    %3444 = vmatprep.subr.mxu0 0.0
    %3445 = vmatpush2.msra.mxu0 0.0
    %3446 = vmatprep.subr.mxu0 0.0
    %3447 = vmatpush2.msra.mxu0 0.0
    %3448 = vmatprep.subr.mxu0 0.0
    %3449 = vmatpush2.msra.mxu0 0.0
    %3450 = vmatprep.subr.mxu0 0.0
    %3451 = vmatpush2.msra.mxu0 0.0
    %3452 = vmatprep.subr.mxu0 0.0
    %3453 = vmatpush2.msra.mxu0 0.0
    %3454 = vmatprep.subr.mxu0 0.0
    %3455 = vmatpush2.msra.mxu0 0.0
    %3456 = vmatprep.subr.mxu0 0.0
    %3457 = vmatpush2.msra.mxu0 0.0
    %3458 = vmatprep.subr.mxu0 0.0
    %3459 = vmatpush2.msra.mxu0 0.0
    %3460 = vmatprep.subr.mxu0 0.0
    %3461 = vmatpush2.msra.mxu0 0.0
    %3462 = vmatprep.subr.mxu0 0.0
    %3463 = vmatpush2.msra.mxu0 0.0
    %3464 = vmatprep.subr.mxu0 0.0
    %3465 = vmatpush2.msra.mxu0 0.0
    %3466 = vmatprep.mubr.f32.mxu0 0.0
    %3467 = vmatmul.mubr.f32.gmra.mxu0 %v3400
    %v3468 = vpop.f32.mrf.mxu0
    %v3469 = vadd.f32 0.0, %v3468
    %v3470 = vpop.f32.mrf.mxu0
    %3471 = vdwg.mxu0
    %3472 = vrot.lane.b32.xlu0 %v2465, 64
    %v3473 = vpop.permute.xlu0 %3472
    %v3476 = vsel %vm616, %v3164, 0
    %3478 = vmatprep.subr.mxu0 0.0
    %3479 = vmatpush1.msra.mxu0 0.0
    %3480 = vmatprep.subr.mxu0 0.0
    %3481 = vmatpush1.msra.mxu0 0.0
    %3482 = vmatprep.subr.mxu0 0.0
    %3483 = vmatpush1.msra.mxu0 0.0
    %3484 = vmatprep.subr.mxu0 0.0
    %3485 = vmatpush1.msra.mxu0 0.0
    %3486 = vmatprep.subr.mxu0 0.0
    %3487 = vmatpush1.msra.mxu0 0.0
    %3488 = vmatprep.subr.mxu0 0.0
    %3489 = vmatpush1.msra.mxu0 0.0
    %3490 = vmatprep.subr.mxu0 0.0
    %3491 = vmatpush1.msra.mxu0 0.0
    %3492 = vmatprep.subr.mxu0 0.0
    %3493 = vmatpush1.msra.mxu0 0.0
    %3494 = vmatprep.subr.mxu0 0.0
    %3495 = vmatpush1.msra.mxu0 0.0
    %3496 = vmatprep.subr.mxu0 0.0
    %3497 = vmatpush1.msra.mxu0 0.0
    %3498 = vmatprep.subr.mxu0 0.0
    %3499 = vmatpush1.msra.mxu0 0.0
    %3500 = vmatprep.subr.mxu0 0.0
    %3501 = vmatpush1.msra.mxu0 0.0
    %3502 = vmatprep.subr.mxu0 0.0
    %3503 = vmatpush1.msra.mxu0 0.0
    %3504 = vmatprep.subr.mxu0 0.0
    %3505 = vmatpush1.msra.mxu0 0.0
    %3506 = vmatprep.subr.mxu0 0.0
    %3507 = vmatpush1.msra.mxu0 0.0
    %3508 = vmatprep.subr.mxu0 0.0
    %3509 = vmatpush1.msra.mxu0 %v3473
    %3510 = vmatprep.subr.mxu0 0.0
    %3511 = vmatpush2.msra.mxu0 0.0
    %3512 = vmatprep.subr.mxu0 0.0
    %3513 = vmatpush2.msra.mxu0 0.0
    %3514 = vmatprep.subr.mxu0 0.0
    %3515 = vmatpush2.msra.mxu0 0.0
    %3516 = vmatprep.subr.mxu0 0.0
    %3517 = vmatpush2.msra.mxu0 0.0
    %3518 = vmatprep.subr.mxu0 0.0
    %3519 = vmatpush2.msra.mxu0 0.0
    %3520 = vmatprep.subr.mxu0 0.0
    %3521 = vmatpush2.msra.mxu0 0.0
    %3522 = vmatprep.subr.mxu0 0.0
    %3523 = vmatpush2.msra.mxu0 0.0
    %3524 = vmatprep.subr.mxu0 0.0
    %3525 = vmatpush2.msra.mxu0 0.0
    %3526 = vmatprep.subr.mxu0 0.0
    %3527 = vmatpush2.msra.mxu0 0.0
    %3528 = vmatprep.subr.mxu0 0.0
    %3529 = vmatpush2.msra.mxu0 0.0
    %3530 = vmatprep.subr.mxu0 0.0
    %3531 = vmatpush2.msra.mxu0 0.0
    %3532 = vmatprep.subr.mxu0 0.0
    %3533 = vmatpush2.msra.mxu0 0.0
    %3534 = vmatprep.subr.mxu0 0.0
    %3535 = vmatpush2.msra.mxu0 0.0
    %3536 = vmatprep.subr.mxu0 0.0
    %3537 = vmatpush2.msra.mxu0 0.0
    %3538 = vmatprep.subr.mxu0 0.0
    %3539 = vmatpush2.msra.mxu0 0.0
    %3540 = vmatprep.subr.mxu0 0.0
    %3541 = vmatpush2.msra.mxu0 0.0
    %3542 = vmatprep.mubr.f32.mxu0 0.0
    %3543 = vmatmul.mubr.f32.gmra.mxu0 %v3476
    %v3544 = vpop.f32.mrf.mxu0
    %v3545 = vadd.f32 0.0, %v3544
    %v3546 = vpop.f32.mrf.mxu0
    %3547 = vdwg.mxu0
    %3548 = vrot.lane.b32.xlu0 %v2467, 64
    %v3549 = vpop.permute.xlu0 %3548
    %v3552 = vsel %vm616, %v3165, 0
    %3554 = vmatprep.subr.mxu0 0.0
    %3555 = vmatpush1.msra.mxu0 0.0
    %3556 = vmatprep.subr.mxu0 0.0
    %3557 = vmatpush1.msra.mxu0 0.0
    %3558 = vmatprep.subr.mxu0 0.0
    %3559 = vmatpush1.msra.mxu0 0.0
    %3560 = vmatprep.subr.mxu0 0.0
    %3561 = vmatpush1.msra.mxu0 0.0
    %3562 = vmatprep.subr.mxu0 0.0
    %3563 = vmatpush1.msra.mxu0 0.0
    %3564 = vmatprep.subr.mxu0 0.0
    %3565 = vmatpush1.msra.mxu0 0.0
    %3566 = vmatprep.subr.mxu0 0.0
    %3567 = vmatpush1.msra.mxu0 0.0
    %3568 = vmatprep.subr.mxu0 0.0
    %3569 = vmatpush1.msra.mxu0 0.0
    %3570 = vmatprep.subr.mxu0 0.0
    %3571 = vmatpush1.msra.mxu0 0.0
    %3572 = vmatprep.subr.mxu0 0.0
    %3573 = vmatpush1.msra.mxu0 0.0
    %3574 = vmatprep.subr.mxu0 0.0
    %3575 = vmatpush1.msra.mxu0 0.0
    %3576 = vmatprep.subr.mxu0 0.0
    %3577 = vmatpush1.msra.mxu0 0.0
    %3578 = vmatprep.subr.mxu0 0.0
    %3579 = vmatpush1.msra.mxu0 0.0
    %3580 = vmatprep.subr.mxu0 0.0
    %3581 = vmatpush1.msra.mxu0 0.0
    %3582 = vmatprep.subr.mxu0 0.0
    %3583 = vmatpush1.msra.mxu0 0.0
    %3584 = vmatprep.subr.mxu0 0.0
    %3585 = vmatpush1.msra.mxu0 %v3549
    %3586 = vmatprep.subr.mxu0 0.0
    %3587 = vmatpush2.msra.mxu0 0.0
    %3588 = vmatprep.subr.mxu0 0.0
    %3589 = vmatpush2.msra.mxu0 0.0
    %3590 = vmatprep.subr.mxu0 0.0
    %3591 = vmatpush2.msra.mxu0 0.0
    %3592 = vmatprep.subr.mxu0 0.0
    %3593 = vmatpush2.msra.mxu0 0.0
    %3594 = vmatprep.subr.mxu0 0.0
    %3595 = vmatpush2.msra.mxu0 0.0
    %3596 = vmatprep.subr.mxu0 0.0
    %3597 = vmatpush2.msra.mxu0 0.0
    %3598 = vmatprep.subr.mxu0 0.0
    %3599 = vmatpush2.msra.mxu0 0.0
    %3600 = vmatprep.subr.mxu0 0.0
    %3601 = vmatpush2.msra.mxu0 0.0
    %3602 = vmatprep.subr.mxu0 0.0
    %3603 = vmatpush2.msra.mxu0 0.0
    %3604 = vmatprep.subr.mxu0 0.0
    %3605 = vmatpush2.msra.mxu0 0.0
    %3606 = vmatprep.subr.mxu0 0.0
    %3607 = vmatpush2.msra.mxu0 0.0
    %3608 = vmatprep.subr.mxu0 0.0
    %3609 = vmatpush2.msra.mxu0 0.0
    %3610 = vmatprep.subr.mxu0 0.0
    %3611 = vmatpush2.msra.mxu0 0.0
    %3612 = vmatprep.subr.mxu0 0.0
    %3613 = vmatpush2.msra.mxu0 0.0
    %3614 = vmatprep.subr.mxu0 0.0
    %3615 = vmatpush2.msra.mxu0 0.0
    %3616 = vmatprep.subr.mxu0 0.0
    %3617 = vmatpush2.msra.mxu0 0.0
    %3618 = vmatprep.mubr.f32.mxu0 0.0
    %3619 = vmatmul.mubr.f32.gmra.mxu0 %v3552
    %v3620 = vpop.f32.mrf.mxu0
    %v3621 = vadd.f32 0.0, %v3620
    %v3622 = vpop.f32.mrf.mxu0
    %3623 = vdwg.mxu0
    %3624 = vrot.lane.b32.xlu0 %v2469, 64
    %v3625 = vpop.permute.xlu0 %3624
    %v3628 = vsel %vm616, %v3166, 0
    %3630 = vmatprep.subr.mxu0 0.0
    %3631 = vmatpush1.msra.mxu0 0.0
    %3632 = vmatprep.subr.mxu0 0.0
    %3633 = vmatpush1.msra.mxu0 0.0
    %3634 = vmatprep.subr.mxu0 0.0
    %3635 = vmatpush1.msra.mxu0 0.0
    %3636 = vmatprep.subr.mxu0 0.0
    %3637 = vmatpush1.msra.mxu0 0.0
    %3638 = vmatprep.subr.mxu0 0.0
    %3639 = vmatpush1.msra.mxu0 0.0
    %3640 = vmatprep.subr.mxu0 0.0
    %3641 = vmatpush1.msra.mxu0 0.0
    %3642 = vmatprep.subr.mxu0 0.0
    %3643 = vmatpush1.msra.mxu0 0.0
    %3644 = vmatprep.subr.mxu0 0.0
    %3645 = vmatpush1.msra.mxu0 0.0
    %3646 = vmatprep.subr.mxu0 0.0
    %3647 = vmatpush1.msra.mxu0 0.0
    %3648 = vmatprep.subr.mxu0 0.0
    %3649 = vmatpush1.msra.mxu0 0.0
    %3650 = vmatprep.subr.mxu0 0.0
    %3651 = vmatpush1.msra.mxu0 0.0
    %3652 = vmatprep.subr.mxu0 0.0
    %3653 = vmatpush1.msra.mxu0 0.0
    %3654 = vmatprep.subr.mxu0 0.0
    %3655 = vmatpush1.msra.mxu0 0.0
    %3656 = vmatprep.subr.mxu0 0.0
    %3657 = vmatpush1.msra.mxu0 0.0
    %3658 = vmatprep.subr.mxu0 0.0
    %3659 = vmatpush1.msra.mxu0 0.0
    %3660 = vmatprep.subr.mxu0 0.0
    %3661 = vmatpush1.msra.mxu0 %v3625
    %3662 = vmatprep.subr.mxu0 0.0
    %3663 = vmatpush2.msra.mxu0 0.0
    %3664 = vmatprep.subr.mxu0 0.0
    %3665 = vmatpush2.msra.mxu0 0.0
    %3666 = vmatprep.subr.mxu0 0.0
    %3667 = vmatpush2.msra.mxu0 0.0
    %3668 = vmatprep.subr.mxu0 0.0
    %3669 = vmatpush2.msra.mxu0 0.0
    %3670 = vmatprep.subr.mxu0 0.0
    %3671 = vmatpush2.msra.mxu0 0.0
    %3672 = vmatprep.subr.mxu0 0.0
    %3673 = vmatpush2.msra.mxu0 0.0
    %3674 = vmatprep.subr.mxu0 0.0
    %3675 = vmatpush2.msra.mxu0 0.0
    %3676 = vmatprep.subr.mxu0 0.0
    %3677 = vmatpush2.msra.mxu0 0.0
    %3678 = vmatprep.subr.mxu0 0.0
    %3679 = vmatpush2.msra.mxu0 0.0
    %3680 = vmatprep.subr.mxu0 0.0
    %3681 = vmatpush2.msra.mxu0 0.0
    %3682 = vmatprep.subr.mxu0 0.0
    %3683 = vmatpush2.msra.mxu0 0.0
    %3684 = vmatprep.subr.mxu0 0.0
    %3685 = vmatpush2.msra.mxu0 0.0
    %3686 = vmatprep.subr.mxu0 0.0
    %3687 = vmatpush2.msra.mxu0 0.0
    %3688 = vmatprep.subr.mxu0 0.0
    %3689 = vmatpush2.msra.mxu0 0.0
    %3690 = vmatprep.subr.mxu0 0.0
    %3691 = vmatpush2.msra.mxu0 0.0
    %3692 = vmatprep.subr.mxu0 0.0
    %3693 = vmatpush2.msra.mxu0 0.0
    %3694 = vmatprep.mubr.f32.mxu0 0.0
    %3695 = vmatmul.mubr.f32.gmra.mxu0 %v3628
    %v3696 = vpop.f32.mrf.mxu0
    %v3697 = vadd.f32 0.0, %v3696
    %v3698 = vpop.f32.mrf.mxu0
    %3699 = vdwg.mxu0
    %3700 = vrot.lane.b32.xlu0 %v2471, 64
    %v3701 = vpop.permute.xlu0 %3700
    %v3704 = vsel %vm616, %v3167, 0
    %3706 = vmatprep.subr.mxu0 0.0
    %3707 = vmatpush1.msra.mxu0 0.0
    %3708 = vmatprep.subr.mxu0 0.0
    %3709 = vmatpush1.msra.mxu0 0.0
    %3710 = vmatprep.subr.mxu0 0.0
    %3711 = vmatpush1.msra.mxu0 0.0
    %3712 = vmatprep.subr.mxu0 0.0
    %3713 = vmatpush1.msra.mxu0 0.0
    %3714 = vmatprep.subr.mxu0 0.0
    %3715 = vmatpush1.msra.mxu0 0.0
    %3716 = vmatprep.subr.mxu0 0.0
    %3717 = vmatpush1.msra.mxu0 0.0
    %3718 = vmatprep.subr.mxu0 0.0
    %3719 = vmatpush1.msra.mxu0 0.0
    %3720 = vmatprep.subr.mxu0 0.0
    %3721 = vmatpush1.msra.mxu0 0.0
    %3722 = vmatprep.subr.mxu0 0.0
    %3723 = vmatpush1.msra.mxu0 0.0
    %3724 = vmatprep.subr.mxu0 0.0
    %3725 = vmatpush1.msra.mxu0 0.0
    %3726 = vmatprep.subr.mxu0 0.0
    %3727 = vmatpush1.msra.mxu0 0.0
    %3728 = vmatprep.subr.mxu0 0.0
    %3729 = vmatpush1.msra.mxu0 0.0
    %3730 = vmatprep.subr.mxu0 0.0
    %3731 = vmatpush1.msra.mxu0 0.0
    %3732 = vmatprep.subr.mxu0 0.0
    %3733 = vmatpush1.msra.mxu0 0.0
    %3734 = vmatprep.subr.mxu0 0.0
    %3735 = vmatpush1.msra.mxu0 0.0
    %3736 = vmatprep.subr.mxu0 0.0
    %3737 = vmatpush1.msra.mxu0 %v3701
    %3738 = vmatprep.subr.mxu0 0.0
    %3739 = vmatpush2.msra.mxu0 0.0
    %3740 = vmatprep.subr.mxu0 0.0
    %3741 = vmatpush2.msra.mxu0 0.0
    %3742 = vmatprep.subr.mxu0 0.0
    %3743 = vmatpush2.msra.mxu0 0.0
    %3744 = vmatprep.subr.mxu0 0.0
    %3745 = vmatpush2.msra.mxu0 0.0
    %3746 = vmatprep.subr.mxu0 0.0
    %3747 = vmatpush2.msra.mxu0 0.0
    %3748 = vmatprep.subr.mxu0 0.0
    %3749 = vmatpush2.msra.mxu0 0.0
    %3750 = vmatprep.subr.mxu0 0.0
    %3751 = vmatpush2.msra.mxu0 0.0
    %3752 = vmatprep.subr.mxu0 0.0
    %3753 = vmatpush2.msra.mxu0 0.0
    %3754 = vmatprep.subr.mxu0 0.0
    %3755 = vmatpush2.msra.mxu0 0.0
    %3756 = vmatprep.subr.mxu0 0.0
    %3757 = vmatpush2.msra.mxu0 0.0
    %3758 = vmatprep.subr.mxu0 0.0
    %3759 = vmatpush2.msra.mxu0 0.0
    %3760 = vmatprep.subr.mxu0 0.0
    %3761 = vmatpush2.msra.mxu0 0.0
    %3762 = vmatprep.subr.mxu0 0.0
    %3763 = vmatpush2.msra.mxu0 0.0
    %3764 = vmatprep.subr.mxu0 0.0
    %3765 = vmatpush2.msra.mxu0 0.0
    %3766 = vmatprep.subr.mxu0 0.0
    %3767 = vmatpush2.msra.mxu0 0.0
    %3768 = vmatprep.subr.mxu0 0.0
    %3769 = vmatpush2.msra.mxu0 0.0
    %3770 = vmatprep.mubr.f32.mxu0 0.0
    %3771 = vmatmul.mubr.f32.gmra.mxu0 %v3704
    %v3772 = vpop.f32.mrf.mxu0
    %v3773 = vadd.f32 0.0, %v3772
    %v3774 = vpop.f32.mrf.mxu0
    %3775 = vdwg.mxu0
    %3778 = vrot.lane.b32.xlu0 %v3393, 8
    %v3779 = vpop.permute.xlu0 %3778
    %3780 = vrot.lane.b32.xlu0 %v3469, 8
    %v3781 = vpop.permute.xlu0 %3780
    %3786 = vrot.lane.b32.xlu0 %v3545, 16
    %v3787 = vpop.permute.xlu0 %3786
    %3788 = vrot.lane.b32.xlu0 %v3621, 16
    %v3789 = vpop.permute.xlu0 %3788
    %3794 = vrot.lane.b32.xlu0 %v3697, 24
    %v3795 = vpop.permute.xlu0 %3794
    %3796 = vrot.lane.b32.xlu0 %v3773, 24
    %v3797 = vpop.permute.xlu0 %3796
    %v3800 = vsel %vm616, %v3241, %v3779
    %v3801 = vsel %vm616, %v3317, %v3781
    %v3802 = vsel %vm1945, %v3800, %v3787
    %v3803 = vsel %vm1945, %v3801, %v3789
    %v3804 = vsel %vm1948, %v3802, %v3795
    %v3805 = vsel %vm1948, %v3803, %v3797
    %s3806 = scalar_lea.vmem %s9, 32
    %v3807 = vld [vmem:[%s3806] sm:$0xff]
    %v3808 = vld [vmem:[%s3806 + $0x8] sm:$0xff]
    %v3809 = vld [vmem:[%s3806 + $0x10] sm:$0xff]
    %v3810 = vld [vmem:[%s3806 + $0x18] sm:$0xff]
    %v3812 = vsel %vm448, %v3804, 0
    %v3815 = vsel %vm448, %v3805, 0
    %3817 = vmatprep.subr.mxu0 0.0
    %3818 = vmatpush1.msra.mxu0 0.0
    %3819 = vmatprep.subr.mxu0 0.0
    %3820 = vmatpush1.msra.mxu0 0.0
    %3821 = vmatprep.subr.mxu0 0.0
    %3822 = vmatpush1.msra.mxu0 0.0
    %3823 = vmatprep.subr.mxu0 0.0
    %3824 = vmatpush1.msra.mxu0 0.0
    %3825 = vmatprep.subr.mxu0 0.0
    %3826 = vmatpush1.msra.mxu0 0.0
    %3827 = vmatprep.subr.mxu0 0.0
    %3828 = vmatpush1.msra.mxu0 0.0
    %3829 = vmatprep.subr.mxu0 0.0
    %3830 = vmatpush1.msra.mxu0 0.0
    %3831 = vmatprep.subr.mxu0 0.0
    %3832 = vmatpush1.msra.mxu0 0.0
    %3833 = vmatprep.subr.mxu0 0.0
    %3834 = vmatpush1.msra.mxu0 0.0
    %3835 = vmatprep.subr.mxu0 0.0
    %3836 = vmatpush1.msra.mxu0 0.0
    %3837 = vmatprep.subr.mxu0 0.0
    %3838 = vmatpush1.msra.mxu0 0.0
    %3839 = vmatprep.subr.mxu0 0.0
    %3840 = vmatpush1.msra.mxu0 0.0
    %3841 = vmatprep.subr.mxu0 0.0
    %3842 = vmatpush1.msra.mxu0 %v3810
    %3843 = vmatprep.subr.mxu0 0.0
    %3844 = vmatpush1.msra.mxu0 %v3809
    %3845 = vmatprep.subr.mxu0 0.0
    %3846 = vmatpush1.msra.mxu0 %v3808
    %3847 = vmatprep.subr.mxu0 0.0
    %3848 = vmatpush1.msra.mxu0 %v3807
    %3849 = vmatprep.subr.mxu0 0.0
    %3850 = vmatpush2.msra.mxu0 0.0
    %3851 = vmatprep.subr.mxu0 0.0
    %3852 = vmatpush2.msra.mxu0 0.0
    %3853 = vmatprep.subr.mxu0 0.0
    %3854 = vmatpush2.msra.mxu0 0.0
    %3855 = vmatprep.subr.mxu0 0.0
    %3856 = vmatpush2.msra.mxu0 0.0
    %3857 = vmatprep.subr.mxu0 0.0
    %3858 = vmatpush2.msra.mxu0 0.0
    %3859 = vmatprep.subr.mxu0 0.0
    %3860 = vmatpush2.msra.mxu0 0.0
    %3861 = vmatprep.subr.mxu0 0.0
    %3862 = vmatpush2.msra.mxu0 0.0
    %3863 = vmatprep.subr.mxu0 0.0
    %3864 = vmatpush2.msra.mxu0 0.0
    %3865 = vmatprep.subr.mxu0 0.0
    %3866 = vmatpush2.msra.mxu0 0.0
    %3867 = vmatprep.subr.mxu0 0.0
    %3868 = vmatpush2.msra.mxu0 0.0
    %3869 = vmatprep.subr.mxu0 0.0
    %3870 = vmatpush2.msra.mxu0 0.0
    %3871 = vmatprep.subr.mxu0 0.0
    %3872 = vmatpush2.msra.mxu0 0.0
    %3873 = vmatprep.subr.mxu0 0.0
    %3874 = vmatpush2.msra.mxu0 0.0
    %3875 = vmatprep.subr.mxu0 0.0
    %3876 = vmatpush2.msra.mxu0 0.0
    %3877 = vmatprep.subr.mxu0 0.0
    %3878 = vmatpush2.msra.mxu0 0.0
    %3879 = vmatprep.subr.mxu0 0.0
    %3880 = vmatpush2.msra.mxu0 0.0
    %3881 = vmatprep.mubr.f32.mxu0 0.0
    %3882 = vmatmul.mubr.f32.gmra.mxu0 %v3812
    %v3883 = vpop.f32.mrf.mxu0
    %v3884 = vadd.f32 0.0, %v3883
    %v3885 = vpop.f32.mrf.mxu0
    %3886 = vmatprep.mubr.f32.mxu0 0.0
    %3887 = vmatmul.mubr.f32.gmra.mxu0 %v3815
    %v3888 = vpop.f32.mrf.mxu0
    %v3889 = vadd.f32 0.0, %v3888
    %v3890 = vpop.f32.mrf.mxu0
    %3891 = vdwg.mxu0
    %v3892 = vadd.f32 %v2300, %v3884
    %v3893 = vadd.f32 %v2301, %v3889
    %s3894 = scalar_lea.vmem %s10, 1
    %v3895 = vld [vmem:[%s3894] sm:$0x1]
    %v3897 = vlaneseq
    %v3898 = vshrl.u32 %v3897, 7
    %v3899 = vsub.s32 0, %v3898
    %v3900 = vrot.slane %v3895, %v3899
    %v3902 = vadd.f32 %v3892, %v3900
    %v3903 = vadd.f32 %v3893, %v3900
    %s3904 = scalar_lea.vmem %s11, 1
    %v3905 = vld [vmem:[%s3904] sm:$0x1]
    %s3906 = scalar_lea.vmem %s12, 1
    %v3907 = vld [vmem:[%s3906] sm:$0x1]
    %v3908 = vsel %vm448, %v3902, 0.0
    %3909 = vadd.xlane.f32.xlu0 %v3908
    %v3910 = vpop.xlane.xlu0 %3909
    %v3911 = vsel %vm448, %v3903, 0.0
    %3912 = vadd.xlane.f32.xlu0 %v3911
    %v3913 = vpop.xlane.xlu0 %3912
    %v3914 = vmul.f32 %v3910, %v455
    %v3915 = vmul.f32 %v3913, %v455
    %v3916 = vsub.f32 %v3902, %v3914
    %v3917 = vsub.f32 %v3903, %v3915
    %v3918 = vmul.f32 %v3916, %v3916
    %v3919 = vmul.f32 %v3917, %v3917
    %v3920 = vsel %vm448, %v3918, 0.0
    %3921 = vadd.xlane.f32.xlu0 %v3920
    %v3922 = vpop.xlane.xlu0 %3921
    %v3923 = vsel %vm448, %v3919, 0.0
    %3924 = vadd.xlane.f32.xlu0 %v3923
    %v3925 = vpop.xlane.xlu0 %3924
    %v3926 = vmul.f32 %v3922, %v455
    %v3927 = vmul.f32 %v3925, %v455
    %v3928 = vadd.f32 %v3926, 1e-06
    %v3929 = vadd.f32 %v3927, 1e-06
    %v3930 = vrsqrt.pop %v3928
    %v3931 = vrsqrt.pop %v3929
    %v3932 = vmul.f32 %v3916, %v3930
    %v3933 = vmul.f32 %v3917, %v3931
    %v3935 = vlaneseq
    %v3936 = vshrl.u32 %v3935, 7
    %v3937 = vsub.s32 0, %v3936
    %v3938 = vrot.slane %v3905, %v3937
    %v3940 = vmul.f32 %v3932, %v3938
    %v3941 = vmul.f32 %v3933, %v3938
    %v3943 = vlaneseq
    %v3944 = vshrl.u32 %v3943, 7
    %v3945 = vsub.s32 0, %v3944
    %v3946 = vrot.slane %v3907, %v3945
    %v3948 = vadd.f32 %v3940, %v3946
    %v3949 = vadd.f32 %v3941, %v3946
    %s3950 = scalar_lea.vmem %s13, 32
    %v3951 = vld [vmem:[%s3950] sm:$0xff]
    %v3952 = vld [vmem:[%s3950 + $0x8] sm:$0xff]
    %v3953 = vld [vmem:[%s3950 + $0x10] sm:$0xff]
    %v3954 = vld [vmem:[%s3950 + $0x18] sm:$0xff]
    %s3955 = scalar_lea.vmem %s14, 1
    %v3956 = vld [vmem:[%s3955] sm:$0x1]
    %v3958 = vlaneseq
    %v3959 = vshrl.u32 %v3958, 7
    %v3960 = vsub.s32 0, %v3959
    %v3961 = vrot.slane %v3956, %v3960
    %v3964 = vsel %vm448, %v3948, 0
    %v3967 = vsel %vm448, %v3949, 0
    %3969 = vmatprep.subr.mxu0 0.0
    %3970 = vmatpush1.msra.mxu0 0.0
    %3971 = vmatprep.subr.mxu0 0.0
    %3972 = vmatpush1.msra.mxu0 0.0
    %3973 = vmatprep.subr.mxu0 0.0
    %3974 = vmatpush1.msra.mxu0 0.0
    %3975 = vmatprep.subr.mxu0 0.0
    %3976 = vmatpush1.msra.mxu0 0.0
    %3977 = vmatprep.subr.mxu0 0.0
    %3978 = vmatpush1.msra.mxu0 0.0
    %3979 = vmatprep.subr.mxu0 0.0
    %3980 = vmatpush1.msra.mxu0 0.0
    %3981 = vmatprep.subr.mxu0 0.0
    %3982 = vmatpush1.msra.mxu0 0.0
    %3983 = vmatprep.subr.mxu0 0.0
    %3984 = vmatpush1.msra.mxu0 0.0
    %3985 = vmatprep.subr.mxu0 0.0
    %3986 = vmatpush1.msra.mxu0 0.0
    %3987 = vmatprep.subr.mxu0 0.0
    %3988 = vmatpush1.msra.mxu0 0.0
    %3989 = vmatprep.subr.mxu0 0.0
    %3990 = vmatpush1.msra.mxu0 0.0
    %3991 = vmatprep.subr.mxu0 0.0
    %3992 = vmatpush1.msra.mxu0 0.0
    %3993 = vmatprep.subr.mxu0 0.0
    %3994 = vmatpush1.msra.mxu0 %v3954
    %3995 = vmatprep.subr.mxu0 0.0
    %3996 = vmatpush1.msra.mxu0 %v3953
    %3997 = vmatprep.subr.mxu0 0.0
    %3998 = vmatpush1.msra.mxu0 %v3952
    %3999 = vmatprep.subr.mxu0 0.0
    %4000 = vmatpush1.msra.mxu0 %v3951
    %4001 = vmatprep.subr.mxu0 0.0
    %4002 = vmatpush2.msra.mxu0 0.0
    %4003 = vmatprep.subr.mxu0 0.0
    %4004 = vmatpush2.msra.mxu0 0.0
    %4005 = vmatprep.subr.mxu0 0.0
    %4006 = vmatpush2.msra.mxu0 0.0
    %4007 = vmatprep.subr.mxu0 0.0
    %4008 = vmatpush2.msra.mxu0 0.0
    %4009 = vmatprep.subr.mxu0 0.0
    %4010 = vmatpush2.msra.mxu0 0.0
    %4011 = vmatprep.subr.mxu0 0.0
    %4012 = vmatpush2.msra.mxu0 0.0
    %4013 = vmatprep.subr.mxu0 0.0
    %4014 = vmatpush2.msra.mxu0 0.0
    %4015 = vmatprep.subr.mxu0 0.0
    %4016 = vmatpush2.msra.mxu0 0.0
    %4017 = vmatprep.subr.mxu0 0.0
    %4018 = vmatpush2.msra.mxu0 0.0
    %4019 = vmatprep.subr.mxu0 0.0
    %4020 = vmatpush2.msra.mxu0 0.0
    %4021 = vmatprep.subr.mxu0 0.0
    %4022 = vmatpush2.msra.mxu0 0.0
    %4023 = vmatprep.subr.mxu0 0.0
    %4024 = vmatpush2.msra.mxu0 0.0
    %4025 = vmatprep.subr.mxu0 0.0
    %4026 = vmatpush2.msra.mxu0 0.0
    %4027 = vmatprep.subr.mxu0 0.0
    %4028 = vmatpush2.msra.mxu0 0.0
    %4029 = vmatprep.subr.mxu0 0.0
    %4030 = vmatpush2.msra.mxu0 0.0
    %4031 = vmatprep.subr.mxu0 0.0
    %4032 = vmatpush2.msra.mxu0 0.0
    %4033 = vmatprep.mubr.f32.mxu0 0.0
    %4034 = vmatmul.mubr.f32.gmra.mxu0 %v3964
    %v4035 = vpop.f32.mrf.mxu0
    %v4036 = vadd.f32 %v3961, %v4035
    %v4037 = vpop.f32.mrf.mxu0
    %4038 = vmatprep.mubr.f32.mxu0 0.0
    %4039 = vmatmul.mubr.f32.gmra.mxu0 %v3967
    %v4040 = vpop.f32.mrf.mxu0
    %v4041 = vadd.f32 %v3961, %v4040
    %v4042 = vpop.f32.mrf.mxu0
    %4043 = vdwg.mxu0
    %v4044 = vmul.f32 %v4036, 0.5
    %v4045 = vmul.f32 %v4041, 0.5
    %v4046 = vmul.f32 %v4036, 0.044715
    %v4047 = vmul.f32 %v4041, 0.044715
    %v4048 = vmul.f32 %v4046, %v4036
    %v4049 = vmul.f32 %v4047, %v4041
    %v4050 = vmul.f32 %v4048, %v4036
    %v4051 = vmul.f32 %v4049, %v4041
    %v4052 = vadd.f32 %v4036, %v4050
    %v4053 = vadd.f32 %v4041, %v4051
    %v4054 = vmul.f32 %v4052, 0.7978846
    %v4055 = vmul.f32 %v4053, 0.7978846
    %v4056 = vtanh.pop %v4054
    %v4057 = vtanh.pop %v4055
    %v4058 = vadd.f32 %v4056, 1.0
    %v4059 = vadd.f32 %v4057, 1.0
    %v4060 = vmul.f32 %v4044, %v4058
    %v4061 = vmul.f32 %v4045, %v4059
    %s4062 = scalar_lea.vmem %s15, 64
    %v4063 = vld [vmem:[%s4062] sm:$0xff]
    %v4064 = vld [vmem:[%s4062 + $0x8] sm:$0xff]
    %v4065 = vld [vmem:[%s4062 + $0x10] sm:$0xff]
    %v4066 = vld [vmem:[%s4062 + $0x18] sm:$0xff]
    %v4067 = vld [vmem:[%s4062 + $0x20] sm:$0xff]
    %v4068 = vld [vmem:[%s4062 + $0x28] sm:$0xff]
    %v4069 = vld [vmem:[%s4062 + $0x30] sm:$0xff]
    %v4070 = vld [vmem:[%s4062 + $0x38] sm:$0xff]
    %v4072 = vsel %vm2209, %v4060, 0
    %v4075 = vsel %vm2209, %v4061, 0
    %4077 = vmatprep.subr.mxu0 0.0
    %4078 = vmatpush1.msra.mxu0 0.0
    %4079 = vmatprep.subr.mxu0 0.0
    %4080 = vmatpush1.msra.mxu0 0.0
    %4081 = vmatprep.subr.mxu0 0.0
    %4082 = vmatpush1.msra.mxu0 0.0
    %4083 = vmatprep.subr.mxu0 0.0
    %4084 = vmatpush1.msra.mxu0 0.0
    %4085 = vmatprep.subr.mxu0 0.0
    %4086 = vmatpush1.msra.mxu0 0.0
    %4087 = vmatprep.subr.mxu0 0.0
    %4088 = vmatpush1.msra.mxu0 0.0
    %4089 = vmatprep.subr.mxu0 0.0
    %4090 = vmatpush1.msra.mxu0 0.0
    %4091 = vmatprep.subr.mxu0 0.0
    %4092 = vmatpush1.msra.mxu0 0.0
    %4093 = vmatprep.subr.mxu0 0.0
    %4094 = vmatpush1.msra.mxu0 %v4070
    %4095 = vmatprep.subr.mxu0 0.0
    %4096 = vmatpush1.msra.mxu0 %v4069
    %4097 = vmatprep.subr.mxu0 0.0
    %4098 = vmatpush1.msra.mxu0 %v4068
    %4099 = vmatprep.subr.mxu0 0.0
    %4100 = vmatpush1.msra.mxu0 %v4067
    %4101 = vmatprep.subr.mxu0 0.0
    %4102 = vmatpush1.msra.mxu0 %v4066
    %4103 = vmatprep.subr.mxu0 0.0
    %4104 = vmatpush1.msra.mxu0 %v4065
    %4105 = vmatprep.subr.mxu0 0.0
    %4106 = vmatpush1.msra.mxu0 %v4064
    %4107 = vmatprep.subr.mxu0 0.0
    %4108 = vmatpush1.msra.mxu0 %v4063
    %4109 = vmatprep.subr.mxu0 0.0
    %4110 = vmatpush2.msra.mxu0 0.0
    %4111 = vmatprep.subr.mxu0 0.0
    %4112 = vmatpush2.msra.mxu0 0.0
    %4113 = vmatprep.subr.mxu0 0.0
    %4114 = vmatpush2.msra.mxu0 0.0
    %4115 = vmatprep.subr.mxu0 0.0
    %4116 = vmatpush2.msra.mxu0 0.0
    %4117 = vmatprep.subr.mxu0 0.0
    %4118 = vmatpush2.msra.mxu0 0.0
    %4119 = vmatprep.subr.mxu0 0.0
    %4120 = vmatpush2.msra.mxu0 0.0
    %4121 = vmatprep.subr.mxu0 0.0
    %4122 = vmatpush2.msra.mxu0 0.0
    %4123 = vmatprep.subr.mxu0 0.0
    %4124 = vmatpush2.msra.mxu0 0.0
    %4125 = vmatprep.subr.mxu0 0.0
    %4126 = vmatpush2.msra.mxu0 0.0
    %4127 = vmatprep.subr.mxu0 0.0
    %4128 = vmatpush2.msra.mxu0 0.0
    %4129 = vmatprep.subr.mxu0 0.0
    %4130 = vmatpush2.msra.mxu0 0.0
    %4131 = vmatprep.subr.mxu0 0.0
    %4132 = vmatpush2.msra.mxu0 0.0
    %4133 = vmatprep.subr.mxu0 0.0
    %4134 = vmatpush2.msra.mxu0 0.0
    %4135 = vmatprep.subr.mxu0 0.0
    %4136 = vmatpush2.msra.mxu0 0.0
    %4137 = vmatprep.subr.mxu0 0.0
    %4138 = vmatpush2.msra.mxu0 0.0
    %4139 = vmatprep.subr.mxu0 0.0
    %4140 = vmatpush2.msra.mxu0 0.0
    %4141 = vmatprep.mubr.f32.mxu0 0.0
    %4142 = vmatmul.mubr.f32.gmra.mxu0 %v4072
    %v4143 = vpop.f32.mrf.mxu0
    %v4144 = vadd.f32 0.0, %v4143
    %v4145 = vpop.f32.mrf.mxu0
    %4146 = vmatprep.mubr.f32.mxu0 0.0
    %4147 = vmatmul.mubr.f32.gmra.mxu0 %v4075
    %v4148 = vpop.f32.mrf.mxu0
    %v4149 = vadd.f32 0.0, %v4148
    %v4150 = vpop.f32.mrf.mxu0
    %4151 = vdwg.mxu0
    %v4152 = vadd.f32 %v3902, %v4144
    %v4153 = vadd.f32 %v3903, %v4149
    %s4154 = scalar_lea.vmem %s16, 1
    %v4155 = vld [vmem:[%s4154] sm:$0x1]
    %v4157 = vlaneseq
    %v4158 = vshrl.u32 %v4157, 7
    %v4159 = vsub.s32 0, %v4158
    %v4160 = vrot.slane %v4155, %v4159
    %v4162 = vadd.f32 %v4152, %v4160
    %v4163 = vadd.f32 %v4153, %v4160
    %v4164 = vld [vmem:[%s17] sm:$0x1]
    %v4165 = vld [vmem:[%s18] sm:$0x1]
    %v4166 = vsel %vm448, %v4162, 0.0
    %4167 = vadd.xlane.f32.xlu0 %v4166
    %v4168 = vpop.xlane.xlu0 %4167
    %v4169 = vsel %vm448, %v4163, 0.0
    %4170 = vadd.xlane.f32.xlu0 %v4169
    %v4171 = vpop.xlane.xlu0 %4170
    %v4172 = vmul.f32 %v4168, %v455
    %v4173 = vmul.f32 %v4171, %v455
    %v4174 = vsub.f32 %v4162, %v4172
    %v4175 = vsub.f32 %v4163, %v4173
    %v4176 = vmul.f32 %v4174, %v4174
    %v4177 = vmul.f32 %v4175, %v4175
    %v4178 = vsel %vm448, %v4176, 0.0
    %4179 = vadd.xlane.f32.xlu0 %v4178
    %v4180 = vpop.xlane.xlu0 %4179
    %v4181 = vsel %vm448, %v4177, 0.0
    %4182 = vadd.xlane.f32.xlu0 %v4181
    %v4183 = vpop.xlane.xlu0 %4182
    %v4184 = vmul.f32 %v4180, %v455
    %v4185 = vmul.f32 %v4183, %v455
    %v4186 = vadd.f32 %v4184, 1e-06
    %v4187 = vadd.f32 %v4185, 1e-06
    %v4188 = vrsqrt.pop %v4186
    %v4189 = vrsqrt.pop %v4187
    %v4190 = vmul.f32 %v4174, %v4188
    %v4191 = vmul.f32 %v4175, %v4189
    %v4193 = vlaneseq
    %v4194 = vshrl.u32 %v4193, 7
    %v4195 = vsub.s32 0, %v4194
    %v4196 = vrot.slane %v4164, %v4195
    %v4198 = vmul.f32 %v4190, %v4196
    %v4199 = vmul.f32 %v4191, %v4196
    %v4201 = vlaneseq
    %v4202 = vshrl.u32 %v4201, 7
    %v4203 = vsub.s32 0, %v4202
    %v4204 = vrot.slane %v4165, %v4203
    %v4206 = vadd.f32 %v4198, %v4204
    %v4207 = vadd.f32 %v4199, %v4204
    %v4208 = vld [vmem:[%s19] sm:$0xff]
    %v4209 = vld [vmem:[%s19 + $0x8] sm:$0xff]
    %v4210 = vld [vmem:[%s19 + $0x10] sm:$0xff]
    %v4211 = vld [vmem:[%s19 + $0x18] sm:$0xff]
    %v4212 = vld [vmem:[%s20] sm:$0x1]
    %v4214 = vlaneseq
    %v4215 = vshrl.u32 %v4214, 7
    %v4216 = vsub.s32 0, %v4215
    %v4217 = vrot.slane %v4212, %v4216
    %v4221 = vrot.slane %v4207, 7
    %vm4222 = vcmask 1041409
    %v4223 = vsel %vm4222, %v4221, %v4206
    %v4224 = vsel %vm448, %v4223, 0
    %4226 = vmatprep.subr.mxu0 0.0
    %4227 = vmatpush1.msra.mxu0 0.0
    %4228 = vmatprep.subr.mxu0 0.0
    %4229 = vmatpush1.msra.mxu0 0.0
    %4230 = vmatprep.subr.mxu0 0.0
    %4231 = vmatpush1.msra.mxu0 0.0
    %4232 = vmatprep.subr.mxu0 0.0
    %4233 = vmatpush1.msra.mxu0 0.0
    %4234 = vmatprep.subr.mxu0 0.0
    %4235 = vmatpush1.msra.mxu0 0.0
    %4236 = vmatprep.subr.mxu0 0.0
    %4237 = vmatpush1.msra.mxu0 0.0
    %4238 = vmatprep.subr.mxu0 0.0
    %4239 = vmatpush1.msra.mxu0 0.0
    %4240 = vmatprep.subr.mxu0 0.0
    %4241 = vmatpush1.msra.mxu0 0.0
    %4242 = vmatprep.subr.mxu0 0.0
    %4243 = vmatpush1.msra.mxu0 0.0
    %4244 = vmatprep.subr.mxu0 0.0
    %4245 = vmatpush1.msra.mxu0 0.0
    %4246 = vmatprep.subr.mxu0 0.0
    %4247 = vmatpush1.msra.mxu0 0.0
    %4248 = vmatprep.subr.mxu0 0.0
    %4249 = vmatpush1.msra.mxu0 0.0
    %4250 = vmatprep.subr.mxu0 0.0
    %4251 = vmatpush1.msra.mxu0 %v4211
    %4252 = vmatprep.subr.mxu0 0.0
    %4253 = vmatpush1.msra.mxu0 %v4210
    %4254 = vmatprep.subr.mxu0 0.0
    %4255 = vmatpush1.msra.mxu0 %v4209
    %4256 = vmatprep.subr.mxu0 0.0
    %4257 = vmatpush1.msra.mxu0 %v4208
    %4258 = vmatprep.subr.mxu0 0.0
    %4259 = vmatpush2.msra.mxu0 0.0
    %4260 = vmatprep.subr.mxu0 0.0
    %4261 = vmatpush2.msra.mxu0 0.0
    %4262 = vmatprep.subr.mxu0 0.0
    %4263 = vmatpush2.msra.mxu0 0.0
    %4264 = vmatprep.subr.mxu0 0.0
    %4265 = vmatpush2.msra.mxu0 0.0
    %4266 = vmatprep.subr.mxu0 0.0
    %4267 = vmatpush2.msra.mxu0 0.0
    %4268 = vmatprep.subr.mxu0 0.0
    %4269 = vmatpush2.msra.mxu0 0.0
    %4270 = vmatprep.subr.mxu0 0.0
    %4271 = vmatpush2.msra.mxu0 0.0
    %4272 = vmatprep.subr.mxu0 0.0
    %4273 = vmatpush2.msra.mxu0 0.0
    %4274 = vmatprep.subr.mxu0 0.0
    %4275 = vmatpush2.msra.mxu0 0.0
    %4276 = vmatprep.subr.mxu0 0.0
    %4277 = vmatpush2.msra.mxu0 0.0
    %4278 = vmatprep.subr.mxu0 0.0
    %4279 = vmatpush2.msra.mxu0 0.0
    %4280 = vmatprep.subr.mxu0 0.0
    %4281 = vmatpush2.msra.mxu0 0.0
    %4282 = vmatprep.subr.mxu0 0.0
    %4283 = vmatpush2.msra.mxu0 0.0
    %4284 = vmatprep.subr.mxu0 0.0
    %4285 = vmatpush2.msra.mxu0 0.0
    %4286 = vmatprep.subr.mxu0 0.0
    %4287 = vmatpush2.msra.mxu0 0.0
    %4288 = vmatprep.subr.mxu0 0.0
    %4289 = vmatpush2.msra.mxu0 0.0
    %4290 = vmatprep.mubr.f32.mxu0 0.0
    %4291 = vmatmul.mubr.f32.gmra.mxu0 %v4224
    %v4292 = vpop.f32.mrf.mxu0
    %v4293 = vadd.f32 %v4217, %v4292
    %v4294 = vpop.f32.mrf.mxu0
    %4295 = vdwg.mxu0
    %vm4296 = vcmask 25600
    %4297 = vst.msk [vmem:[#allocation2] sm:$0x3] %vm4296, %v4293
    // Predicated region
    $region86: #{_lambda_.1} parent=1 // pred_check
      _
    $region87: #{_lambda_.1} parent=1 // pred_check_branch
      %4299 = sbr.rel (0) target = $region89
    $region88: #{_lambda_.1} parent=1 // pred_region
      %s4301 = ssub.s32 32, 32
      %4302 = vsyncadd [#allocation3], %s4301
      %s4304 = sshll.u32 [#allocation2], 4
      %s4305 = int_to_ptr.vmem [resolvable:$true] %s4304
      %4307 = dma.vmem_to_hbm [thread:$0]  %s4305, 32, %s21, [#allocation3]
    $region89: #{_lambda_.1} parent=1 // pred_fallthru
      _
    // Predicated region
    $region90: #{_lambda_.1} parent=1 // pred_check
      _
    $region91: #{_lambda_.1} parent=1 // pred_check_branch
      %4309 = sbr.rel (0) target = $region93
    $region92: #{_lambda_.1} parent=1 // pred_region
      %4310 = dma.done [#allocation3], 32
    $region93: #{_lambda_.1} parent=1 // pred_fallthru
      _
    %4311 = vsyncpa [#allocation3], 1

</llo_original>
